<compile_context>
chip_gen: v5e
topology: v5e:2x2
jax: 0.10.0
libtpu: 0.0.40
codegen_flags: <defaults>
</compile_context>

<pallas_src>
import jax
import jax.numpy as jnp
from jax import lax
from jax.experimental import pallas as pl
from jax.experimental.pallas import tpu as pltpu


def _round_up(x, m):
    return (x + m - 1) // m * m


# ----------------------------------------------------------------------------
# Fused kernel: LSTM + Sentinel + adaptive attention + score heads,
# one grid step per batch element.
# ----------------------------------------------------------------------------
def _decoder_kernel(emb_ref, vg_ref, v_ref,
                    wih_ref, whh_ref, blstm_ref,
                    wx2s_ref, wh2s_ref,
                    wv2att_ref, wh2att_ref, wh2att2_ref, ws2att_ref, wattw_ref,
                    wmlp_ref, wh2sc_ref, bscore_ref,
                    scores_ref, aw_ref, hlast_ref, clast_ref,
                    gx_sc, hprev_sc, hid_sc, mem_sc):
    T, E = emb_ref.shape[1], emb_ref.shape[2]
    H = whh_ref.shape[0]
    R = v_ref.shape[1]
    Rp = aw_ref.shape[2]

    emb = emb_ref[0]                       # (T, E)
    vg = vg_ref[0]                         # (1, E)   constant over time
    V = v_ref[0]                           # (R, H)

    # ---- hoisted input projection: x_t @ W_ih + b for all t at once ---------
    # x_t = [emb_t ; v_g]  =>  x @ W == emb @ W[:E] + v_g @ W[E:]
    gx_sc[...] = (
        jnp.dot(emb, wih_ref[0:E, :], preferred_element_type=jnp.float32)
        + jnp.dot(vg, wih_ref[E:2 * E, :], preferred_element_type=jnp.float32)
        + blstm_ref[...])                  # (T, 4H)

    # ---- LSTM recurrence (only h @ W_hh stays on the serial path) -----------
    def step(t, carry):
        h, c = carry                                             # (1, H) each
        hprev_sc[pl.ds(t, 1), :] = h       # h_{t-1} (h_{-1} = 0) for the sentinel
        g = gx_sc[pl.ds(t, 1), :] + jnp.dot(
            h, whh_ref[...], preferred_element_type=jnp.float32)  # (1, 4H)
        i_g = jax.nn.sigmoid(g[:, 0:H])
        f_g = jax.nn.sigmoid(g[:, H:2 * H])
        g_g = jnp.tanh(g[:, 2 * H:3 * H])
        o_g = jax.nn.sigmoid(g[:, 3 * H:4 * H])
        c_new = f_g * c + i_g * g_g
        h_new = o_g * jnp.tanh(c_new)
        hid_sc[pl.ds(t, 1), :] = h_new
        mem_sc[pl.ds(t, 1), :] = c_new
        return h_new, c_new

    zero = jnp.zeros((1, H), jnp.float32)
    h_T, c_T = lax.fori_loop(0, T, step, (zero, zero), unroll=True)

    hid = hid_sc[...]                      # (T, H)  hidden states
    mem = mem_sc[...]                      # (T, H)  cell states
    hprev = hprev_sc[...]                  # (T, H)  h_{t-1}, h_{-1} = 0

    # ---- Sentinel: s_t = sigmoid(x2s(x_t) + h2s(h_{t-1})) * tanh(c_t) -------
    x2s = (jnp.dot(emb, wx2s_ref[0:E, :], preferred_element_type=jnp.float32)
           + jnp.dot(vg, wx2s_ref[E:2 * E, :], preferred_element_type=jnp.float32))
    gate = jax.nn.sigmoid(
        x2s + jnp.dot(hprev, wh2s_ref[...], preferred_element_type=jnp.float32))
    s = gate * jnp.tanh(mem)                                                   # (T, H)

    # ---- Adaptive attention --------------------------------------------------
    vfeat = jnp.dot(V, wv2att_ref[...], preferred_element_type=jnp.float32)    # (R, R)
    hatt = jnp.dot(hid, wh2att_ref[...], preferred_element_type=jnp.float32)   # (T, R)
    attw = wattw_ref[...]                                                      # (1, R)
    content_v = vfeat[None, :, :] + hatt[:, None, :]                           # (T, R, R)
    z_v = jnp.sum(jnp.tanh(content_v) * attw[None, :, :], axis=-1)             # (T, R)

    content_s = (jnp.dot(s, ws2att_ref[...], preferred_element_type=jnp.float32)
                 + jnp.dot(hid, wh2att2_ref[...], preferred_element_type=jnp.float32))
    z_s = jnp.sum(jnp.tanh(content_s) * attw, axis=-1, keepdims=True)          # (T, 1)

    # joint softmax over [z_v ; z_s] (R + 1 logits), without concatenation
    m = jnp.maximum(jnp.max(z_v, axis=-1, keepdims=True), z_s)                 # (T, 1)
    e_v = jnp.exp(z_v - m)                                                     # (T, R)
    e_s = jnp.exp(z_s - m)                                                     # (T, 1)
    inv = 1.0 / (jnp.sum(e_v, axis=-1, keepdims=True) + e_s)                   # (T, 1)
    alpha = e_v * inv                                                          # (T, R)
    beta = e_s * inv                                                           # (T, 1)

    c_hat = beta * s + jnp.dot(alpha, V, preferred_element_type=jnp.float32)   # (T, H)

    # ---- Score heads (vocab dim padded to a lane-dense multiple of 128) -----
    scores = (jnp.dot(c_hat, wmlp_ref[...], preferred_element_type=jnp.float32)
              + jnp.dot(hid, wh2sc_ref[...], preferred_element_type=jnp.float32)
              + bscore_ref[...])                                               # (T, Wp)
    scores_ref[0] = scores

    # pack [alpha * (1 - beta) | beta | 0-pad] into one 128-lane slab
    aw_ref[0] = jnp.zeros((T, Rp), jnp.float32)
    aw_ref[0, :, 0:R] = alpha * (1.0 - beta)
    aw_ref[0, :, R:R + 1] = beta

    hlast_ref[0] = h_T
    clast_ref[0] = c_T


def _fused_decoder(emb, vg3, V, p):
    """emb: (B,T,E), vg3: (B,1,E), V: (B,R,H) -> padded scores/aw + final state."""
    B, T, E = emb.shape
    H = p["w_hh_t"].shape[0]
    R = V.shape[1]
    Wp = p["w_mlp_t"].shape[-1]            # vocab padded to multiple of 128
    Rp = _round_up(R + 1, 128)             # alpha|beta packed slab width

    per_b = lambda shape: pl.BlockSpec(shape, lambda b: (b, 0, 0))
    fixed = lambda shape: pl.BlockSpec(shape, lambda b: (0, 0))

    b_score = p["b_mlp"] + p["b_h2sc"]     # fold the two score-head biases

    return pl.pallas_call(
        _decoder_kernel,
        out_shape=(jax.ShapeDtypeStruct((B, T, Wp), jnp.float32),
                   jax.ShapeDtypeStruct((B, T, Rp), jnp.float32),
                   jax.ShapeDtypeStruct((B, 1, H), jnp.float32),
                   jax.ShapeDtypeStruct((B, 1, H), jnp.float32)),
        grid_spec=pltpu.PrefetchScalarGridSpec(
            num_scalar_prefetch=0,
            grid=(B,),
            in_specs=[per_b((1, T, E)),        # emb
                      per_b((1, 1, E)),        # v_g
                      per_b((1, R, H)),        # V
                      fixed((2 * E, 4 * H)),   # W_ih^T
                      fixed((H, 4 * H)),       # W_hh^T
                      fixed((1, 4 * H)),       # LSTM bias (b_ih + b_hh)
                      fixed((2 * E, H)),       # x2s^T
                      fixed((H, H)),           # h2s^T
                      fixed((H, R)),           # v2att^T
                      fixed((H, R)),           # h2att^T
                      fixed((H, R)),           # h2att2^T
                      fixed((H, R)),           # s2att^T
                      fixed((1, R)),           # attW
                      fixed((H, Wp)),          # mlp^T (zero-padded)
                      fixed((H, Wp)),          # h2score^T (zero-padded)
                      fixed((1, Wp))],         # folded score bias (zero-padded)
            out_specs=[per_b((1, T, Wp)),
                       per_b((1, T, Rp)),
                       per_b((1, 1, H)),
                       per_b((1, 1, H))],
            scratch_shapes=[pltpu.VMEM((T, 4 * H), jnp.float32),   # gates_x
                            pltpu.VMEM((T, H), jnp.float32),       # h_{t-1}
                            pltpu.VMEM((T, H), jnp.float32),       # hid
                            pltpu.VMEM((T, H), jnp.float32)]),     # mem
        compiler_params=pltpu.CompilerParams(
            dimension_semantics=("parallel",)),
    )(emb, vg3, V,
      p["w_ih_t"], p["w_hh_t"], p["b_lstm"],
      p["w_x2s_t"], p["w_h2s_t"],
      p["w_v2att_t"], p["w_h2att_t"], p["w_h2att2_t"], p["w_s2att_t"], p["w_attw"],
      p["w_mlp_t"], p["w_h2sc_t"], b_score)


# ----------------------------------------------------------------------------
# Parameters (deterministic synthetic init; shapes follow the PyTorch module).
# Score-head weights/biases are stored zero-padded to a multiple of 128 vocab
# columns so the kernel's score store is lane-dense.
# Note: the PyTorch Sentinel only type-checks when hidden_dim == 2 * emb_dim.
# ----------------------------------------------------------------------------
def init_params(key, emb_dim, num_words, hidden_dim, n_regions=49):
    E2, H = 2 * emb_dim, hidden_dim
    assert H == E2, "original module requires hidden_dim == 2 * emb_dim"
    Wp = _round_up(num_words, 128)
    ks = jax.random.split(key, 14)
    u = lambda k, shape, s=0.1: jax.random.uniform(k, shape, jnp.float32, -s, s)
    pad_w = lambda w: jnp.pad(w, ((0, 0), (0, Wp - w.shape[-1])))
    return dict(
        embed=u(ks[0], (num_words, emb_dim)),
        # LSTM (weights stored pre-transposed for x @ W^T); b = b_ih + b_hh
        w_ih_t=u(ks[1], (E2, 4 * H)),
        w_hh_t=u(ks[2], (H, 4 * H)),
        b_lstm=u(ks[3], (1, 4 * H)),
        # Sentinel
        w_x2s_t=u(ks[4], (E2, H)),
        w_h2s_t=u(ks[5], (H, H)),
        # Attention
        w_v2att_t=u(ks[6], (H, n_regions)),
        w_h2att_t=u(ks[7], (H, n_regions)),
        w_h2att2_t=u(ks[8], (H, n_regions)),
        w_s2att_t=u(ks[9], (H, n_regions)),
        w_attw=u(ks[10], (1, n_regions)),
        # Score heads (padded in the vocab dimension)
        w_mlp_t=pad_w(u(ks[11], (H, num_words))),
        b_mlp=jnp.zeros((1, Wp), jnp.float32),
        w_h2sc_t=pad_w(u(ks[12], (H, num_words))),
        b_h2sc=pad_w(u(ks[13], (1, num_words))),
    )


def decoder_forward(params, V, v_g, caps):
    """V: (B, 49, H), v_g: (B, E), caps: (B, T) int32.
    Returns (scores (B,T,W), states ((1,B,H),(1,B,H)), atten_weights (B,T,49), beta (B,T,1))."""
    B, T = caps.shape
    W = params["embed"].shape[0]          # num_words
    R = V.shape[1]

    emb = jnp.take(params["embed"], caps, axis=0)      # (B, T, E)  embedding lookup
    vg3 = v_g[:, None, :]                              # (B, 1, E)

    scores_p, aw_slab, h_last, c_last = _fused_decoder(emb, vg3, V, params)

    scores = scores_p[..., :W]                         # strip vocab padding
    atten_weights = aw_slab[..., :R]
    beta = aw_slab[..., R:R + 1]
    states = (h_last[:, 0, :][None, :, :], c_last[:, 0, :][None, :, :])
    return scores, states, atten_weights, beta


if __name__ == "__main__":
    EMB, HID, WORDS, B, T, R = 16, 32, 64, 2, 8, 49
    key = jax.random.PRNGKey(0)
    kp, kv, kg, kc = jax.random.split(key, 4)

    params = init_params(kp, EMB, WORDS, HID, R)
    V = jax.random.normal(kv, (B, R, HID), jnp.float32)
    v_g = jax.random.normal(kg, (B, EMB), jnp.float32)
    caps = jax.random.randint(kc, (B, T), 0, WORDS, jnp.int32)

    scores, states, atten_weights, beta = decoder_forward(params, V, v_g, caps)
    jax.block_until_ready((scores, states, atten_weights, beta))

    assert scores.shape == (B, T, WORDS)
    assert states[0].shape == (1, B, HID) and states[1].shape == (1, B, HID)
    assert atten_weights.shape == (B, T, R)
    assert beta.shape == (B, T, 1)
    print("KERNEL_OK")
</pallas_src>

<mosaic_0001>
module attributes {stable_mosaic.version = 11 : i64} {
  func.func @_decoder_kernel(%arg0: i32, %arg1: memref<1x8x16xf32, #tpu.memory_space<vmem>>, %arg2: memref<1x1x16xf32, #tpu.memory_space<vmem>>, %arg3: memref<1x49x32xf32, #tpu.memory_space<vmem>>, %arg4: memref<32x128xf32, #tpu.memory_space<vmem>>, %arg5: memref<32x128xf32, #tpu.memory_space<vmem>>, %arg6: memref<1x128xf32, #tpu.memory_space<vmem>>, %arg7: memref<32x32xf32, #tpu.memory_space<vmem>>, %arg8: memref<32x32xf32, #tpu.memory_space<vmem>>, %arg9: memref<32x49xf32, #tpu.memory_space<vmem>>, %arg10: memref<32x49xf32, #tpu.memory_space<vmem>>, %arg11: memref<32x49xf32, #tpu.memory_space<vmem>>, %arg12: memref<32x49xf32, #tpu.memory_space<vmem>>, %arg13: memref<1x49xf32, #tpu.memory_space<vmem>>, %arg14: memref<32x128xf32, #tpu.memory_space<vmem>>, %arg15: memref<32x128xf32, #tpu.memory_space<vmem>>, %arg16: memref<1x128xf32, #tpu.memory_space<vmem>>, %arg17: memref<1x8x128xf32, #tpu.memory_space<vmem>>, %arg18: memref<1x8x128xf32, #tpu.memory_space<vmem>>, %arg19: memref<1x1x32xf32, #tpu.memory_space<vmem>>, %arg20: memref<1x1x32xf32, #tpu.memory_space<vmem>>, %arg21: memref<8x128xf32, #tpu.memory_space<vmem>>, %arg22: memref<8x32xf32, #tpu.memory_space<vmem>>, %arg23: memref<8x32xf32, #tpu.memory_space<vmem>>, %arg24: memref<8x32xf32, #tpu.memory_space<vmem>>) attributes {dimension_semantics = [#tpu.dimension_semantics<parallel>], iteration_bounds = array<i64: 2>, scalar_prefetch = 0 : i64, scratch_operands = 4 : i64, tpu.core_type = #tpu.core_type<tc>, window_params = [{transform_indices = @transform_0, window_bounds = array<i64: 1, 8, 16>}, {transform_indices = @transform_1, window_bounds = array<i64: 1, 1, 16>}, {transform_indices = @transform_2, window_bounds = array<i64: 1, 49, 32>}, {pipeline_mode = #tpu.pipeline_mode<synchronous>, transform_indices = @transform_3, window_bounds = array<i64: 32, 128>}, {pipeline_mode = #tpu.pipeline_mode<synchronous>, transform_indices = @transform_4, window_bounds = array<i64: 32, 128>}, {pipeline_mode = #tpu.pipeline_mode<synchronous>, transform_indices = @transform_5, window_bounds = array<i64: 1, 128>}, {pipeline_mode = #tpu.pipeline_mode<synchronous>, transform_indices = @transform_6, window_bounds = array<i64: 32, 32>}, {pipeline_mode = #tpu.pipeline_mode<synchronous>, transform_indices = @transform_7, window_bounds = array<i64: 32, 32>}, {pipeline_mode = #tpu.pipeline_mode<synchronous>, transform_indices = @transform_8, window_bounds = array<i64: 32, 49>}, {pipeline_mode = #tpu.pipeline_mode<synchronous>, transform_indices = @transform_9, window_bounds = array<i64: 32, 49>}, {pipeline_mode = #tpu.pipeline_mode<synchronous>, transform_indices = @transform_10, window_bounds = array<i64: 32, 49>}, {pipeline_mode = #tpu.pipeline_mode<synchronous>, transform_indices = @transform_11, window_bounds = array<i64: 32, 49>}, {pipeline_mode = #tpu.pipeline_mode<synchronous>, transform_indices = @transform_12, window_bounds = array<i64: 1, 49>}, {pipeline_mode = #tpu.pipeline_mode<synchronous>, transform_indices = @transform_13, window_bounds = array<i64: 32, 128>}, {pipeline_mode = #tpu.pipeline_mode<synchronous>, transform_indices = @transform_14, window_bounds = array<i64: 32, 128>}, {pipeline_mode = #tpu.pipeline_mode<synchronous>, transform_indices = @transform_15, window_bounds = array<i64: 1, 128>}, {transform_indices = @transform_16, window_bounds = array<i64: 1, 8, 128>}, {transform_indices = @transform_17, window_bounds = array<i64: 1, 8, 128>}, {transform_indices = @transform_18, window_bounds = array<i64: 1, 1, 32>}, {transform_indices = @transform_19, window_bounds = array<i64: 1, 1, 32>}]} {
    %c0 = arith.constant 0 : index
    %c0_0 = arith.constant 0 : index
    %c0_1 = arith.constant 0 : index
    %0 = vector.load %arg1[%c0, %c0_0, %c0_1] : memref<1x8x16xf32, #tpu.memory_space<vmem>>, vector<1x8x16xf32>
    %1 = vector.shape_cast %0 : vector<1x8x16xf32> to vector<8x16xf32>
    %c0_2 = arith.constant 0 : index
    %c0_3 = arith.constant 0 : index
    %c0_4 = arith.constant 0 : index
    %2 = vector.load %arg2[%c0_2, %c0_3, %c0_4] : memref<1x1x16xf32, #tpu.memory_space<vmem>>, vector<1x1x16xf32>
    %3 = vector.shape_cast %2 : vector<1x1x16xf32> to vector<1x16xf32>
    %c0_5 = arith.constant 0 : index
    %c0_6 = arith.constant 0 : index
    %c0_7 = arith.constant 0 : index
    %4 = vector.load %arg3[%c0_5, %c0_6, %c0_7] : memref<1x49x32xf32, #tpu.memory_space<vmem>>, vector<1x49x32xf32>
    %5 = vector.shape_cast %4 : vector<1x49x32xf32> to vector<49x32xf32>
    %c0_8 = arith.constant 0 : index
    %c0_9 = arith.constant 0 : index
    %6 = vector.load %arg4[%c0_8, %c0_9] : memref<32x128xf32, #tpu.memory_space<vmem>>, vector<16x128xf32>
    %cst = arith.constant dense<0.000000e+00> : vector<8x128xf32>
    %7 = tpu.matmul %1, %6, %cst {dimension_numbers = #tpu.dot_dimension_numbers<[1], [0], [0], [1], [0, 0, 1, 1], [], []>} : vector<8x16xf32>, vector<16x128xf32>, vector<8x128xf32> -> vector<8x128xf32>
    %c16 = arith.constant 16 : index
    %c0_10 = arith.constant 0 : index
    %8 = vector.load %arg4[%c16, %c0_10] : memref<32x128xf32, #tpu.memory_space<vmem>>, vector<16x128xf32>
    %cst_11 = arith.constant dense<0.000000e+00> : vector<1x128xf32>
    %9 = tpu.matmul %3, %8, %cst_11 {dimension_numbers = #tpu.dot_dimension_numbers<[1], [0], [0], [1], [0, 0, 1, 1], [], []>} : vector<1x16xf32>, vector<16x128xf32>, vector<1x128xf32> -> vector<1x128xf32>
    %10 = vector.broadcast %9 : vector<1x128xf32> to vector<8x128xf32>
    %11 = arith.addf %7, %10 : vector<8x128xf32>
    %c0_12 = arith.constant 0 : index
    %c0_13 = arith.constant 0 : index
    %12 = vector.load %arg6[%c0_12, %c0_13] : memref<1x128xf32, #tpu.memory_space<vmem>>, vector<1x128xf32>
    %13 = vector.broadcast %12 : vector<1x128xf32> to vector<8x128xf32>
    %14 = arith.addf %11, %13 : vector<8x128xf32>
    %c0_14 = arith.constant 0 : index
    %c0_15 = arith.constant 0 : index
    %15 = vector.load %arg21[%c0_14, %c0_15] : memref<8x128xf32, #tpu.memory_space<vmem>>, vector<8x128xf32>
    tpu.vector_store %arg21[%c0_14, %c0_15], %14 {strides = array<i32>} : memref<8x128xf32, #tpu.memory_space<vmem>>, vector<8x128xf32>,
    %cst_16 = arith.constant 0.000000e+00 : f32
    %16 = vector.broadcast %cst_16 : f32 to vector<1x32xf32>
    %c0_i32 = arith.constant 0 : i32
    %17 = arith.index_cast %c0_i32 : i32 to index
    %c0_17 = arith.constant 0 : index
    %18 = vector.load %arg22[%17, %c0_17] : memref<8x32xf32, #tpu.memory_space<vmem>>, vector<1x32xf32>
    tpu.vector_store %arg22[%17, %c0_17], %16 {strides = array<i32>} : memref<8x32xf32, #tpu.memory_space<vmem>>, vector<1x32xf32>,
    %19 = arith.index_cast %c0_i32 : i32 to index
    %c0_18 = arith.constant 0 : index
    %20 = vector.load %arg21[%19, %c0_18] : memref<8x128xf32, #tpu.memory_space<vmem>>, vector<1x128xf32>
    %c0_19 = arith.constant 0 : index
    %c0_20 = arith.constant 0 : index
    %21 = vector.load %arg5[%c0_19, %c0_20] : memref<32x128xf32, #tpu.memory_space<vmem>>, vector<32x128xf32>
    %cst_21 = arith.constant dense<0.000000e+00> : vector<1x128xf32>
    %22 = tpu.matmul %16, %21, %cst_21 {dimension_numbers = #tpu.dot_dimension_numbers<[1], [0], [0], [1], [0, 0, 1, 1], [], []>} : vector<1x32xf32>, vector<32x128xf32>, vector<1x128xf32> -> vector<1x128xf32>
    %23 = arith.addf %20, %22 : vector<1x128xf32>
    %24 = vector.extract_strided_slice %23 {offsets = [0, 0], sizes = [1, 32], strides = [1, 1]} : vector<1x128xf32> to vector<1x32xf32>
    %25 = arith.negf %24 : vector<1x32xf32>
    %26 = math.exp %25 : vector<1x32xf32>
    %cst_22 = arith.constant 1.000000e+00 : f32
    %27 = vector.broadcast %cst_22 : f32 to vector<1x32xf32>
    %28 = arith.addf %27, %26 : vector<1x32xf32>
    %29 = arith.divf %27, %28 : vector<1x32xf32>
    %30 = vector.extract_strided_slice %23 {offsets = [0, 32], sizes = [1, 32], strides = [1, 1]} : vector<1x128xf32> to vector<1x32xf32>
    %31 = arith.negf %30 : vector<1x32xf32>
    %32 = math.exp %31 : vector<1x32xf32>
    %cst_23 = arith.constant 1.000000e+00 : f32
    %33 = vector.broadcast %cst_23 : f32 to vector<1x32xf32>
    %34 = arith.addf %33, %32 : vector<1x32xf32>
    %35 = arith.divf %33, %34 : vector<1x32xf32>
    %36 = vector.extract_strided_slice %23 {offsets = [0, 64], sizes = [1, 32], strides = [1, 1]} : vector<1x128xf32> to vector<1x32xf32>
    %37 = math.tanh %36 : vector<1x32xf32>
    %38 = vector.extract_strided_slice %23 {offsets = [0, 96], sizes = [1, 32], strides = [1, 1]} : vector<1x128xf32> to vector<1x32xf32>
    %39 = arith.negf %38 : vector<1x32xf32>
    %40 = math.exp %39 : vector<1x32xf32>
    %cst_24 = arith.constant 1.000000e+00 : f32
    %41 = vector.broadcast %cst_24 : f32 to vector<1x32xf32>
    %42 = arith.addf %41, %40 : vector<1x32xf32>
    %43 = arith.divf %41, %42 : vector<1x32xf32>
    %44 = arith.mulf %35, %16 : vector<1x32xf32>
    %45 = arith.mulf %29, %37 : vector<1x32xf32>
    %46 = arith.addf %44, %45 : vector<1x32xf32>
    %47 = math.tanh %46 : vector<1x32xf32>
    %48 = arith.mulf %43, %47 : vector<1x32xf32>
    %49 = arith.index_cast %c0_i32 : i32 to index
    %c0_25 = arith.constant 0 : index
    %50 = vector.load %arg23[%49, %c0_25] : memref<8x32xf32, #tpu.memory_space<vmem>>, vector<1x32xf32>
    tpu.vector_store %arg23[%49, %c0_25], %48 {strides = array<i32>} : memref<8x32xf32, #tpu.memory_space<vmem>>, vector<1x32xf32>,
    %51 = arith.index_cast %c0_i32 : i32 to index
    %c0_26 = arith.constant 0 : index
    %52 = vector.load %arg24[%51, %c0_26] : memref<8x32xf32, #tpu.memory_space<vmem>>, vector<1x32xf32>
    tpu.vector_store %arg24[%51, %c0_26], %46 {strides = array<i32>} : memref<8x32xf32, #tpu.memory_space<vmem>>, vector<1x32xf32>,
    %c1_i32 = arith.constant 1 : i32
    %53 = arith.index_cast %c1_i32 : i32 to index
    %c0_27 = arith.constant 0 : index
    %54 = vector.load %arg22[%53, %c0_27] : memref<8x32xf32, #tpu.memory_space<vmem>>, vector<1x32xf32>
    tpu.vector_store %arg22[%53, %c0_27], %48 {strides = array<i32>} : memref<8x32xf32, #tpu.memory_space<vmem>>, vector<1x32xf32>,
    %55 = arith.index_cast %c1_i32 : i32 to index
    %c0_28 = arith.constant 0 : index
    %56 = vector.load %arg21[%55, %c0_28] : memref<8x128xf32, #tpu.memory_space<vmem>>, vector<1x128xf32>
    %c0_29 = arith.constant 0 : index
    %c0_30 = arith.constant 0 : index
    %57 = vector.load %arg5[%c0_29, %c0_30] : memref<32x128xf32, #tpu.memory_space<vmem>>, vector<32x128xf32>
    %cst_31 = arith.constant dense<0.000000e+00> : vector<1x128xf32>
    %58 = tpu.matmul %48, %57, %cst_31 {dimension_numbers = #tpu.dot_dimension_numbers<[1], [0], [0], [1], [0, 0, 1, 1], [], []>} : vector<1x32xf32>, vector<32x128xf32>, vector<1x128xf32> -> vector<1x128xf32>
    %59 = arith.addf %56, %58 : vector<1x128xf32>
    %60 = vector.extract_strided_slice %59 {offsets = [0, 0], sizes = [1, 32], strides = [1, 1]} : vector<1x128xf32> to vector<1x32xf32>
    %61 = arith.negf %60 : vector<1x32xf32>
    %62 = math.exp %61 : vector<1x32xf32>
    %cst_32 = arith.constant 1.000000e+00 : f32
    %63 = vector.broadcast %cst_32 : f32 to vector<1x32xf32>
    %64 = arith.addf %63, %62 : vector<1x32xf32>
    %65 = arith.divf %63, %64 : vector<1x32xf32>
    %66 = vector.extract_strided_slice %59 {offsets = [0, 32], sizes = [1, 32], strides = [1, 1]} : vector<1x128xf32> to vector<1x32xf32>
    %67 = arith.negf %66 : vector<1x32xf32>
    %68 = math.exp %67 : vector<1x32xf32>
    %cst_33 = arith.constant 1.000000e+00 : f32
    %69 = vector.broadcast %cst_33 : f32 to vector<1x32xf32>
    %70 = arith.addf %69, %68 : vector<1x32xf32>
    %71 = arith.divf %69, %70 : vector<1x32xf32>
    %72 = vector.extract_strided_slice %59 {offsets = [0, 64], sizes = [1, 32], strides = [1, 1]} : vector<1x128xf32> to vector<1x32xf32>
    %73 = math.tanh %72 : vector<1x32xf32>
    %74 = vector.extract_strided_slice %59 {offsets = [0, 96], sizes = [1, 32], strides = [1, 1]} : vector<1x128xf32> to vector<1x32xf32>
    %75 = arith.negf %74 : vector<1x32xf32>
    %76 = math.exp %75 : vector<1x32xf32>
    %cst_34 = arith.constant 1.000000e+00 : f32
    %77 = vector.broadcast %cst_34 : f32 to vector<1x32xf32>
    %78 = arith.addf %77, %76 : vector<1x32xf32>
    %79 = arith.divf %77, %78 : vector<1x32xf32>
    %80 = arith.mulf %71, %46 : vector<1x32xf32>
    %81 = arith.mulf %65, %73 : vector<1x32xf32>
    %82 = arith.addf %80, %81 : vector<1x32xf32>
    %83 = math.tanh %82 : vector<1x32xf32>
    %84 = arith.mulf %79, %83 : vector<1x32xf32>
    %85 = arith.index_cast %c1_i32 : i32 to index
    %c0_35 = arith.constant 0 : index
    %86 = vector.load %arg23[%85, %c0_35] : memref<8x32xf32, #tpu.memory_space<vmem>>, vector<1x32xf32>
    tpu.vector_store %arg23[%85, %c0_35], %84 {strides = array<i32>} : memref<8x32xf32, #tpu.memory_space<vmem>>, vector<1x32xf32>,
    %87 = arith.index_cast %c1_i32 : i32 to index
    %c0_36 = arith.constant 0 : index
    %88 = vector.load %arg24[%87, %c0_36] : memref<8x32xf32, #tpu.memory_space<vmem>>, vector<1x32xf32>
    tpu.vector_store %arg24[%87, %c0_36], %82 {strides = array<i32>} : memref<8x32xf32, #tpu.memory_space<vmem>>, vector<1x32xf32>,
    %c2_i32 = arith.constant 2 : i32
    %89 = arith.index_cast %c2_i32 : i32 to index
    %c0_37 = arith.constant 0 : index
    %90 = vector.load %arg22[%89, %c0_37] : memref<8x32xf32, #tpu.memory_space<vmem>>, vector<1x32xf32>
    tpu.vector_store %arg22[%89, %c0_37], %84 {strides = array<i32>} : memref<8x32xf32, #tpu.memory_space<vmem>>, vector<1x32xf32>,
    %91 = arith.index_cast %c2_i32 : i32 to index
    %c0_38 = arith.constant 0 : index
    %92 = vector.load %arg21[%91, %c0_38] : memref<8x128xf32, #tpu.memory_space<vmem>>, vector<1x128xf32>
    %c0_39 = arith.constant 0 : index
    %c0_40 = arith.constant 0 : index
    %93 = vector.load %arg5[%c0_39, %c0_40] : memref<32x128xf32, #tpu.memory_space<vmem>>, vector<32x128xf32>
    %cst_41 = arith.constant dense<0.000000e+00> : vector<1x128xf32>
    %94 = tpu.matmul %84, %93, %cst_41 {dimension_numbers = #tpu.dot_dimension_numbers<[1], [0], [0], [1], [0, 0, 1, 1], [], []>} : vector<1x32xf32>, vector<32x128xf32>, vector<1x128xf32> -> vector<1x128xf32>
    %95 = arith.addf %92, %94 : vector<1x128xf32>
    %96 = vector.extract_strided_slice %95 {offsets = [0, 0], sizes = [1, 32], strides = [1, 1]} : vector<1x128xf32> to vector<1x32xf32>
    %97 = arith.negf %96 : vector<1x32xf32>
    %98 = math.exp %97 : vector<1x32xf32>
    %cst_42 = arith.constant 1.000000e+00 : f32
    %99 = vector.broadcast %cst_42 : f32 to vector<1x32xf32>
    %100 = arith.addf %99, %98 : vector<1x32xf32>
    %101 = arith.divf %99, %100 : vector<1x32xf32>
    %102 = vector.extract_strided_slice %95 {offsets = [0, 32], sizes = [1, 32], strides = [1, 1]} : vector<1x128xf32> to vector<1x32xf32>
    %103 = arith.negf %102 : vector<1x32xf32>
    %104 = math.exp %103 : vector<1x32xf32>
    %cst_43 = arith.constant 1.000000e+00 : f32
    %105 = vector.broadcast %cst_43 : f32 to vector<1x32xf32>
    %106 = arith.addf %105, %104 : vector<1x32xf32>
    %107 = arith.divf %105, %106 : vector<1x32xf32>
    %108 = vector.extract_strided_slice %95 {offsets = [0, 64], sizes = [1, 32], strides = [1, 1]} : vector<1x128xf32> to vector<1x32xf32>
    %109 = math.tanh %108 : vector<1x32xf32>
    %110 = vector.extract_strided_slice %95 {offsets = [0, 96], sizes = [1, 32], strides = [1, 1]} : vector<1x128xf32> to vector<1x32xf32>
    %111 = arith.negf %110 : vector<1x32xf32>
    %112 = math.exp %111 : vector<1x32xf32>
    %cst_44 = arith.constant 1.000000e+00 : f32
    %113 = vector.broadcast %cst_44 : f32 to vector<1x32xf32>
    %114 = arith.addf %113, %112 : vector<1x32xf32>
    %115 = arith.divf %113, %114 : vector<1x32xf32>
    %116 = arith.mulf %107, %82 : vector<1x32xf32>
    %117 = arith.mulf %101, %109 : vector<1x32xf32>
    %118 = arith.addf %116, %117 : vector<1x32xf32>
    %119 = math.tanh %118 : vector<1x32xf32>
    %120 = arith.mulf %115, %119 : vector<1x32xf32>
    %121 = arith.index_cast %c2_i32 : i32 to index
    %c0_45 = arith.constant 0 : index
    %122 = vector.load %arg23[%121, %c0_45] : memref<8x32xf32, #tpu.memory_space<vmem>>, vector<1x32xf32>
    tpu.vector_store %arg23[%121, %c0_45], %120 {strides = array<i32>} : memref<8x32xf32, #tpu.memory_space<vmem>>, vector<1x32xf32>,
    %123 = arith.index_cast %c2_i32 : i32 to index
    %c0_46 = arith.constant 0 : index
    %124 = vector.load %arg24[%123, %c0_46] : memref<8x32xf32, #tpu.memory_space<vmem>>, vector<1x32xf32>
    tpu.vector_store %arg24[%123, %c0_46], %118 {strides = array<i32>} : memref<8x32xf32, #tpu.memory_space<vmem>>, vector<1x32xf32>,
    %c3_i32 = arith.constant 3 : i32
    %125 = arith.index_cast %c3_i32 : i32 to index
    %c0_47 = arith.constant 0 : index
    %126 = vector.load %arg22[%125, %c0_47] : memref<8x32xf32, #tpu.memory_space<vmem>>, vector<1x32xf32>
    tpu.vector_store %arg22[%125, %c0_47], %120 {strides = array<i32>} : memref<8x32xf32, #tpu.memory_space<vmem>>, vector<1x32xf32>,
    %127 = arith.index_cast %c3_i32 : i32 to index
    %c0_48 = arith.constant 0 : index
    %128 = vector.load %arg21[%127, %c0_48] : memref<8x128xf32, #tpu.memory_space<vmem>>, vector<1x128xf32>
    %c0_49 = arith.constant 0 : index
    %c0_50 = arith.constant 0 : index
    %129 = vector.load %arg5[%c0_49, %c0_50] : memref<32x128xf32, #tpu.memory_space<vmem>>, vector<32x128xf32>
    %cst_51 = arith.constant dense<0.000000e+00> : vector<1x128xf32>
    %130 = tpu.matmul %120, %129, %cst_51 {dimension_numbers = #tpu.dot_dimension_numbers<[1], [0], [0], [1], [0, 0, 1, 1], [], []>} : vector<1x32xf32>, vector<32x128xf32>, vector<1x128xf32> -> vector<1x128xf32>
    %131 = arith.addf %128, %130 : vector<1x128xf32>
    %132 = vector.extract_strided_slice %131 {offsets = [0, 0], sizes = [1, 32], strides = [1, 1]} : vector<1x128xf32> to vector<1x32xf32>
    %133 = arith.negf %132 : vector<1x32xf32>
    %134 = math.exp %133 : vector<1x32xf32>
    %cst_52 = arith.constant 1.000000e+00 : f32
    %135 = vector.broadcast %cst_52 : f32 to vector<1x32xf32>
    %136 = arith.addf %135, %134 : vector<1x32xf32>
    %137 = arith.divf %135, %136 : vector<1x32xf32>
    %138 = vector.extract_strided_slice %131 {offsets = [0, 32], sizes = [1, 32], strides = [1, 1]} : vector<1x128xf32> to vector<1x32xf32>
    %139 = arith.negf %138 : vector<1x32xf32>
    %140 = math.exp %139 : vector<1x32xf32>
    %cst_53 = arith.constant 1.000000e+00 : f32
    %141 = vector.broadcast %cst_53 : f32 to vector<1x32xf32>
    %142 = arith.addf %141, %140 : vector<1x32xf32>
    %143 = arith.divf %141, %142 : vector<1x32xf32>
    %144 = vector.extract_strided_slice %131 {offsets = [0, 64], sizes = [1, 32], strides = [1, 1]} : vector<1x128xf32> to vector<1x32xf32>
    %145 = math.tanh %144 : vector<1x32xf32>
    %146 = vector.extract_strided_slice %131 {offsets = [0, 96], sizes = [1, 32], strides = [1, 1]} : vector<1x128xf32> to vector<1x32xf32>
    %147 = arith.negf %146 : vector<1x32xf32>
    %148 = math.exp %147 : vector<1x32xf32>
    %cst_54 = arith.constant 1.000000e+00 : f32
    %149 = vector.broadcast %cst_54 : f32 to vector<1x32xf32>
    %150 = arith.addf %149, %148 : vector<1x32xf32>
    %151 = arith.divf %149, %150 : vector<1x32xf32>
    %152 = arith.mulf %143, %118 : vector<1x32xf32>
    %153 = arith.mulf %137, %145 : vector<1x32xf32>
    %154 = arith.addf %152, %153 : vector<1x32xf32>
    %155 = math.tanh %154 : vector<1x32xf32>
    %156 = arith.mulf %151, %155 : vector<1x32xf32>
    %157 = arith.index_cast %c3_i32 : i32 to index
    %c0_55 = arith.constant 0 : index
    %158 = vector.load %arg23[%157, %c0_55] : memref<8x32xf32, #tpu.memory_space<vmem>>, vector<1x32xf32>
    tpu.vector_store %arg23[%157, %c0_55], %156 {strides = array<i32>} : memref<8x32xf32, #tpu.memory_space<vmem>>, vector<1x32xf32>,
    %159 = arith.index_cast %c3_i32 : i32 to index
    %c0_56 = arith.constant 0 : index
    %160 = vector.load %arg24[%159, %c0_56] : memref<8x32xf32, #tpu.memory_space<vmem>>, vector<1x32xf32>
    tpu.vector_store %arg24[%159, %c0_56], %154 {strides = array<i32>} : memref<8x32xf32, #tpu.memory_space<vmem>>, vector<1x32xf32>,
    %c4_i32 = arith.constant 4 : i32
    %161 = arith.index_cast %c4_i32 : i32 to index
    %c0_57 = arith.constant 0 : index
    %162 = vector.load %arg22[%161, %c0_57] : memref<8x32xf32, #tpu.memory_space<vmem>>, vector<1x32xf32>
    tpu.vector_store %arg22[%161, %c0_57], %156 {strides = array<i32>} : memref<8x32xf32, #tpu.memory_space<vmem>>, vector<1x32xf32>,
    %163 = arith.index_cast %c4_i32 : i32 to index
    %c0_58 = arith.constant 0 : index
    %164 = vector.load %arg21[%163, %c0_58] : memref<8x128xf32, #tpu.memory_space<vmem>>, vector<1x128xf32>
    %c0_59 = arith.constant 0 : index
    %c0_60 = arith.constant 0 : index
    %165 = vector.load %arg5[%c0_59, %c0_60] : memref<32x128xf32, #tpu.memory_space<vmem>>, vector<32x128xf32>
    %cst_61 = arith.constant dense<0.000000e+00> : vector<1x128xf32>
    %166 = tpu.matmul %156, %165, %cst_61 {dimension_numbers = #tpu.dot_dimension_numbers<[1], [0], [0], [1], [0, 0, 1, 1], [], []>} : vector<1x32xf32>, vector<32x128xf32>, vector<1x128xf32> -> vector<1x128xf32>
    %167 = arith.addf %164, %166 : vector<1x128xf32>
    %168 = vector.extract_strided_slice %167 {offsets = [0, 0], sizes = [1, 32], strides = [1, 1]} : vector<1x128xf32> to vector<1x32xf32>
    %169 = arith.negf %168 : vector<1x32xf32>
    %170 = math.exp %169 : vector<1x32xf32>
    %cst_62 = arith.constant 1.000000e+00 : f32
    %171 = vector.broadcast %cst_62 : f32 to vector<1x32xf32>
    %172 = arith.addf %171, %170 : vector<1x32xf32>
    %173 = arith.divf %171, %172 : vector<1x32xf32>
    %174 = vector.extract_strided_slice %167 {offsets = [0, 32], sizes = [1, 32], strides = [1, 1]} : vector<1x128xf32> to vector<1x32xf32>
    %175 = arith.negf %174 : vector<1x32xf32>
    %176 = math.exp %175 : vector<1x32xf32>
    %cst_63 = arith.constant 1.000000e+00 : f32
    %177 = vector.broadcast %cst_63 : f32 to vector<1x32xf32>
    %178 = arith.addf %177, %176 : vector<1x32xf32>
    %179 = arith.divf %177, %178 : vector<1x32xf32>
    %180 = vector.extract_strided_slice %167 {offsets = [0, 64], sizes = [1, 32], strides = [1, 1]} : vector<1x128xf32> to vector<1x32xf32>
    %181 = math.tanh %180 : vector<1x32xf32>
    %182 = vector.extract_strided_slice %167 {offsets = [0, 96], sizes = [1, 32], strides = [1, 1]} : vector<1x128xf32> to vector<1x32xf32>
    %183 = arith.negf %182 : vector<1x32xf32>
    %184 = math.exp %183 : vector<1x32xf32>
    %cst_64 = arith.constant 1.000000e+00 : f32
    %185 = vector.broadcast %cst_64 : f32 to vector<1x32xf32>
    %186 = arith.addf %185, %184 : vector<1x32xf32>
    %187 = arith.divf %185, %186 : vector<1x32xf32>
    %188 = arith.mulf %179, %154 : vector<1x32xf32>
    %189 = arith.mulf %173, %181 : vector<1x32xf32>
    %190 = arith.addf %188, %189 : vector<1x32xf32>
    %191 = math.tanh %190 : vector<1x32xf32>
    %192 = arith.mulf %187, %191 : vector<1x32xf32>
    %193 = arith.index_cast %c4_i32 : i32 to index
    %c0_65 = arith.constant 0 : index
    %194 = vector.load %arg23[%193, %c0_65] : memref<8x32xf32, #tpu.memory_space<vmem>>, vector<1x32xf32>
    tpu.vector_store %arg23[%193, %c0_65], %192 {strides = array<i32>} : memref<8x32xf32, #tpu.memory_space<vmem>>, vector<1x32xf32>,
    %195 = arith.index_cast %c4_i32 : i32 to index
    %c0_66 = arith.constant 0 : index
    %196 = vector.load %arg24[%195, %c0_66] : memref<8x32xf32, #tpu.memory_space<vmem>>, vector<1x32xf32>
    tpu.vector_store %arg24[%195, %c0_66], %190 {strides = array<i32>} : memref<8x32xf32, #tpu.memory_space<vmem>>, vector<1x32xf32>,
    %c5_i32 = arith.constant 5 : i32
    %197 = arith.index_cast %c5_i32 : i32 to index
    %c0_67 = arith.constant 0 : index
    %198 = vector.load %arg22[%197, %c0_67] : memref<8x32xf32, #tpu.memory_space<vmem>>, vector<1x32xf32>
    tpu.vector_store %arg22[%197, %c0_67], %192 {strides = array<i32>} : memref<8x32xf32, #tpu.memory_space<vmem>>, vector<1x32xf32>,
    %199 = arith.index_cast %c5_i32 : i32 to index
    %c0_68 = arith.constant 0 : index
    %200 = vector.load %arg21[%199, %c0_68] : memref<8x128xf32, #tpu.memory_space<vmem>>, vector<1x128xf32>
    %c0_69 = arith.constant 0 : index
    %c0_70 = arith.constant 0 : index
    %201 = vector.load %arg5[%c0_69, %c0_70] : memref<32x128xf32, #tpu.memory_space<vmem>>, vector<32x128xf32>
    %cst_71 = arith.constant dense<0.000000e+00> : vector<1x128xf32>
    %202 = tpu.matmul %192, %201, %cst_71 {dimension_numbers = #tpu.dot_dimension_numbers<[1], [0], [0], [1], [0, 0, 1, 1], [], []>} : vector<1x32xf32>, vector<32x128xf32>, vector<1x128xf32> -> vector<1x128xf32>
    %203 = arith.addf %200, %202 : vector<1x128xf32>
    %204 = vector.extract_strided_slice %203 {offsets = [0, 0], sizes = [1, 32], strides = [1, 1]} : vector<1x128xf32> to vector<1x32xf32>
    %205 = arith.negf %204 : vector<1x32xf32>
    %206 = math.exp %205 : vector<1x32xf32>
    %cst_72 = arith.constant 1.000000e+00 : f32
    %207 = vector.broadcast %cst_72 : f32 to vector<1x32xf32>
    %208 = arith.addf %207, %206 : vector<1x32xf32>
    %209 = arith.divf %207, %208 : vector<1x32xf32>
    %210 = vector.extract_strided_slice %203 {offsets = [0, 32], sizes = [1, 32], strides = [1, 1]} : vector<1x128xf32> to vector<1x32xf32>
    %211 = arith.negf %210 : vector<1x32xf32>
    %212 = math.exp %211 : vector<1x32xf32>
    %cst_73 = arith.constant 1.000000e+00 : f32
    %213 = vector.broadcast %cst_73 : f32 to vector<1x32xf32>
    %214 = arith.addf %213, %212 : vector<1x32xf32>
    %215 = arith.divf %213, %214 : vector<1x32xf32>
    %216 = vector.extract_strided_slice %203 {offsets = [0, 64], sizes = [1, 32], strides = [1, 1]} : vector<1x128xf32> to vector<1x32xf32>
    %217 = math.tanh %216 : vector<1x32xf32>
    %218 = vector.extract_strided_slice %203 {offsets = [0, 96], sizes = [1, 32], strides = [1, 1]} : vector<1x128xf32> to vector<1x32xf32>
    %219 = arith.negf %218 : vector<1x32xf32>
    %220 = math.exp %219 : vector<1x32xf32>
    %cst_74 = arith.constant 1.000000e+00 : f32
    %221 = vector.broadcast %cst_74 : f32 to vector<1x32xf32>
    %222 = arith.addf %221, %220 : vector<1x32xf32>
    %223 = arith.divf %221, %222 : vector<1x32xf32>
    %224 = arith.mulf %215, %190 : vector<1x32xf32>
    %225 = arith.mulf %209, %217 : vector<1x32xf32>
    %226 = arith.addf %224, %225 : vector<1x32xf32>
    %227 = math.tanh %226 : vector<1x32xf32>
    %228 = arith.mulf %223, %227 : vector<1x32xf32>
    %229 = arith.index_cast %c5_i32 : i32 to index
    %c0_75 = arith.constant 0 : index
    %230 = vector.load %arg23[%229, %c0_75] : memref<8x32xf32, #tpu.memory_space<vmem>>, vector<1x32xf32>
    tpu.vector_store %arg23[%229, %c0_75], %228 {strides = array<i32>} : memref<8x32xf32, #tpu.memory_space<vmem>>, vector<1x32xf32>,
    %231 = arith.index_cast %c5_i32 : i32 to index
    %c0_76 = arith.constant 0 : index
    %232 = vector.load %arg24[%231, %c0_76] : memref<8x32xf32, #tpu.memory_space<vmem>>, vector<1x32xf32>
    tpu.vector_store %arg24[%231, %c0_76], %226 {strides = array<i32>} : memref<8x32xf32, #tpu.memory_space<vmem>>, vector<1x32xf32>,
    %c6_i32 = arith.constant 6 : i32
    %233 = arith.index_cast %c6_i32 : i32 to index
    %c0_77 = arith.constant 0 : index
    %234 = vector.load %arg22[%233, %c0_77] : memref<8x32xf32, #tpu.memory_space<vmem>>, vector<1x32xf32>
    tpu.vector_store %arg22[%233, %c0_77], %228 {strides = array<i32>} : memref<8x32xf32, #tpu.memory_space<vmem>>, vector<1x32xf32>,
    %235 = arith.index_cast %c6_i32 : i32 to index
    %c0_78 = arith.constant 0 : index
    %236 = vector.load %arg21[%235, %c0_78] : memref<8x128xf32, #tpu.memory_space<vmem>>, vector<1x128xf32>
    %c0_79 = arith.constant 0 : index
    %c0_80 = arith.constant 0 : index
    %237 = vector.load %arg5[%c0_79, %c0_80] : memref<32x128xf32, #tpu.memory_space<vmem>>, vector<32x128xf32>
    %cst_81 = arith.constant dense<0.000000e+00> : vector<1x128xf32>
    %238 = tpu.matmul %228, %237, %cst_81 {dimension_numbers = #tpu.dot_dimension_numbers<[1], [0], [0], [1], [0, 0, 1, 1], [], []>} : vector<1x32xf32>, vector<32x128xf32>, vector<1x128xf32> -> vector<1x128xf32>
    %239 = arith.addf %236, %238 : vector<1x128xf32>
    %240 = vector.extract_strided_slice %239 {offsets = [0, 0], sizes = [1, 32], strides = [1, 1]} : vector<1x128xf32> to vector<1x32xf32>
    %241 = arith.negf %240 : vector<1x32xf32>
    %242 = math.exp %241 : vector<1x32xf32>
    %cst_82 = arith.constant 1.000000e+00 : f32
    %243 = vector.broadcast %cst_82 : f32 to vector<1x32xf32>
    %244 = arith.addf %243, %242 : vector<1x32xf32>
    %245 = arith.divf %243, %244 : vector<1x32xf32>
    %246 = vector.extract_strided_slice %239 {offsets = [0, 32], sizes = [1, 32], strides = [1, 1]} : vector<1x128xf32> to vector<1x32xf32>
    %247 = arith.negf %246 : vector<1x32xf32>
    %248 = math.exp %247 : vector<1x32xf32>
    %cst_83 = arith.constant 1.000000e+00 : f32
    %249 = vector.broadcast %cst_83 : f32 to vector<1x32xf32>
    %250 = arith.addf %249, %248 : vector<1x32xf32>
    %251 = arith.divf %249, %250 : vector<1x32xf32>
    %252 = vector.extract_strided_slice %239 {offsets = [0, 64], sizes = [1, 32], strides = [1, 1]} : vector<1x128xf32> to vector<1x32xf32>
    %253 = math.tanh %252 : vector<1x32xf32>
    %254 = vector.extract_strided_slice %239 {offsets = [0, 96], sizes = [1, 32], strides = [1, 1]} : vector<1x128xf32> to vector<1x32xf32>
    %255 = arith.negf %254 : vector<1x32xf32>
    %256 = math.exp %255 : vector<1x32xf32>
    %cst_84 = arith.constant 1.000000e+00 : f32
    %257 = vector.broadcast %cst_84 : f32 to vector<1x32xf32>
    %258 = arith.addf %257, %256 : vector<1x32xf32>
    %259 = arith.divf %257, %258 : vector<1x32xf32>
    %260 = arith.mulf %251, %226 : vector<1x32xf32>
    %261 = arith.mulf %245, %253 : vector<1x32xf32>
    %262 = arith.addf %260, %261 : vector<1x32xf32>
    %263 = math.tanh %262 : vector<1x32xf32>
    %264 = arith.mulf %259, %263 : vector<1x32xf32>
    %265 = arith.index_cast %c6_i32 : i32 to index
    %c0_85 = arith.constant 0 : index
    %266 = vector.load %arg23[%265, %c0_85] : memref<8x32xf32, #tpu.memory_space<vmem>>, vector<1x32xf32>
    tpu.vector_store %arg23[%265, %c0_85], %264 {strides = array<i32>} : memref<8x32xf32, #tpu.memory_space<vmem>>, vector<1x32xf32>,
    %267 = arith.index_cast %c6_i32 : i32 to index
    %c0_86 = arith.constant 0 : index
    %268 = vector.load %arg24[%267, %c0_86] : memref<8x32xf32, #tpu.memory_space<vmem>>, vector<1x32xf32>
    tpu.vector_store %arg24[%267, %c0_86], %262 {strides = array<i32>} : memref<8x32xf32, #tpu.memory_space<vmem>>, vector<1x32xf32>,
    %c7_i32 = arith.constant 7 : i32
    %269 = arith.index_cast %c7_i32 : i32 to index
    %c0_87 = arith.constant 0 : index
    %270 = vector.load %arg22[%269, %c0_87] : memref<8x32xf32, #tpu.memory_space<vmem>>, vector<1x32xf32>
    tpu.vector_store %arg22[%269, %c0_87], %264 {strides = array<i32>} : memref<8x32xf32, #tpu.memory_space<vmem>>, vector<1x32xf32>,
    %271 = arith.index_cast %c7_i32 : i32 to index
    %c0_88 = arith.constant 0 : index
    %272 = vector.load %arg21[%271, %c0_88] : memref<8x128xf32, #tpu.memory_space<vmem>>, vector<1x128xf32>
    %c0_89 = arith.constant 0 : index
    %c0_90 = arith.constant 0 : index
    %273 = vector.load %arg5[%c0_89, %c0_90] : memref<32x128xf32, #tpu.memory_space<vmem>>, vector<32x128xf32>
    %cst_91 = arith.constant dense<0.000000e+00> : vector<1x128xf32>
    %274 = tpu.matmul %264, %273, %cst_91 {dimension_numbers = #tpu.dot_dimension_numbers<[1], [0], [0], [1], [0, 0, 1, 1], [], []>} : vector<1x32xf32>, vector<32x128xf32>, vector<1x128xf32> -> vector<1x128xf32>
    %275 = arith.addf %272, %274 : vector<1x128xf32>
    %276 = vector.extract_strided_slice %275 {offsets = [0, 0], sizes = [1, 32], strides = [1, 1]} : vector<1x128xf32> to vector<1x32xf32>
    %277 = arith.negf %276 : vector<1x32xf32>
    %278 = math.exp %277 : vector<1x32xf32>
    %cst_92 = arith.constant 1.000000e+00 : f32
    %279 = vector.broadcast %cst_92 : f32 to vector<1x32xf32>
    %280 = arith.addf %279, %278 : vector<1x32xf32>
    %281 = arith.divf %279, %280 : vector<1x32xf32>
    %282 = vector.extract_strided_slice %275 {offsets = [0, 32], sizes = [1, 32], strides = [1, 1]} : vector<1x128xf32> to vector<1x32xf32>
    %283 = arith.negf %282 : vector<1x32xf32>
    %284 = math.exp %283 : vector<1x32xf32>
    %cst_93 = arith.constant 1.000000e+00 : f32
    %285 = vector.broadcast %cst_93 : f32 to vector<1x32xf32>
    %286 = arith.addf %285, %284 : vector<1x32xf32>
    %287 = arith.divf %285, %286 : vector<1x32xf32>
    %288 = vector.extract_strided_slice %275 {offsets = [0, 64], sizes = [1, 32], strides = [1, 1]} : vector<1x128xf32> to vector<1x32xf32>
    %289 = math.tanh %288 : vector<1x32xf32>
    %290 = vector.extract_strided_slice %275 {offsets = [0, 96], sizes = [1, 32], strides = [1, 1]} : vector<1x128xf32> to vector<1x32xf32>
    %291 = arith.negf %290 : vector<1x32xf32>
    %292 = math.exp %291 : vector<1x32xf32>
    %cst_94 = arith.constant 1.000000e+00 : f32
    %293 = vector.broadcast %cst_94 : f32 to vector<1x32xf32>
    %294 = arith.addf %293, %292 : vector<1x32xf32>
    %295 = arith.divf %293, %294 : vector<1x32xf32>
    %296 = arith.mulf %287, %262 : vector<1x32xf32>
    %297 = arith.mulf %281, %289 : vector<1x32xf32>
    %298 = arith.addf %296, %297 : vector<1x32xf32>
    %299 = math.tanh %298 : vector<1x32xf32>
    %300 = arith.mulf %295, %299 : vector<1x32xf32>
    %301 = arith.index_cast %c7_i32 : i32 to index
    %c0_95 = arith.constant 0 : index
    %302 = vector.load %arg23[%301, %c0_95] : memref<8x32xf32, #tpu.memory_space<vmem>>, vector<1x32xf32>
    tpu.vector_store %arg23[%301, %c0_95], %300 {strides = array<i32>} : memref<8x32xf32, #tpu.memory_space<vmem>>, vector<1x32xf32>,
    %303 = arith.index_cast %c7_i32 : i32 to index
    %c0_96 = arith.constant 0 : index
    %304 = vector.load %arg24[%303, %c0_96] : memref<8x32xf32, #tpu.memory_space<vmem>>, vector<1x32xf32>
    tpu.vector_store %arg24[%303, %c0_96], %298 {strides = array<i32>} : memref<8x32xf32, #tpu.memory_space<vmem>>, vector<1x32xf32>,
    %c8_i32 = arith.constant 8 : i32
    %c0_97 = arith.constant 0 : index
    %c0_98 = arith.constant 0 : index
    %305 = vector.load %arg23[%c0_97, %c0_98] : memref<8x32xf32, #tpu.memory_space<vmem>>, vector<8x32xf32>
    %c0_99 = arith.constant 0 : index
    %c0_100 = arith.constant 0 : index
    %306 = vector.load %arg24[%c0_99, %c0_100] : memref<8x32xf32, #tpu.memory_space<vmem>>, vector<8x32xf32>
    %c0_101 = arith.constant 0 : index
    %c0_102 = arith.constant 0 : index
    %307 = vector.load %arg22[%c0_101, %c0_102] : memref<8x32xf32, #tpu.memory_space<vmem>>, vector<8x32xf32>
    %c0_103 = arith.constant 0 : index
    %c0_104 = arith.constant 0 : index
    %308 = vector.load %arg7[%c0_103, %c0_104] : memref<32x32xf32, #tpu.memory_space<vmem>>, vector<16x32xf32>
    %cst_105 = arith.constant dense<0.000000e+00> : vector<8x32xf32>
    %309 = tpu.matmul %1, %308, %cst_105 {dimension_numbers = #tpu.dot_dimension_numbers<[1], [0], [0], [1], [0, 0, 1, 1], [], []>} : vector<8x16xf32>, vector<16x32xf32>, vector<8x32xf32> -> vector<8x32xf32>
    %c16_106 = arith.constant 16 : index
    %c0_107 = arith.constant 0 : index
    %310 = vector.load %arg7[%c16_106, %c0_107] : memref<32x32xf32, #tpu.memory_space<vmem>>, vector<16x32xf32>
    %cst_108 = arith.constant dense<0.000000e+00> : vector<1x32xf32>
    %311 = tpu.matmul %3, %310, %cst_108 {dimension_numbers = #tpu.dot_dimension_numbers<[1], [0], [0], [1], [0, 0, 1, 1], [], []>} : vector<1x16xf32>, vector<16x32xf32>, vector<1x32xf32> -> vector<1x32xf32>
    %312 = vector.broadcast %311 : vector<1x32xf32> to vector<8x32xf32>
    %313 = arith.addf %309, %312 : vector<8x32xf32>
    %c0_109 = arith.constant 0 : index
    %c0_110 = arith.constant 0 : index
    %314 = vector.load %arg8[%c0_109, %c0_110] : memref<32x32xf32, #tpu.memory_space<vmem>>, vector<32x32xf32>
    %cst_111 = arith.constant dense<0.000000e+00> : vector<8x32xf32>
    %315 = tpu.matmul %307, %314, %cst_111 {dimension_numbers = #tpu.dot_dimension_numbers<[1], [0], [0], [1], [0, 0, 1, 1], [], []>} : vector<8x32xf32>, vector<32x32xf32>, vector<8x32xf32> -> vector<8x32xf32>
    %316 = arith.addf %313, %315 : vector<8x32xf32>
    %317 = arith.negf %316 : vector<8x32xf32>
    %318 = math.exp %317 : vector<8x32xf32>
    %cst_112 = arith.constant 1.000000e+00 : f32
    %319 = vector.broadcast %cst_112 : f32 to vector<8x32xf32>
    %320 = arith.addf %319, %318 : vector<8x32xf32>
    %321 = arith.divf %319, %320 : vector<8x32xf32>
    %322 = math.tanh %306 : vector<8x32xf32>
    %323 = arith.mulf %321, %322 : vector<8x32xf32>
    %c0_113 = arith.constant 0 : index
    %c0_114 = arith.constant 0 : index
    %324 = vector.load %arg9[%c0_113, %c0_114] : memref<32x49xf32, #tpu.memory_space<vmem>>, vector<32x49xf32>
    %cst_115 = arith.constant dense<0.000000e+00> : vector<49x49xf32>
    %325 = tpu.matmul %5, %324, %cst_115 {dimension_numbers = #tpu.dot_dimension_numbers<[1], [0], [0], [1], [0, 0, 1, 1], [], []>} : vector<49x32xf32>, vector<32x49xf32>, vector<49x49xf32> -> vector<49x49xf32>
    %c0_116 = arith.constant 0 : index
    %c0_117 = arith.constant 0 : index
    %326 = vector.load %arg10[%c0_116, %c0_117] : memref<32x49xf32, #tpu.memory_space<vmem>>, vector<32x49xf32>
    %cst_118 = arith.constant dense<0.000000e+00> : vector<8x49xf32>
    %327 = tpu.matmul %305, %326, %cst_118 {dimension_numbers = #tpu.dot_dimension_numbers<[1], [0], [0], [1], [0, 0, 1, 1], [], []>} : vector<8x32xf32>, vector<32x49xf32>, vector<8x49xf32> -> vector<8x49xf32>
    %c0_119 = arith.constant 0 : index
    %c0_120 = arith.constant 0 : index
    %328 = vector.load %arg13[%c0_119, %c0_120] : memref<1x49xf32, #tpu.memory_space<vmem>>, vector<1x49xf32>
    %329 = vector.shape_cast %325 : vector<49x49xf32> to vector<1x49x49xf32>
    %330 = vector.shape_cast %327 : vector<8x49xf32> to vector<8x1x49xf32>
    %331 = vector.broadcast %329 : vector<1x49x49xf32> to vector<8x49x49xf32>
    %332 = vector.broadcast %330 : vector<8x1x49xf32> to vector<8x49x49xf32>
    %333 = arith.addf %331, %332 : vector<8x49x49xf32>
    %334 = math.tanh %333 : vector<8x49x49xf32>
    %335 = vector.shape_cast %328 : vector<1x49xf32> to vector<1x1x49xf32>
    %336 = vector.broadcast %335 : vector<1x1x49xf32> to vector<8x49x49xf32>
    %337 = arith.mulf %334, %336 : vector<8x49x49xf32>
    %cst_121 = arith.constant dense<0.000000e+00> : vector<8x49xf32>
    %338 = vector.multi_reduction <add>, %337, %cst_121 [2] : vector<8x49x49xf32> to vector<8x49xf32>
    %c0_122 = arith.constant 0 : index
    %c0_123 = arith.constant 0 : index
    %339 = vector.load %arg12[%c0_122, %c0_123] : memref<32x49xf32, #tpu.memory_space<vmem>>, vector<32x49xf32>
    %cst_124 = arith.constant dense<0.000000e+00> : vector<8x49xf32>
    %340 = tpu.matmul %323, %339, %cst_124 {dimension_numbers = #tpu.dot_dimension_numbers<[1], [0], [0], [1], [0, 0, 1, 1], [], []>} : vector<8x32xf32>, vector<32x49xf32>, vector<8x49xf32> -> vector<8x49xf32>
    %c0_125 = arith.constant 0 : index
    %c0_126 = arith.constant 0 : index
    %341 = vector.load %arg11[%c0_125, %c0_126] : memref<32x49xf32, #tpu.memory_space<vmem>>, vector<32x49xf32>
    %cst_127 = arith.constant dense<0.000000e+00> : vector<8x49xf32>
    %342 = tpu.matmul %305, %341, %cst_127 {dimension_numbers = #tpu.dot_dimension_numbers<[1], [0], [0], [1], [0, 0, 1, 1], [], []>} : vector<8x32xf32>, vector<32x49xf32>, vector<8x49xf32> -> vector<8x49xf32>
    %343 = arith.addf %340, %342 : vector<8x49xf32>
    %344 = math.tanh %343 : vector<8x49xf32>
    %345 = vector.broadcast %328 : vector<1x49xf32> to vector<8x49xf32>
    %346 = arith.mulf %344, %345 : vector<8x49xf32>
    %cst_128 = arith.constant dense<0.000000e+00> : vector<8xf32>
    %347 = vector.multi_reduction <add>, %346, %cst_128 [1] : vector<8x49xf32> to vector<8xf32>
    %348 = vector.shape_cast %347 : vector<8xf32> to vector<8x1xf32>
    %cst_129 = arith.constant dense<0xFF800000> : vector<8xf32>
    %349 = vector.multi_reduction <maximumf>, %338, %cst_129 [1] : vector<8x49xf32> to vector<8xf32>
    %350 = vector.shape_cast %349 : vector<8xf32> to vector<8x1xf32>
    %351 = arith.maximumf %350, %348 : vector<8x1xf32>
    %352 = vector.broadcast %351 : vector<8x1xf32> to vector<8x49xf32>
    %353 = arith.subf %338, %352 : vector<8x49xf32>
    %354 = math.exp %353 : vector<8x49xf32>
    %355 = arith.subf %348, %351 : vector<8x1xf32>
    %356 = math.exp %355 : vector<8x1xf32>
    %cst_130 = arith.constant dense<0.000000e+00> : vector<8xf32>
    %357 = vector.multi_reduction <add>, %354, %cst_130 [1] : vector<8x49xf32> to vector<8xf32>
    %358 = vector.shape_cast %357 : vector<8xf32> to vector<8x1xf32>
    %359 = arith.addf %358, %356 : vector<8x1xf32>
    %cst_131 = arith.constant 1.000000e+00 : f32
    %360 = vector.broadcast %cst_131 : f32 to vector<8x1xf32>
    %361 = arith.divf %360, %359 : vector<8x1xf32>
    %362 = vector.broadcast %361 : vector<8x1xf32> to vector<8x49xf32>
    %363 = arith.mulf %354, %362 : vector<8x49xf32>
    %364 = arith.mulf %356, %361 : vector<8x1xf32>
    %365 = vector.broadcast %364 : vector<8x1xf32> to vector<8x32xf32>
    %366 = arith.mulf %365, %323 : vector<8x32xf32>
    %cst_132 = arith.constant dense<0.000000e+00> : vector<8x32xf32>
    %367 = tpu.matmul %363, %5, %cst_132 {dimension_numbers = #tpu.dot_dimension_numbers<[1], [0], [0], [1], [0, 0, 1, 1], [], []>} : vector<8x49xf32>, vector<49x32xf32>, vector<8x32xf32> -> vector<8x32xf32>
    %368 = arith.addf %366, %367 : vector<8x32xf32>
    %c0_133 = arith.constant 0 : index
    %c0_134 = arith.constant 0 : index
    %369 = vector.load %arg14[%c0_133, %c0_134] : memref<32x128xf32, #tpu.memory_space<vmem>>, vector<32x128xf32>
    %cst_135 = arith.constant dense<0.000000e+00> : vector<8x128xf32>
    %370 = tpu.matmul %368, %369, %cst_135 {dimension_numbers = #tpu.dot_dimension_numbers<[1], [0], [0], [1], [0, 0, 1, 1], [], []>} : vector<8x32xf32>, vector<32x128xf32>, vector<8x128xf32> -> vector<8x128xf32>
    %c0_136 = arith.constant 0 : index
    %c0_137 = arith.constant 0 : index
    %371 = vector.load %arg15[%c0_136, %c0_137] : memref<32x128xf32, #tpu.memory_space<vmem>>, vector<32x128xf32>
    %cst_138 = arith.constant dense<0.000000e+00> : vector<8x128xf32>
    %372 = tpu.matmul %305, %371, %cst_138 {dimension_numbers = #tpu.dot_dimension_numbers<[1], [0], [0], [1], [0, 0, 1, 1], [], []>} : vector<8x32xf32>, vector<32x128xf32>, vector<8x128xf32> -> vector<8x128xf32>
    %373 = arith.addf %370, %372 : vector<8x128xf32>
    %c0_139 = arith.constant 0 : index
    %c0_140 = arith.constant 0 : index
    %374 = vector.load %arg16[%c0_139, %c0_140] : memref<1x128xf32, #tpu.memory_space<vmem>>, vector<1x128xf32>
    %375 = vector.broadcast %374 : vector<1x128xf32> to vector<8x128xf32>
    %376 = arith.addf %373, %375 : vector<8x128xf32>
    %c0_141 = arith.constant 0 : index
    %c0_142 = arith.constant 0 : index
    %c0_143 = arith.constant 0 : index
    %377 = vector.load %arg17[%c0_141, %c0_142, %c0_143] : memref<1x8x128xf32, #tpu.memory_space<vmem>>, vector<1x8x128xf32>
    %378 = vector.shape_cast %377 : vector<1x8x128xf32> to vector<8x128xf32>
    %379 = vector.shape_cast %376 : vector<8x128xf32> to vector<1x8x128xf32>
    tpu.vector_store %arg17[%c0_141, %c0_142, %c0_143], %379 {strides = array<i32>} : memref<1x8x128xf32, #tpu.memory_space<vmem>>, vector<1x8x128xf32>,
    %cst_144 = arith.constant 0.000000e+00 : f32
    %380 = vector.broadcast %cst_144 : f32 to vector<8x128xf32>
    %c0_145 = arith.constant 0 : index
    %c0_146 = arith.constant 0 : index
    %c0_147 = arith.constant 0 : index
    %381 = vector.load %arg18[%c0_145, %c0_146, %c0_147] : memref<1x8x128xf32, #tpu.memory_space<vmem>>, vector<1x8x128xf32>
    %382 = vector.shape_cast %381 : vector<1x8x128xf32> to vector<8x128xf32>
    %383 = vector.shape_cast %380 : vector<8x128xf32> to vector<1x8x128xf32>
    tpu.vector_store %arg18[%c0_145, %c0_146, %c0_147], %383 {strides = array<i32>} : memref<1x8x128xf32, #tpu.memory_space<vmem>>, vector<1x8x128xf32>,
    %cst_148 = arith.constant 1.000000e+00 : f32
    %384 = vector.broadcast %cst_148 : f32 to vector<8x1xf32>
    %385 = arith.subf %384, %364 : vector<8x1xf32>
    %386 = vector.broadcast %385 : vector<8x1xf32> to vector<8x49xf32>
    %387 = arith.mulf %363, %386 : vector<8x49xf32>
    %c0_149 = arith.constant 0 : index
    %c0_150 = arith.constant 0 : index
    %c0_151 = arith.constant 0 : index
    %388 = vector.load %arg18[%c0_149, %c0_150, %c0_151] : memref<1x8x128xf32, #tpu.memory_space<vmem>>, vector<1x8x49xf32>
    %389 = vector.shape_cast %388 : vector<1x8x49xf32> to vector<8x49xf32>
    %390 = vector.shape_cast %387 : vector<8x49xf32> to vector<1x8x49xf32>
    tpu.vector_store %arg18[%c0_149, %c0_150, %c0_151], %390 {strides = array<i32>} : memref<1x8x128xf32, #tpu.memory_space<vmem>>, vector<1x8x49xf32>,
    %c0_152 = arith.constant 0 : index
    %c0_153 = arith.constant 0 : index
    %c49 = arith.constant 49 : index
    %391 = vector.load %arg18[%c0_152, %c0_153, %c49] : memref<1x8x128xf32, #tpu.memory_space<vmem>>, vector<1x8x1xf32>
    %392 = vector.shape_cast %391 : vector<1x8x1xf32> to vector<8x1xf32>
    %393 = vector.shape_cast %364 : vector<8x1xf32> to vector<1x8x1xf32>
    tpu.vector_store %arg18[%c0_152, %c0_153, %c49], %393 {strides = array<i32>} : memref<1x8x128xf32, #tpu.memory_space<vmem>>, vector<1x8x1xf32>,
    %c0_154 = arith.constant 0 : index
    %c0_155 = arith.constant 0 : index
    %c0_156 = arith.constant 0 : index
    %394 = vector.load %arg19[%c0_154, %c0_155, %c0_156] : memref<1x1x32xf32, #tpu.memory_space<vmem>>, vector<1x1x32xf32>
    %395 = vector.shape_cast %394 : vector<1x1x32xf32> to vector<1x32xf32>
    %396 = vector.shape_cast %300 : vector<1x32xf32> to vector<1x1x32xf32>
    tpu.vector_store %arg19[%c0_154, %c0_155, %c0_156], %396 {strides = array<i32>} : memref<1x1x32xf32, #tpu.memory_space<vmem>>, vector<1x1x32xf32>,
    %c0_157 = arith.constant 0 : index
    %c0_158 = arith.constant 0 : index
    %c0_159 = arith.constant 0 : index
    %397 = vector.load %arg20[%c0_157, %c0_158, %c0_159] : memref<1x1x32xf32, #tpu.memory_space<vmem>>, vector<1x1x32xf32>
    %398 = vector.shape_cast %397 : vector<1x1x32xf32> to vector<1x32xf32>
    %399 = vector.shape_cast %298 : vector<1x32xf32> to vector<1x1x32xf32>
    tpu.vector_store %arg20[%c0_157, %c0_158, %c0_159], %399 {strides = array<i32>} : memref<1x1x32xf32, #tpu.memory_space<vmem>>, vector<1x1x32xf32>,
    return
  }
  func.func @transform_0(%arg0: i32) -> (i32, i32, i32) {
    %c0_i32 = arith.constant 0 : i32
    %c0_i32_0 = arith.constant 0 : i32
    %c0_i32_1 = arith.constant 0 : i32
    return %arg0, %c0_i32, %c0_i32_0 : i32, i32, i32
  }
  func.func @transform_1(%arg0: i32) -> (i32, i32, i32) {
    %c0_i32 = arith.constant 0 : i32
    %c0_i32_0 = arith.constant 0 : i32
    %c0_i32_1 = arith.constant 0 : i32
    return %arg0, %c0_i32, %c0_i32_0 : i32, i32, i32
  }
  func.func @transform_2(%arg0: i32) -> (i32, i32, i32) {
    %c0_i32 = arith.constant 0 : i32
    %c0_i32_0 = arith.constant 0 : i32
    %c0_i32_1 = arith.constant 0 : i32
    return %arg0, %c0_i32, %c0_i32_0 : i32, i32, i32
  }
  func.func @transform_3(%arg0: i32) -> (i32, i32) {
    %c0_i32 = arith.constant 0 : i32
    %c0_i32_0 = arith.constant 0 : i32
    %c0_i32_1 = arith.constant 0 : i32
    return %c0_i32, %c0_i32_0 : i32, i32
  }
  func.func @transform_4(%arg0: i32) -> (i32, i32) {
    %c0_i32 = arith.constant 0 : i32
    %c0_i32_0 = arith.constant 0 : i32
    %c0_i32_1 = arith.constant 0 : i32
    return %c0_i32, %c0_i32_0 : i32, i32
  }
  func.func @transform_5(%arg0: i32) -> (i32, i32) {
    %c0_i32 = arith.constant 0 : i32
    %c0_i32_0 = arith.constant 0 : i32
    %c0_i32_1 = arith.constant 0 : i32
    return %c0_i32, %c0_i32_0 : i32, i32
  }
  func.func @transform_6(%arg0: i32) -> (i32, i32) {
    %c0_i32 = arith.constant 0 : i32
    %c0_i32_0 = arith.constant 0 : i32
    %c0_i32_1 = arith.constant 0 : i32
    return %c0_i32, %c0_i32_0 : i32, i32
  }
  func.func @transform_7(%arg0: i32) -> (i32, i32) {
    %c0_i32 = arith.constant 0 : i32
    %c0_i32_0 = arith.constant 0 : i32
    %c0_i32_1 = arith.constant 0 : i32
    return %c0_i32, %c0_i32_0 : i32, i32
  }
  func.func @transform_8(%arg0: i32) -> (i32, i32) {
    %c0_i32 = arith.constant 0 : i32
    %c0_i32_0 = arith.constant 0 : i32
    %c0_i32_1 = arith.constant 0 : i32
    return %c0_i32, %c0_i32_0 : i32, i32
  }
  func.func @transform_9(%arg0: i32) -> (i32, i32) {
    %c0_i32 = arith.constant 0 : i32
    %c0_i32_0 = arith.constant 0 : i32
    %c0_i32_1 = arith.constant 0 : i32
    return %c0_i32, %c0_i32_0 : i32, i32
  }
  func.func @transform_10(%arg0: i32) -> (i32, i32) {
    %c0_i32 = arith.constant 0 : i32
    %c0_i32_0 = arith.constant 0 : i32
    %c0_i32_1 = arith.constant 0 : i32
    return %c0_i32, %c0_i32_0 : i32, i32
  }
  func.func @transform_11(%arg0: i32) -> (i32, i32) {
    %c0_i32 = arith.constant 0 : i32
    %c0_i32_0 = arith.constant 0 : i32
    %c0_i32_1 = arith.constant 0 : i32
    return %c0_i32, %c0_i32_0 : i32, i32
  }
  func.func @transform_12(%arg0: i32) -> (i32, i32) {
    %c0_i32 = arith.constant 0 : i32
    %c0_i32_0 = arith.constant 0 : i32
    %c0_i32_1 = arith.constant 0 : i32
    return %c0_i32, %c0_i32_0 : i32, i32
  }
  func.func @transform_13(%arg0: i32) -> (i32, i32) {
    %c0_i32 = arith.constant 0 : i32
    %c0_i32_0 = arith.constant 0 : i32
    %c0_i32_1 = arith.constant 0 : i32
    return %c0_i32, %c0_i32_0 : i32, i32
  }
  func.func @transform_14(%arg0: i32) -> (i32, i32) {
    %c0_i32 = arith.constant 0 : i32
    %c0_i32_0 = arith.constant 0 : i32
    %c0_i32_1 = arith.constant 0 : i32
    return %c0_i32, %c0_i32_0 : i32, i32
  }
  func.func @transform_15(%arg0: i32) -> (i32, i32) {
    %c0_i32 = arith.constant 0 : i32
    %c0_i32_0 = arith.constant 0 : i32
    %c0_i32_1 = arith.constant 0 : i32
    return %c0_i32, %c0_i32_0 : i32, i32
  }
  func.func @transform_16(%arg0: i32) -> (i32, i32, i32) {
    %c0_i32 = arith.constant 0 : i32
    %c0_i32_0 = arith.constant 0 : i32
    %c0_i32_1 = arith.constant 0 : i32
    return %arg0, %c0_i32, %c0_i32_0 : i32, i32, i32
  }
  func.func @transform_17(%arg0: i32) -> (i32, i32, i32) {
    %c0_i32 = arith.constant 0 : i32
    %c0_i32_0 = arith.constant 0 : i32
    %c0_i32_1 = arith.constant 0 : i32
    return %arg0, %c0_i32, %c0_i32_0 : i32, i32, i32
  }
  func.func @transform_18(%arg0: i32) -> (i32, i32, i32) {
    %c0_i32 = arith.constant 0 : i32
    %c0_i32_0 = arith.constant 0 : i32
    %c0_i32_1 = arith.constant 0 : i32
    return %arg0, %c0_i32, %c0_i32_0 : i32, i32, i32
  }
  func.func @transform_19(%arg0: i32) -> (i32, i32, i32) {
    %c0_i32 = arith.constant 0 : i32
    %c0_i32_0 = arith.constant 0 : i32
    %c0_i32_1 = arith.constant 0 : i32
    return %arg0, %c0_i32, %c0_i32_0 : i32, i32, i32
  }
}

</mosaic_0001>

<llo_original>
// kernel: tpu_custom_call.1
$region0: #{tpu_custom_call.1}
  #allocation0 [shape = 'u32[]', space=smem, size = 0x4, offset = 0x4, fixed_abs, tag = 'smem constant byte address 0x4 - core index']
  #allocation1 [shape = 'u32[72,128]{1,0:T(1,128)}', space=vmem, size = 0x9000, scoped, tag = 'internal scratch']
  #allocation2 [shape = 'f32[8,128]{1,0:T(8,128)}', space=vmem, size = 0x1000, scoped, tag = 'scratch operand']
  #allocation3 [shape = 'f32[8,32]{1,0:T(8,128)}', space=vmem, size = 0x1000, scoped, tag = 'scratch operand']
  #allocation4 [shape = 'f32[8,32]{1,0:T(8,128)}', space=vmem, size = 0x1000, scoped, tag = 'scratch operand']
  #allocation5 [shape = 'f32[8,32]{1,0:T(8,128)}', space=vmem, size = 0x1000, scoped, tag = 'scratch operand']
  %s0 = inlined_call_operand.vmem [shape: f32[2,8,16], index: 0, kind: input, shape index: {}]
  %s1 = inlined_call_operand.hbm [shape: f32[2,1,16], index: 1, kind: input, shape index: {}]
  %s2 = inlined_call_operand.vmem [shape: f32[2,49,32], index: 2, kind: input, shape index: {}]
  %s3 = inlined_call_operand.vmem [shape: f32[32,128], index: 3, kind: input, shape index: {}]
  %s4 = inlined_call_operand.vmem [shape: f32[32,128], index: 4, kind: input, shape index: {}]
  %s5 = inlined_call_operand.vmem [shape: f32[1,128], index: 5, kind: input, shape index: {}]
  %s6 = inlined_call_operand.vmem [shape: f32[32,32], index: 6, kind: input, shape index: {}]
  %s7 = inlined_call_operand.vmem [shape: f32[32,32], index: 7, kind: input, shape index: {}]
  %s8 = inlined_call_operand.vmem [shape: f32[32,49], index: 8, kind: input, shape index: {}]
  %s9 = inlined_call_operand.hbm [shape: f32[32,49], index: 9, kind: input, shape index: {}]
  %s10 = inlined_call_operand.hbm [shape: f32[32,49], index: 10, kind: input, shape index: {}]
  %s11 = inlined_call_operand.hbm [shape: f32[32,49], index: 11, kind: input, shape index: {}]
  %s12 = inlined_call_operand.vmem [shape: f32[1,49], index: 12, kind: input, shape index: {}]
  %s13 = inlined_call_operand.hbm [shape: f32[32,128], index: 13, kind: input, shape index: {}]
  %s14 = inlined_call_operand.hbm [shape: f32[32,128], index: 14, kind: input, shape index: {}]
  %s15 = inlined_call_operand.vmem [shape: f32[1,128], index: 15, kind: input, shape index: {}]
  %s16 = inlined_call_operand.hbm [shape: f32[2,8,128], index: 16, kind: output, shape index: {0}]
  %s17 = inlined_call_operand.hbm [shape: f32[2,8,128], index: 17, kind: output, shape index: {1}]
  %s18 = inlined_call_operand.hbm [shape: f32[2,1,32], index: 18, kind: output, shape index: {2}]
  %s19 = inlined_call_operand.hbm [shape: f32[2,1,32], index: 19, kind: output, shape index: {3}]
  %20 = xla_tuple %s16, %s17, %s18, %s19
  %s21 = sld [smem:[#allocation0]]
  $region145: #{tpu_custom_call.1} parent=0
    _
  %s23 = ssub.s32 1, %s21
  %s24 = scalar_select 0, %s23, %s21
  $region1: #{tpu_custom_call.1} parent=0
    #allocation6 [shape = 'u8[1024]{0}', space=vmem, size = 0x400, scoped, tag = 'input window, operand 1']
    #allocation7 [shape = 's32[2]{0}', space=sflag, size = 0x8, scoped, tag = 'scoped memory for tpu_custom_call.1']
    #allocation8 [shape = 's32[2]{0}', space=sflag, size = 0x8, scoped, tag = 'scoped memory for tpu_custom_call.1']
    #allocation9 [shape = 'u8[16384]{0}', space=vmem, size = 0x4000, scoped, tag = 'input window, operand 9, single buffered']
    #allocation10 [shape = 's32[1]{0}', space=sflag, size = 0x4, scoped, tag = 'scoped memory for tpu_custom_call.1']
    #allocation11 [shape = 'u8[16384]{0}', space=vmem, size = 0x4000, scoped, tag = 'input window, operand 10, single buffered']
    #allocation12 [shape = 'u8[16384]{0}', space=vmem, size = 0x4000, scoped, tag = 'input window, operand 11, single buffered']
    #allocation13 [shape = 's32[1]{0}', space=sflag, size = 0x4, scoped, tag = 'scoped memory for tpu_custom_call.1']
    #allocation14 [shape = 'u8[16384]{0}', space=vmem, size = 0x4000, scoped, tag = 'input window, operand 13, single buffered']
    #allocation15 [shape = 'u8[16384]{0}', space=vmem, size = 0x4000, scoped, tag = 'input window, operand 14, single buffered']
    #allocation16 [shape = 's32[1]{0}', space=sflag, size = 0x4, scoped, tag = 'scoped memory for tpu_custom_call.1']
    #allocation17 [shape = 'u8[8192]{0}', space=vmem, size = 0x2000, scoped, tag = 'output window, operand 0']
    #allocation18 [shape = 'u8[8192]{0}', space=vmem, size = 0x2000, scoped, tag = 'output window, operand 1']
    #allocation19 [shape = 's32[2]{0}', space=sflag, size = 0x8, scoped, tag = 'scoped memory for tpu_custom_call.1']
    #allocation20 [shape = 'u8[1024]{0}', space=vmem, size = 0x400, scoped, tag = 'output window, operand 2']
    #allocation21 [shape = 'u8[1024]{0}', space=vmem, size = 0x400, scoped, tag = 'output window, operand 3']
    #allocation22 [shape = 's32[2]{0}', space=sflag, size = 0x8, scoped, tag = 'scoped memory for tpu_custom_call.1']
    %25 = vsyncpa [#allocation7], 0
    %s26 = scalar_lea.sflag [#allocation7], 1
    %27 = vsyncpa %s26, 0
    %28 = vsyncpa [#allocation10], 0
    %29 = vsyncpa [#allocation13], 0
    %30 = vsyncpa [#allocation16], 0
    %31 = vsyncpa [#allocation8], 0
    %s32 = scalar_lea.sflag [#allocation8], 1
    %33 = vsyncpa %s32, 0
    %34 = vsyncpa [#allocation19], 0
    %s35 = scalar_lea.sflag [#allocation19], 1
    %36 = vsyncpa %s35, 0
    %37 = vsyncpa [#allocation22], 0
    %s38 = scalar_lea.sflag [#allocation22], 1
    %39 = vsyncpa %s38, 0
    loop: start=0, step=1, limit=4
    $region2: #{tpu_custom_call.1} parent=1 // loop_pre_header
      _
    $region3: #{tpu_custom_call.1} parent=1 // loop_header
      %s41 = sphi 0, %s45
      %p42 = scmp.ge.s32.totalorder %s41, 4
      %s51 = sphi 0, %s53
      %s54 = sphi 0, %s51
      %s55 = sphi 0, %s54
      %s71 = sphi 0, %s55
      %s77 = sphi 0, %s79
      %s80 = sphi 0, %s77
      %s81 = sphi 0, %s80
      %s97 = sphi 0, %s81
      %s103 = sphi 0, %s105
      %s106 = sphi 0, %s103
      %s107 = sphi 0, %s106
      %s123 = sphi 0, %s107
      %s127 = sphi 0, %s127
      %s129 = sphi 0, %s127
      %s130 = sphi 0, %s129
      %s144 = sphi 0, %s130
      %s148 = sphi 0, %s148
      %s150 = sphi 0, %s148
      %s151 = sphi 0, %s150
      %s165 = sphi 0, %s151
      %s169 = sphi 0, %s169
      %s171 = sphi 0, %s169
      %s172 = sphi 0, %s171
      %s186 = sphi 0, %s172
      %s190 = sphi 0, %s190
      %s192 = sphi 0, %s190
      %s193 = sphi 0, %s192
      %s207 = sphi 0, %s193
      %s211 = sphi 0, %s211
      %s213 = sphi 0, %s211
      %s214 = sphi 0, %s213
      %s228 = sphi 0, %s214
      %s232 = sphi 0, %s232
      %s234 = sphi 0, %s232
      %s235 = sphi 0, %s234
      %s249 = sphi 0, %s235
      %s253 = sphi 0, %s253
      %s255 = sphi 0, %s253
      %s256 = sphi 0, %s255
      %s270 = sphi 0, %s256
      %s274 = sphi 0, %s274
      %s276 = sphi 0, %s274
      %s277 = sphi 0, %s276
      %s291 = sphi 0, %s277
      %s295 = sphi 0, %s295
      %s297 = sphi 0, %s295
      %s298 = sphi 0, %s297
      %s312 = sphi 0, %s298
      %s316 = sphi 0, %s316
      %s318 = sphi 0, %s316
      %s319 = sphi 0, %s318
      %s333 = sphi 0, %s319
      %s337 = sphi 0, %s337
      %s339 = sphi 0, %s337
      %s340 = sphi 0, %s339
      %s354 = sphi 0, %s340
      %s358 = sphi 0, %s358
      %s360 = sphi 0, %s358
      %s361 = sphi 0, %s360
      %s375 = sphi 0, %s361
      %s379 = sphi 0, %s379
      %s381 = sphi 0, %s379
      %s382 = sphi 0, %s381
      %s396 = sphi 0, %s382
      %s402 = sphi 0, %s404
      %s405 = sphi 0, %s402
      %s406 = sphi 0, %s405
      %s422 = sphi 0, %s406
      %s428 = sphi 0, %s430
      %s431 = sphi 0, %s428
      %s432 = sphi 0, %s431
      %s448 = sphi 0, %s432
      %s454 = sphi 0, %s456
      %s457 = sphi 0, %s454
      %s458 = sphi 0, %s457
      %s474 = sphi 0, %s458
      %s480 = sphi 0, %s482
      %s483 = sphi 0, %s480
      %s484 = sphi 0, %s483
      %s500 = sphi 0, %s484
    $region4: #{tpu_custom_call.1} parent=1 // loop_header_branch
      %44 = sbr.rel (%p42) target = $region8
    $region5: #{tpu_custom_call.1} parent=1 // loop_body
      %s46 = ssub.s32 %s41, 1
      %s47 = ssub.s32 %s41, 2
      %s48 = sadd.s32 %s41, 1
      %s49 = ssub.s32 %s41, %s48
      %p50 = scmp.eq.s32.totalorder %s49, 0
      %s52 = sadd.s32 %s51, 1
      %s53 = scalar_select %p50, %s51, %s52
      %p56 = pneg %p50
      %p57 = scmp.eq.s32.totalorder %s41, 1
      %p58 = por %p56, %p57
      %p59 = scmp.ne.s32.totalorder %s51, %s54
      %p60 = scmp.eq.s32.totalorder %s41, 0
      %p61 = por %p59, %p60
      %p62 = scmp.ne.s32.totalorder %s51, %s54
      %p63 = scmp.eq.s32.totalorder %s46, 1
      %p64 = por %p62, %p63
      %p65 = scmp.ne.s32.totalorder %s54, %s55
      %p66 = scmp.eq.s32.totalorder %s46, 0
      %p67 = por %p65, %p66
      %p68 = scmp.ne.s32.totalorder %s54, %s55
      %p69 = scmp.eq.s32.totalorder %s47, 1
      %p70 = por %p68, %p69
      %p72 = scmp.ne.s32.totalorder %s55, %s71
      %p73 = scmp.eq.s32.totalorder %s47, 0
      %p74 = por %p72, %p73
      %s75 = ssub.s32 %s41, %s48
      %p76 = scmp.eq.s32.totalorder %s75, 0
      %s78 = sadd.s32 %s77, 1
      %s79 = scalar_select %p76, %s77, %s78
      %p82 = pneg %p76
      %p83 = scmp.eq.s32.totalorder %s41, 1
      %p84 = por %p82, %p83
      %p85 = scmp.ne.s32.totalorder %s77, %s80
      %p86 = scmp.eq.s32.totalorder %s41, 0
      %p87 = por %p85, %p86
      %p88 = scmp.ne.s32.totalorder %s77, %s80
      %p89 = scmp.eq.s32.totalorder %s46, 1
      %p90 = por %p88, %p89
      %p91 = scmp.ne.s32.totalorder %s80, %s81
      %p92 = scmp.eq.s32.totalorder %s46, 0
      %p93 = por %p91, %p92
      %p94 = scmp.ne.s32.totalorder %s80, %s81
      %p95 = scmp.eq.s32.totalorder %s47, 1
      %p96 = por %p94, %p95
      %p98 = scmp.ne.s32.totalorder %s81, %s97
      %p99 = scmp.eq.s32.totalorder %s47, 0
      %p100 = por %p98, %p99
      %s101 = ssub.s32 %s41, %s48
      %p102 = scmp.eq.s32.totalorder %s101, 0
      %s104 = sadd.s32 %s103, 1
      %s105 = scalar_select %p102, %s103, %s104
      %p108 = pneg %p102
      %p109 = scmp.eq.s32.totalorder %s41, 1
      %p110 = por %p108, %p109
      %p111 = scmp.ne.s32.totalorder %s103, %s106
      %p112 = scmp.eq.s32.totalorder %s41, 0
      %p113 = por %p111, %p112
      %p114 = scmp.ne.s32.totalorder %s103, %s106
      %p115 = scmp.eq.s32.totalorder %s46, 1
      %p116 = por %p114, %p115
      %p117 = scmp.ne.s32.totalorder %s106, %s107
      %p118 = scmp.eq.s32.totalorder %s46, 0
      %p119 = por %p117, %p118
      %p120 = scmp.ne.s32.totalorder %s106, %s107
      %p121 = scmp.eq.s32.totalorder %s47, 1
      %p122 = por %p120, %p121
      %p124 = scmp.ne.s32.totalorder %s107, %s123
      %p125 = scmp.eq.s32.totalorder %s47, 0
      %p126 = por %p124, %p125
      %s128 = sadd.s32 %s127, 1
      %p131 = scmp.eq.s32.totalorder %s41, 1
      %p132 = scmp.ne.s32.totalorder %s127, %s129
      %p133 = scmp.eq.s32.totalorder %s41, 0
      %p134 = por %p132, %p133
      %p135 = scmp.ne.s32.totalorder %s127, %s129
      %p136 = scmp.eq.s32.totalorder %s46, 1
      %p137 = por %p135, %p136
      %p138 = scmp.ne.s32.totalorder %s129, %s130
      %p139 = scmp.eq.s32.totalorder %s46, 0
      %p140 = por %p138, %p139
      %p141 = scmp.ne.s32.totalorder %s129, %s130
      %p142 = scmp.eq.s32.totalorder %s47, 1
      %p143 = por %p141, %p142
      %p145 = scmp.ne.s32.totalorder %s130, %s144
      %p146 = scmp.eq.s32.totalorder %s47, 0
      %p147 = por %p145, %p146
      %s149 = sadd.s32 %s148, 1
      %p152 = scmp.eq.s32.totalorder %s41, 1
      %p153 = scmp.ne.s32.totalorder %s148, %s150
      %p154 = scmp.eq.s32.totalorder %s41, 0
      %p155 = por %p153, %p154
      %p156 = scmp.ne.s32.totalorder %s148, %s150
      %p157 = scmp.eq.s32.totalorder %s46, 1
      %p158 = por %p156, %p157
      %p159 = scmp.ne.s32.totalorder %s150, %s151
      %p160 = scmp.eq.s32.totalorder %s46, 0
      %p161 = por %p159, %p160
      %p162 = scmp.ne.s32.totalorder %s150, %s151
      %p163 = scmp.eq.s32.totalorder %s47, 1
      %p164 = por %p162, %p163
      %p166 = scmp.ne.s32.totalorder %s151, %s165
      %p167 = scmp.eq.s32.totalorder %s47, 0
      %p168 = por %p166, %p167
      %s170 = sadd.s32 %s169, 1
      %p173 = scmp.eq.s32.totalorder %s41, 1
      %p174 = scmp.ne.s32.totalorder %s169, %s171
      %p175 = scmp.eq.s32.totalorder %s41, 0
      %p176 = por %p174, %p175
      %p177 = scmp.ne.s32.totalorder %s169, %s171
      %p178 = scmp.eq.s32.totalorder %s46, 1
      %p179 = por %p177, %p178
      %p180 = scmp.ne.s32.totalorder %s171, %s172
      %p181 = scmp.eq.s32.totalorder %s46, 0
      %p182 = por %p180, %p181
      %p183 = scmp.ne.s32.totalorder %s171, %s172
      %p184 = scmp.eq.s32.totalorder %s47, 1
      %p185 = por %p183, %p184
      %p187 = scmp.ne.s32.totalorder %s172, %s186
      %p188 = scmp.eq.s32.totalorder %s47, 0
      %p189 = por %p187, %p188
      %s191 = sadd.s32 %s190, 1
      %p194 = scmp.eq.s32.totalorder %s41, 1
      %p195 = scmp.ne.s32.totalorder %s190, %s192
      %p196 = scmp.eq.s32.totalorder %s41, 0
      %p197 = por %p195, %p196
      %p198 = scmp.ne.s32.totalorder %s190, %s192
      %p199 = scmp.eq.s32.totalorder %s46, 1
      %p200 = por %p198, %p199
      %p201 = scmp.ne.s32.totalorder %s192, %s193
      %p202 = scmp.eq.s32.totalorder %s46, 0
      %p203 = por %p201, %p202
      %p204 = scmp.ne.s32.totalorder %s192, %s193
      %p205 = scmp.eq.s32.totalorder %s47, 1
      %p206 = por %p204, %p205
      %p208 = scmp.ne.s32.totalorder %s193, %s207
      %p209 = scmp.eq.s32.totalorder %s47, 0
      %p210 = por %p208, %p209
      %s212 = sadd.s32 %s211, 1
      %p215 = scmp.eq.s32.totalorder %s41, 1
      %p216 = scmp.ne.s32.totalorder %s211, %s213
      %p217 = scmp.eq.s32.totalorder %s41, 0
      %p218 = por %p216, %p217
      %p219 = scmp.ne.s32.totalorder %s211, %s213
      %p220 = scmp.eq.s32.totalorder %s46, 1
      %p221 = por %p219, %p220
      %p222 = scmp.ne.s32.totalorder %s213, %s214
      %p223 = scmp.eq.s32.totalorder %s46, 0
      %p224 = por %p222, %p223
      %p225 = scmp.ne.s32.totalorder %s213, %s214
      %p226 = scmp.eq.s32.totalorder %s47, 1
      %p227 = por %p225, %p226
      %p229 = scmp.ne.s32.totalorder %s214, %s228
      %p230 = scmp.eq.s32.totalorder %s47, 0
      %p231 = por %p229, %p230
      %s233 = sadd.s32 %s232, 1
      %p236 = scmp.eq.s32.totalorder %s41, 1
      %p237 = scmp.ne.s32.totalorder %s232, %s234
      %p238 = scmp.eq.s32.totalorder %s41, 0
      %p239 = por %p237, %p238
      %p240 = scmp.ne.s32.totalorder %s232, %s234
      %p241 = scmp.eq.s32.totalorder %s46, 1
      %p242 = por %p240, %p241
      %p243 = scmp.ne.s32.totalorder %s234, %s235
      %p244 = scmp.eq.s32.totalorder %s46, 0
      %p245 = por %p243, %p244
      %p246 = scmp.ne.s32.totalorder %s234, %s235
      %p247 = scmp.eq.s32.totalorder %s47, 1
      %p248 = por %p246, %p247
      %p250 = scmp.ne.s32.totalorder %s235, %s249
      %p251 = scmp.eq.s32.totalorder %s47, 0
      %p252 = por %p250, %p251
      %s254 = sadd.s32 %s253, 1
      %p257 = scmp.eq.s32.totalorder %s41, 1
      %p258 = scmp.ne.s32.totalorder %s253, %s255
      %p259 = scmp.eq.s32.totalorder %s41, 0
      %p260 = por %p258, %p259
      %p261 = scmp.ne.s32.totalorder %s253, %s255
      %p262 = scmp.eq.s32.totalorder %s46, 1
      %p263 = por %p261, %p262
      %p264 = scmp.ne.s32.totalorder %s255, %s256
      %p265 = scmp.eq.s32.totalorder %s46, 0
      %p266 = por %p264, %p265
      %p267 = scmp.ne.s32.totalorder %s255, %s256
      %p268 = scmp.eq.s32.totalorder %s47, 1
      %p269 = por %p267, %p268
      %p271 = scmp.ne.s32.totalorder %s256, %s270
      %p272 = scmp.eq.s32.totalorder %s47, 0
      %p273 = por %p271, %p272
      %s275 = sadd.s32 %s274, 1
      %p278 = scmp.eq.s32.totalorder %s41, 1
      %p279 = scmp.ne.s32.totalorder %s274, %s276
      %p280 = scmp.eq.s32.totalorder %s41, 0
      %p281 = por %p279, %p280
      %p282 = scmp.ne.s32.totalorder %s274, %s276
      %p283 = scmp.eq.s32.totalorder %s46, 1
      %p284 = por %p282, %p283
      %p285 = scmp.ne.s32.totalorder %s276, %s277
      %p286 = scmp.eq.s32.totalorder %s46, 0
      %p287 = por %p285, %p286
      %p288 = scmp.ne.s32.totalorder %s276, %s277
      %p289 = scmp.eq.s32.totalorder %s47, 1
      %p290 = por %p288, %p289
      %p292 = scmp.ne.s32.totalorder %s277, %s291
      %p293 = scmp.eq.s32.totalorder %s47, 0
      %p294 = por %p292, %p293
      %s296 = sadd.s32 %s295, 1
      %p299 = scmp.eq.s32.totalorder %s41, 1
      %p300 = scmp.ne.s32.totalorder %s295, %s297
      %p301 = scmp.eq.s32.totalorder %s41, 0
      %p302 = por %p300, %p301
      %p303 = scmp.ne.s32.totalorder %s295, %s297
      %p304 = scmp.eq.s32.totalorder %s46, 1
      %p305 = por %p303, %p304
      %p306 = scmp.ne.s32.totalorder %s297, %s298
      %p307 = scmp.eq.s32.totalorder %s46, 0
      %p308 = por %p306, %p307
      %p309 = scmp.ne.s32.totalorder %s297, %s298
      %p310 = scmp.eq.s32.totalorder %s47, 1
      %p311 = por %p309, %p310
      %p313 = scmp.ne.s32.totalorder %s298, %s312
      %p314 = scmp.eq.s32.totalorder %s47, 0
      %p315 = por %p313, %p314
      %s317 = sadd.s32 %s316, 1
      %p320 = scmp.eq.s32.totalorder %s41, 1
      %p321 = scmp.ne.s32.totalorder %s316, %s318
      %p322 = scmp.eq.s32.totalorder %s41, 0
      %p323 = por %p321, %p322
      %p324 = scmp.ne.s32.totalorder %s316, %s318
      %p325 = scmp.eq.s32.totalorder %s46, 1
      %p326 = por %p324, %p325
      %p327 = scmp.ne.s32.totalorder %s318, %s319
      %p328 = scmp.eq.s32.totalorder %s46, 0
      %p329 = por %p327, %p328
      %p330 = scmp.ne.s32.totalorder %s318, %s319
      %p331 = scmp.eq.s32.totalorder %s47, 1
      %p332 = por %p330, %p331
      %p334 = scmp.ne.s32.totalorder %s319, %s333
      %p335 = scmp.eq.s32.totalorder %s47, 0
      %p336 = por %p334, %p335
      %s338 = sadd.s32 %s337, 1
      %p341 = scmp.eq.s32.totalorder %s41, 1
      %p342 = scmp.ne.s32.totalorder %s337, %s339
      %p343 = scmp.eq.s32.totalorder %s41, 0
      %p344 = por %p342, %p343
      %p345 = scmp.ne.s32.totalorder %s337, %s339
      %p346 = scmp.eq.s32.totalorder %s46, 1
      %p347 = por %p345, %p346
      %p348 = scmp.ne.s32.totalorder %s339, %s340
      %p349 = scmp.eq.s32.totalorder %s46, 0
      %p350 = por %p348, %p349
      %p351 = scmp.ne.s32.totalorder %s339, %s340
      %p352 = scmp.eq.s32.totalorder %s47, 1
      %p353 = por %p351, %p352
      %p355 = scmp.ne.s32.totalorder %s340, %s354
      %p356 = scmp.eq.s32.totalorder %s47, 0
      %p357 = por %p355, %p356
      %s359 = sadd.s32 %s358, 1
      %p362 = scmp.eq.s32.totalorder %s41, 1
      %p363 = scmp.ne.s32.totalorder %s358, %s360
      %p364 = scmp.eq.s32.totalorder %s41, 0
      %p365 = por %p363, %p364
      %p366 = scmp.ne.s32.totalorder %s358, %s360
      %p367 = scmp.eq.s32.totalorder %s46, 1
      %p368 = por %p366, %p367
      %p369 = scmp.ne.s32.totalorder %s360, %s361
      %p370 = scmp.eq.s32.totalorder %s46, 0
      %p371 = por %p369, %p370
      %p372 = scmp.ne.s32.totalorder %s360, %s361
      %p373 = scmp.eq.s32.totalorder %s47, 1
      %p374 = por %p372, %p373
      %p376 = scmp.ne.s32.totalorder %s361, %s375
      %p377 = scmp.eq.s32.totalorder %s47, 0
      %p378 = por %p376, %p377
      %s380 = sadd.s32 %s379, 1
      %p383 = scmp.eq.s32.totalorder %s41, 1
      %p384 = scmp.ne.s32.totalorder %s379, %s381
      %p385 = scmp.eq.s32.totalorder %s41, 0
      %p386 = por %p384, %p385
      %p387 = scmp.ne.s32.totalorder %s379, %s381
      %p388 = scmp.eq.s32.totalorder %s46, 1
      %p389 = por %p387, %p388
      %p390 = scmp.ne.s32.totalorder %s381, %s382
      %p391 = scmp.eq.s32.totalorder %s46, 0
      %p392 = por %p390, %p391
      %p393 = scmp.ne.s32.totalorder %s381, %s382
      %p394 = scmp.eq.s32.totalorder %s47, 1
      %p395 = por %p393, %p394
      %p397 = scmp.ne.s32.totalorder %s382, %s396
      %p398 = scmp.eq.s32.totalorder %s47, 0
      %p399 = por %p397, %p398
      %s400 = ssub.s32 %s41, %s48
      %p401 = scmp.eq.s32.totalorder %s400, 0
      %s403 = sadd.s32 %s402, 1
      %s404 = scalar_select %p401, %s402, %s403
      %p407 = pneg %p401
      %p408 = scmp.eq.s32.totalorder %s41, 1
      %p409 = por %p407, %p408
      %p410 = scmp.ne.s32.totalorder %s402, %s405
      %p411 = scmp.eq.s32.totalorder %s41, 0
      %p412 = por %p410, %p411
      %p413 = scmp.ne.s32.totalorder %s402, %s405
      %p414 = scmp.eq.s32.totalorder %s46, 1
      %p415 = por %p413, %p414
      %p416 = scmp.ne.s32.totalorder %s405, %s406
      %p417 = scmp.eq.s32.totalorder %s46, 0
      %p418 = por %p416, %p417
      %p419 = scmp.ne.s32.totalorder %s405, %s406
      %p420 = scmp.eq.s32.totalorder %s47, 1
      %p421 = por %p419, %p420
      %p423 = scmp.ne.s32.totalorder %s406, %s422
      %p424 = scmp.eq.s32.totalorder %s47, 0
      %p425 = por %p423, %p424
      %s426 = ssub.s32 %s41, %s48
      %p427 = scmp.eq.s32.totalorder %s426, 0
      %s429 = sadd.s32 %s428, 1
      %s430 = scalar_select %p427, %s428, %s429
      %p433 = pneg %p427
      %p434 = scmp.eq.s32.totalorder %s41, 1
      %p435 = por %p433, %p434
      %p436 = scmp.ne.s32.totalorder %s428, %s431
      %p437 = scmp.eq.s32.totalorder %s41, 0
      %p438 = por %p436, %p437
      %p439 = scmp.ne.s32.totalorder %s428, %s431
      %p440 = scmp.eq.s32.totalorder %s46, 1
      %p441 = por %p439, %p440
      %p442 = scmp.ne.s32.totalorder %s431, %s432
      %p443 = scmp.eq.s32.totalorder %s46, 0
      %p444 = por %p442, %p443
      %p445 = scmp.ne.s32.totalorder %s431, %s432
      %p446 = scmp.eq.s32.totalorder %s47, 1
      %p447 = por %p445, %p446
      %p449 = scmp.ne.s32.totalorder %s432, %s448
      %p450 = scmp.eq.s32.totalorder %s47, 0
      %p451 = por %p449, %p450
      %s452 = ssub.s32 %s41, %s48
      %p453 = scmp.eq.s32.totalorder %s452, 0
      %s455 = sadd.s32 %s454, 1
      %s456 = scalar_select %p453, %s454, %s455
      %p459 = pneg %p453
      %p460 = scmp.eq.s32.totalorder %s41, 1
      %p461 = por %p459, %p460
      %p462 = scmp.ne.s32.totalorder %s454, %s457
      %p463 = scmp.eq.s32.totalorder %s41, 0
      %p464 = por %p462, %p463
      %p465 = scmp.ne.s32.totalorder %s454, %s457
      %p466 = scmp.eq.s32.totalorder %s46, 1
      %p467 = por %p465, %p466
      %p468 = scmp.ne.s32.totalorder %s457, %s458
      %p469 = scmp.eq.s32.totalorder %s46, 0
      %p470 = por %p468, %p469
      %p471 = scmp.ne.s32.totalorder %s457, %s458
      %p472 = scmp.eq.s32.totalorder %s47, 1
      %p473 = por %p471, %p472
      %p475 = scmp.ne.s32.totalorder %s458, %s474
      %p476 = scmp.eq.s32.totalorder %s47, 0
      %p477 = por %p475, %p476
      %s478 = ssub.s32 %s41, %s48
      %p479 = scmp.eq.s32.totalorder %s478, 0
      %s481 = sadd.s32 %s480, 1
      %s482 = scalar_select %p479, %s480, %s481
      %p485 = pneg %p479
      %p486 = scmp.eq.s32.totalorder %s41, 1
      %p487 = por %p485, %p486
      %p488 = scmp.ne.s32.totalorder %s480, %s483
      %p489 = scmp.eq.s32.totalorder %s41, 0
      %p490 = por %p488, %p489
      %p491 = scmp.ne.s32.totalorder %s480, %s483
      %p492 = scmp.eq.s32.totalorder %s46, 1
      %p493 = por %p491, %p492
      %p494 = scmp.ne.s32.totalorder %s483, %s484
      %p495 = scmp.eq.s32.totalorder %s46, 0
      %p496 = por %p494, %p495
      %p497 = scmp.ne.s32.totalorder %s483, %s484
      %p498 = scmp.eq.s32.totalorder %s47, 1
      %p499 = por %p497, %p498
      %p501 = scmp.ne.s32.totalorder %s484, %s500
      %p502 = scmp.eq.s32.totalorder %s47, 0
      %p503 = por %p501, %p502
      %p504 = scmp.le.s32.totalorder 1, %s41
      %p505 = scmp.lt.s32.totalorder %s41, 3
      %p506 = pnand %p504, %p505
      %p507 = pneg %p506
      // Predicated region
      $region9: #{tpu_custom_call.1} parent=5 // pred_check
        _
      $region10: #{tpu_custom_call.1} parent=5 // pred_check_branch
        %509 = sbr.rel (%p506) target = $region12
      $region11: #{tpu_custom_call.1} parent=5 // pred_region
        %s510 = ssub.s32 %s41, 1
        // Predicated region
        $region13: #{tpu_custom_call.1} parent=11 // pred_check
          %p511 = pneg %p140
        $region14: #{tpu_custom_call.1} parent=11 // pred_check_branch
          %513 = sbr.rel (%p511) target = $region16
        $region15: #{tpu_custom_call.1} parent=11 // pred_region
          _
        $region16: #{tpu_custom_call.1} parent=11 // pred_fallthru
          _
        // Predicated region
        $region17: #{tpu_custom_call.1} parent=11 // pred_check
          %p514 = pneg %p161
        $region18: #{tpu_custom_call.1} parent=11 // pred_check_branch
          %516 = sbr.rel (%p514) target = $region20
        $region19: #{tpu_custom_call.1} parent=11 // pred_region
          _
        $region20: #{tpu_custom_call.1} parent=11 // pred_fallthru
          _
        // Predicated region
        $region21: #{tpu_custom_call.1} parent=11 // pred_check
          %p517 = pneg %p182
        $region22: #{tpu_custom_call.1} parent=11 // pred_check_branch
          %519 = sbr.rel (%p517) target = $region24
        $region23: #{tpu_custom_call.1} parent=11 // pred_region
          _
        $region24: #{tpu_custom_call.1} parent=11 // pred_fallthru
          _
        // Predicated region
        $region25: #{tpu_custom_call.1} parent=11 // pred_check
          %p520 = pneg %p203
        $region26: #{tpu_custom_call.1} parent=11 // pred_check_branch
          %522 = sbr.rel (%p520) target = $region28
        $region27: #{tpu_custom_call.1} parent=11 // pred_region
          _
        $region28: #{tpu_custom_call.1} parent=11 // pred_fallthru
          _
        // Predicated region
        $region29: #{tpu_custom_call.1} parent=11 // pred_check
          %p523 = pneg %p224
        $region30: #{tpu_custom_call.1} parent=11 // pred_check_branch
          %525 = sbr.rel (%p523) target = $region32
        $region31: #{tpu_custom_call.1} parent=11 // pred_region
          _
        $region32: #{tpu_custom_call.1} parent=11 // pred_fallthru
          _
        // Predicated region
        $region33: #{tpu_custom_call.1} parent=11 // pred_check
          %p526 = pneg %p245
        $region34: #{tpu_custom_call.1} parent=11 // pred_check_branch
          %528 = sbr.rel (%p526) target = $region36
        $region35: #{tpu_custom_call.1} parent=11 // pred_region
          _
        $region36: #{tpu_custom_call.1} parent=11 // pred_fallthru
          _
        // Predicated region
        $region37: #{tpu_custom_call.1} parent=11 // pred_check
          %p529 = pneg %p266
        $region38: #{tpu_custom_call.1} parent=11 // pred_check_branch
          %531 = sbr.rel (%p529) target = $region40
        $region39: #{tpu_custom_call.1} parent=11 // pred_region
          %533 = vsyncadd [#allocation10], 0
          %s534 = sshll.u32 %s9, 4
          %s535 = int_to_ptr.hbm [resolvable:$true] %s534
          %s536 = sshll.u32 [#allocation9], 4
          %s537 = int_to_ptr.vmem [resolvable:$true] %s536
          %542 = dma.hbm_to_vmem [thread:$0]  %s535, 512, %s537, [#allocation10], 128, 128, 8
        $region40: #{tpu_custom_call.1} parent=11 // pred_fallthru
          _
        // Predicated region
        $region41: #{tpu_custom_call.1} parent=11 // pred_check
          %p543 = pneg %p287
        $region42: #{tpu_custom_call.1} parent=11 // pred_check_branch
          %545 = sbr.rel (%p543) target = $region44
        $region43: #{tpu_custom_call.1} parent=11 // pred_region
          %547 = vsyncadd [#allocation10], 0
          %s548 = sshll.u32 %s10, 4
          %s549 = int_to_ptr.hbm [resolvable:$true] %s548
          %s550 = sshll.u32 [#allocation11], 4
          %s551 = int_to_ptr.vmem [resolvable:$true] %s550
          %556 = dma.hbm_to_vmem [thread:$0]  %s549, 512, %s551, [#allocation10], 128, 128, 8
        $region44: #{tpu_custom_call.1} parent=11 // pred_fallthru
          _
        // Predicated region
        $region45: #{tpu_custom_call.1} parent=11 // pred_check
          %p557 = pneg %p308
        $region46: #{tpu_custom_call.1} parent=11 // pred_check_branch
          %559 = sbr.rel (%p557) target = $region48
        $region47: #{tpu_custom_call.1} parent=11 // pred_region
          %561 = vsyncadd [#allocation13], 0
          %s562 = sshll.u32 %s11, 4
          %s563 = int_to_ptr.hbm [resolvable:$true] %s562
          %s564 = sshll.u32 [#allocation12], 4
          %s565 = int_to_ptr.vmem [resolvable:$true] %s564
          %570 = dma.hbm_to_vmem [thread:$0]  %s563, 512, %s565, [#allocation13], 128, 128, 8
        $region48: #{tpu_custom_call.1} parent=11 // pred_fallthru
          _
        // Predicated region
        $region49: #{tpu_custom_call.1} parent=11 // pred_check
          %p571 = pneg %p329
        $region50: #{tpu_custom_call.1} parent=11 // pred_check_branch
          %573 = sbr.rel (%p571) target = $region52
        $region51: #{tpu_custom_call.1} parent=11 // pred_region
          _
        $region52: #{tpu_custom_call.1} parent=11 // pred_fallthru
          _
        // Predicated region
        $region53: #{tpu_custom_call.1} parent=11 // pred_check
          %p574 = pneg %p350
        $region54: #{tpu_custom_call.1} parent=11 // pred_check_branch
          %576 = sbr.rel (%p574) target = $region56
        $region55: #{tpu_custom_call.1} parent=11 // pred_region
          %578 = vsyncadd [#allocation13], 0
          %s579 = sshll.u32 %s13, 4
          %s580 = int_to_ptr.hbm [resolvable:$true] %s579
          %s581 = sshll.u32 [#allocation14], 4
          %s582 = int_to_ptr.vmem [resolvable:$true] %s581
          %587 = dma.hbm_to_vmem [thread:$0]  %s580, 512, %s582, [#allocation13], 128, 128, 8
        $region56: #{tpu_custom_call.1} parent=11 // pred_fallthru
          _
        // Predicated region
        $region57: #{tpu_custom_call.1} parent=11 // pred_check
          %p588 = pneg %p371
        $region58: #{tpu_custom_call.1} parent=11 // pred_check_branch
          %590 = sbr.rel (%p588) target = $region60
        $region59: #{tpu_custom_call.1} parent=11 // pred_region
          %592 = vsyncadd [#allocation16], 0
          %s593 = sshll.u32 %s14, 4
          %s594 = int_to_ptr.hbm [resolvable:$true] %s593
          %s595 = sshll.u32 [#allocation15], 4
          %s596 = int_to_ptr.vmem [resolvable:$true] %s595
          %601 = dma.hbm_to_vmem [thread:$0]  %s594, 512, %s596, [#allocation16], 128, 128, 8
        $region60: #{tpu_custom_call.1} parent=11 // pred_fallthru
          _
        // Predicated region
        $region61: #{tpu_custom_call.1} parent=11 // pred_check
          %p602 = pneg %p392
        $region62: #{tpu_custom_call.1} parent=11 // pred_check_branch
          %604 = sbr.rel (%p602) target = $region64
        $region63: #{tpu_custom_call.1} parent=11 // pred_region
          _
        $region64: #{tpu_custom_call.1} parent=11 // pred_fallthru
          _
      $region12: #{tpu_custom_call.1} parent=5 // pred_fallthru
        _
      %p605 = scmp.lt.s32.totalorder %s41, 2
      // Predicated region
      $region65: #{tpu_custom_call.1} parent=5 // pred_check
        %p606 = pneg %p605
      $region66: #{tpu_custom_call.1} parent=5 // pred_check_branch
        %608 = sbr.rel (%p606) target = $region68
      $region67: #{tpu_custom_call.1} parent=5 // pred_region
        // Predicated region
        $region69: #{tpu_custom_call.1} parent=67 // pred_check
          %p609 = pneg %p61
        $region70: #{tpu_custom_call.1} parent=67 // pred_check_branch
          %611 = sbr.rel (%p609) target = $region72
        $region71: #{tpu_custom_call.1} parent=67 // pred_region
          %p612 = scmp.lt.s32.totalorder %s41, 1
          %s613 = scalar_select %p612, %s41, 1
          %s614 = smul.addr %s613, 8
          %s615 = scalar_lea.vmem %s0, %s614
        $region72: #{tpu_custom_call.1} parent=67 // pred_fallthru
          _
        // Predicated region
        $region73: #{tpu_custom_call.1} parent=67 // pred_check
          %p616 = pneg %p87
        $region74: #{tpu_custom_call.1} parent=67 // pred_check_branch
          %618 = sbr.rel (%p616) target = $region76
        $region75: #{tpu_custom_call.1} parent=67 // pred_region
          %s619 = sand.u32 %s77, 1
          %s620 = scalar_lea.sflag [#allocation7], %s619
          %s621 = sand.u32 %s77, 1
          %s622 = scalar_lea.vmem [#allocation6], %s621
          %624 = vsyncadd %s620, 0
          %s625 = scalar_lea.hbm %s1, %s41
          %s627 = sshll.u32 %s625, 4
          %s628 = int_to_ptr.hbm [resolvable:$true] %s627
          %s629 = sshll.u32 %s622, 4
          %s630 = int_to_ptr.vmem [resolvable:$true] %s629
          %632 = dma.hbm_to_vmem [thread:$0]  %s628, 16, %s630, %s620
        $region76: #{tpu_custom_call.1} parent=67 // pred_fallthru
          _
        // Predicated region
        $region77: #{tpu_custom_call.1} parent=67 // pred_check
          %p633 = pneg %p113
        $region78: #{tpu_custom_call.1} parent=67 // pred_check_branch
          %635 = sbr.rel (%p633) target = $region80
        $region79: #{tpu_custom_call.1} parent=67 // pred_region
          %p636 = scmp.lt.s32.totalorder %s41, 1
          %s637 = scalar_select %p636, %s41, 1
          %s638 = smul.addr %s637, 7
          %s639 = smul.addr %s638, 8
          %s640 = scalar_lea.vmem %s2, %s639
        $region80: #{tpu_custom_call.1} parent=67 // pred_fallthru
          _
      $region68: #{tpu_custom_call.1} parent=5 // pred_fallthru
        _
      %p641 = scmp.le.s32.totalorder 1, %s41
      %p642 = scmp.lt.s32.totalorder %s41, 3
      %p643 = pnand %p641, %p642
      %p644 = pneg %p643
      // Predicated region
      $region81: #{tpu_custom_call.1} parent=5 // pred_check
        _
      $region82: #{tpu_custom_call.1} parent=5 // pred_check_branch
        %646 = sbr.rel (%p643) target = $region84
      $region83: #{tpu_custom_call.1} parent=5 // pred_region
        %s647 = ssub.s32 %s41, 1
        %s648 = sand.u32 %s80, 1
        %s649 = scalar_lea.sflag [#allocation7], %s648
        %s650 = sand.u32 %s80, 1
        %s651 = scalar_lea.vmem [#allocation6], %s650
        // Predicated region
        $region85: #{tpu_custom_call.1} parent=83 // pred_check
          %p652 = pneg %p93
        $region86: #{tpu_custom_call.1} parent=83 // pred_check_branch
          %654 = sbr.rel (%p652) target = $region88
        $region87: #{tpu_custom_call.1} parent=83 // pred_region
          %656 = dma.done %s649, 16
        $region88: #{tpu_custom_call.1} parent=83 // pred_fallthru
          _
        // Predicated region
        $region89: #{tpu_custom_call.1} parent=83 // pred_check
          %p657 = pneg %p266
        $region90: #{tpu_custom_call.1} parent=83 // pred_check_branch
          %659 = sbr.rel (%p657) target = $region92
        $region91: #{tpu_custom_call.1} parent=83 // pred_region
          %661 = dma.done [#allocation10], 512
        $region92: #{tpu_custom_call.1} parent=83 // pred_fallthru
          _
        // Predicated region
        $region93: #{tpu_custom_call.1} parent=83 // pred_check
          %p662 = pneg %p287
        $region94: #{tpu_custom_call.1} parent=83 // pred_check_branch
          %664 = sbr.rel (%p662) target = $region96
        $region95: #{tpu_custom_call.1} parent=83 // pred_region
          %666 = dma.done [#allocation10], 512
        $region96: #{tpu_custom_call.1} parent=83 // pred_fallthru
          _
        // Predicated region
        $region97: #{tpu_custom_call.1} parent=83 // pred_check
          %p667 = pneg %p308
        $region98: #{tpu_custom_call.1} parent=83 // pred_check_branch
          %669 = sbr.rel (%p667) target = $region100
        $region99: #{tpu_custom_call.1} parent=83 // pred_region
          %671 = dma.done [#allocation13], 512
        $region100: #{tpu_custom_call.1} parent=83 // pred_fallthru
          _
        // Predicated region
        $region101: #{tpu_custom_call.1} parent=83 // pred_check
          %p672 = pneg %p350
        $region102: #{tpu_custom_call.1} parent=83 // pred_check_branch
          %674 = sbr.rel (%p672) target = $region104
        $region103: #{tpu_custom_call.1} parent=83 // pred_region
          %676 = dma.done [#allocation13], 512
        $region104: #{tpu_custom_call.1} parent=83 // pred_fallthru
          _
        // Predicated region
        $region105: #{tpu_custom_call.1} parent=83 // pred_check
          %p677 = pneg %p371
        $region106: #{tpu_custom_call.1} parent=83 // pred_check_branch
          %679 = sbr.rel (%p677) target = $region108
        $region107: #{tpu_custom_call.1} parent=83 // pred_region
          %681 = dma.done [#allocation16], 512
        $region108: #{tpu_custom_call.1} parent=83 // pred_fallthru
          _
        %p682 = scmp.lt.s32.totalorder %s46, 1
        %s683 = scalar_select %p682, %s46, 1
        %s684 = smul.addr %s683, 8
        %s685 = scalar_lea.vmem %s0, %s684
        %p686 = pneg %p67
        %p687 = pneg %p64
        %s688 = sand.u32 %s80, 1
        %s689 = scalar_lea.sflag [#allocation7], %s688
        %s690 = sand.u32 %s80, 1
        %s691 = scalar_lea.vmem [#allocation6], %s690
        %p692 = pneg %p93
        %p693 = pneg %p90
        %p694 = scmp.lt.s32.totalorder %s46, 1
        %s695 = scalar_select %p694, %s46, 1
        %s696 = smul.addr %s695, 7
        %s697 = smul.addr %s696, 8
        %s698 = scalar_lea.vmem %s2, %s697
        %p699 = pneg %p119
        %p700 = pneg %p116
        %p701 = pneg %p140
        %p702 = pneg %p137
        %p703 = pneg %p161
        %p704 = pneg %p158
        %p705 = pneg %p182
        %p706 = pneg %p179
        %p707 = pneg %p203
        %p708 = pneg %p200
        %p709 = pneg %p224
        %p710 = pneg %p221
        %p711 = pneg %p245
        %p712 = pneg %p242
        %p713 = pneg %p266
        %p714 = pneg %p263
        %p715 = pneg %p287
        %p716 = pneg %p284
        %p717 = pneg %p308
        %p718 = pneg %p305
        %p719 = pneg %p329
        %p720 = pneg %p326
        %p721 = pneg %p350
        %p722 = pneg %p347
        %p723 = pneg %p371
        %p724 = pneg %p368
        %p725 = pneg %p392
        %p726 = pneg %p389
        %p727 = pneg %p418
        %p728 = pneg %p415
        %s729 = sand.u32 %s405, 1
        %s730 = scalar_lea.sflag [#allocation8], %s729
        %s731 = sand.u32 %s405, 1
        %s732 = smul.addr %s731, 8
        %s733 = scalar_lea.vmem [#allocation17], %s732
        %p734 = pneg %p444
        %p735 = pneg %p441
        %s736 = sand.u32 %s46, 1
        %s737 = scalar_lea.sflag [#allocation19], %s736
        %s738 = sand.u32 %s431, 1
        %s739 = smul.addr %s738, 8
        %s740 = scalar_lea.vmem [#allocation18], %s739
        %p741 = pneg %p470
        %p742 = pneg %p467
        %s743 = sand.u32 %s46, 1
        %s744 = scalar_lea.sflag [#allocation19], %s743
        %s745 = sand.u32 %s457, 1
        %s746 = scalar_lea.vmem [#allocation20], %s745
        %p747 = pneg %p496
        %p748 = pneg %p493
        %s749 = sand.u32 %s483, 1
        %s750 = scalar_lea.sflag [#allocation22], %s749
        %s751 = sand.u32 %s483, 1
        %s752 = scalar_lea.vmem [#allocation21], %s751
        %p753 = scmp.lt.s32.totalorder %s46, 1
        %s754 = scalar_select %p753, %s46, 1
        %s755 = smul.addr %s754, 8
        %s756 = scalar_lea.vmem %s0, %s755
        %p757 = scmp.lt.s32.totalorder %s46, 1
        %s758 = scalar_select %p757, %s46, 1
        %s759 = smul.addr %s758, 7
        %s760 = smul.addr %s759, 8
        %s761 = scalar_lea.vmem %s2, %s760
        %v762 = vld [vmem:[%s756] sm:$0xff]
        %v763 = vld [vmem:[%s651] sm:$0x1]
        %v764 = vld [vmem:[%s761] sm:$0xff]
        %v765 = vld [vmem:[%s761 + $0x8] sm:$0xff]
        %v766 = vld [vmem:[%s761 + $0x10] sm:$0xff]
        %v767 = vld [vmem:[%s761 + $0x18] sm:$0xff]
        %v768 = vld [vmem:[%s761 + $0x20] sm:$0xff]
        %v769 = vld [vmem:[%s761 + $0x28] sm:$0xff]
        %v770 = vld [vmem:[%s761 + $0x30] sm:$0x1]
        %v771 = vld [vmem:[%s3] sm:$0xff]
        %v772 = vld [vmem:[%s3 + $0x8] sm:$0xff]
        %v773 = vld [vmem:[%s3 + $0x10] sm:$0xff]
        %v774 = vld [vmem:[%s3 + $0x18] sm:$0xff]
        %vm775 = vcmask 130048
        %v777 = vsel %vm775, %v763, 0
        %779 = vmatpush.msra.mxu0 0.0
        %780 = vmatpush.msra.mxu0 0.0
        %781 = vmatpush.msra.mxu0 0.0
        %782 = vmatpush.msra.mxu0 0.0
        %783 = vmatpush.msra.mxu0 0.0
        %784 = vmatpush.msra.mxu0 0.0
        %785 = vmatpush.msra.mxu0 0.0
        %786 = vmatpush.msra.mxu0 0.0
        %787 = vmatpush.msra.mxu0 0.0
        %788 = vmatpush.msra.mxu0 0.0
        %789 = vmatpush.msra.mxu0 0.0
        %790 = vmatpush.msra.mxu0 0.0
        %791 = vmatpush.msra.mxu0 0.0
        %792 = vmatpush.msra.mxu0 0.0
        %793 = vmatpush.msra.mxu0 %v774
        %794 = vmatpush.msra.mxu0 %v773
        %795 = vmatmul.f32.gmra.mxu0 %v777
        %v796 = vpop.f32.mrf.mxu0
        %v797 = vadd.f32 0.0, %v796
        %798 = vdwg.mxu0
        %v799 = vperm.slane %v797, 0
        %v801 = vsel %vm775, %v762, 0
        %803 = vmatpush.msra.mxu0 0.0
        %804 = vmatpush.msra.mxu0 0.0
        %805 = vmatpush.msra.mxu0 0.0
        %806 = vmatpush.msra.mxu0 0.0
        %807 = vmatpush.msra.mxu0 0.0
        %808 = vmatpush.msra.mxu0 0.0
        %809 = vmatpush.msra.mxu0 0.0
        %810 = vmatpush.msra.mxu0 0.0
        %811 = vmatpush.msra.mxu0 0.0
        %812 = vmatpush.msra.mxu0 0.0
        %813 = vmatpush.msra.mxu0 0.0
        %814 = vmatpush.msra.mxu0 0.0
        %815 = vmatpush.msra.mxu0 0.0
        %816 = vmatpush.msra.mxu0 0.0
        %817 = vmatpush.msra.mxu0 %v772
        %818 = vmatpush.msra.mxu0 %v771
        %819 = vmatmul.f32.gmra.mxu0 %v801
        %v820 = vpop.f32.mrf.mxu0
        %v821 = vadd.f32 %v799, %v820
        %822 = vdwg.mxu0
        %v823 = vld [vmem:[%s5] sm:$0x1]
        %v825 = vperm.slane %v823, 0
        %v827 = vadd.f32 %v821, %v825
        %828 = vst [vmem:[#allocation2] sm:$0xff] %v827
        %vm829 = vcmask 253952
        %830 = vst.msk [vmem:[#allocation3] sm:$0x1] %vm829, 0.0
        %v831 = vld [vmem:[#allocation2] sm:$0x1]
        %v832 = vld [vmem:[%s4] sm:$0xff]
        %v833 = vld [vmem:[%s4 + $0x8] sm:$0xff]
        %v834 = vld [vmem:[%s4 + $0x10] sm:$0xff]
        %v835 = vld [vmem:[%s4 + $0x18] sm:$0xff]
        %vm836 = vcmask 261120
        %v838 = vsel %vm836, 0.0, 0
        %840 = vmatpush.msra.mxu0 0.0
        %841 = vmatpush.msra.mxu0 0.0
        %842 = vmatpush.msra.mxu0 0.0
        %843 = vmatpush.msra.mxu0 0.0
        %844 = vmatpush.msra.mxu0 0.0
        %845 = vmatpush.msra.mxu0 0.0
        %846 = vmatpush.msra.mxu0 0.0
        %847 = vmatpush.msra.mxu0 0.0
        %848 = vmatpush.msra.mxu0 0.0
        %849 = vmatpush.msra.mxu0 0.0
        %850 = vmatpush.msra.mxu0 0.0
        %851 = vmatpush.msra.mxu0 0.0
        %852 = vmatpush.msra.mxu0 %v835
        %853 = vmatpush.msra.mxu0 %v834
        %854 = vmatpush.msra.mxu0 %v833
        %855 = vmatpush.msra.mxu0 %v832
        %856 = vmatmul.f32.gmra.mxu0 %v838
        %v857 = vpop.f32.mrf.mxu0
        %v858 = vadd.f32 0.0, %v857
        %859 = vdwg.mxu0
        %v860 = vadd.f32 %v831, %v858
        %v861 = vxor.u32 %v860, 2147483648
        %v862 = vmul.f32 %v861, 1.442695
        %v863 = vpow.pop %v862
        %v864 = vadd.f32 %v863, 1.0
        %v865 = vrcp.pop %v864
        %v866 = vmul.f32 %v864, %v865
        %v867 = vsub.f32 1.0, %v866
        %v868 = vmul.f32 %v865, %v867
        %v869 = vadd.f32 %v865, %v868
        %vm870 = vweird.f32 %v864
        %vm871 = vweird.f32 %v865
        %vm872 = vmor %vm870, %vm871
        %v873 = vsel %vm872, %v865, %v869
        %v874 = vand.u32 2147483647, %v864
        %vm875 = vcmp.eq.f32.partialorder %v874, 8.507059e+37
        %v876 = vand.u32 %v864, 2147483648
        %v877 = vor.u32 1.1754944e-38, %v876
        %v878 = vsel %vm875, %v877, %v873
        %v879 = vmul.f32 1.0, %v878
        %v880 = vtanh.pop %v860
        %v881 = vmul.f32 %v879, 0.0
        %883 = vrot.lane.b32.xlu0 %v880, 64
        %v884 = vpop.permute.xlu0 %883
        %v886 = vmul.f32 %v879, %v884
        %888 = vrot.lane.b32.xlu0 %v886, 32
        %v889 = vpop.permute.xlu0 %888
        %v891 = vadd.f32 %v881, %v889
        %v892 = vtanh.pop %v891
        %894 = vrot.lane.b32.xlu0 %v892, 64
        %v895 = vpop.permute.xlu0 %894
        %v897 = vmul.f32 %v879, %v895
        %899 = vrot.lane.b32.xlu0 %v897, 32
        %v900 = vpop.permute.xlu0 %899
        %902 = vst.msk [vmem:[#allocation4] sm:$0x1] %vm829, %v900
        %904 = vrot.lane.b32.xlu0 %v891, 96
        %v905 = vpop.permute.xlu0 %904
        %907 = vst.msk [vmem:[#allocation5] sm:$0x1] %vm829, %v905
        %908 = vst.msk [vmem:[#allocation3 + $0x1] sm:$0x1] %vm829, %v900
        %v909 = vld [vmem:[#allocation2 + $0x1] sm:$0x1]
        %v910 = vld [vmem:[%s4] sm:$0xff]
        %v911 = vld [vmem:[%s4 + $0x8] sm:$0xff]
        %v912 = vld [vmem:[%s4 + $0x10] sm:$0xff]
        %v913 = vld [vmem:[%s4 + $0x18] sm:$0xff]
        %v914 = vsel %vm836, %v900, 0
        %916 = vmatpush.msra.mxu0 0.0
        %917 = vmatpush.msra.mxu0 0.0
        %918 = vmatpush.msra.mxu0 0.0
        %919 = vmatpush.msra.mxu0 0.0
        %920 = vmatpush.msra.mxu0 0.0
        %921 = vmatpush.msra.mxu0 0.0
        %922 = vmatpush.msra.mxu0 0.0
        %923 = vmatpush.msra.mxu0 0.0
        %924 = vmatpush.msra.mxu0 0.0
        %925 = vmatpush.msra.mxu0 0.0
        %926 = vmatpush.msra.mxu0 0.0
        %927 = vmatpush.msra.mxu0 0.0
        %928 = vmatpush.msra.mxu0 %v913
        %929 = vmatpush.msra.mxu0 %v912
        %930 = vmatpush.msra.mxu0 %v911
        %931 = vmatpush.msra.mxu0 %v910
        %932 = vmatmul.f32.gmra.mxu0 %v914
        %v933 = vpop.f32.mrf.mxu0
        %v934 = vadd.f32 0.0, %v933
        %935 = vdwg.mxu0
        %v936 = vadd.f32 %v909, %v934
        %v937 = vxor.u32 %v936, 2147483648
        %v938 = vmul.f32 %v937, 1.442695
        %v939 = vpow.pop %v938
        %v940 = vadd.f32 %v939, 1.0
        %v941 = vrcp.pop %v940
        %v942 = vmul.f32 %v940, %v941
        %v943 = vsub.f32 1.0, %v942
        %v944 = vmul.f32 %v941, %v943
        %v945 = vadd.f32 %v941, %v944
        %vm946 = vweird.f32 %v940
        %vm947 = vweird.f32 %v941
        %vm948 = vmor %vm946, %vm947
        %v949 = vsel %vm948, %v941, %v945
        %v950 = vand.u32 2147483647, %v940
        %vm951 = vcmp.eq.f32.partialorder %v950, 8.507059e+37
        %v952 = vand.u32 %v940, 2147483648
        %v953 = vor.u32 1.1754944e-38, %v952
        %v954 = vsel %vm951, %v953, %v949
        %v955 = vmul.f32 1.0, %v954
        %v956 = vtanh.pop %v936
        %v957 = vmul.f32 %v955, %v891
        %959 = vrot.lane.b32.xlu0 %v956, 64
        %v960 = vpop.permute.xlu0 %959
        %v962 = vmul.f32 %v955, %v960
        %964 = vrot.lane.b32.xlu0 %v962, 32
        %v965 = vpop.permute.xlu0 %964
        %v967 = vadd.f32 %v957, %v965
        %v968 = vtanh.pop %v967
        %970 = vrot.lane.b32.xlu0 %v968, 64
        %v971 = vpop.permute.xlu0 %970
        %v973 = vmul.f32 %v955, %v971
        %975 = vrot.lane.b32.xlu0 %v973, 32
        %v976 = vpop.permute.xlu0 %975
        %978 = vst.msk [vmem:[#allocation4 + $0x1] sm:$0x1] %vm829, %v976
        %980 = vrot.lane.b32.xlu0 %v967, 96
        %v981 = vpop.permute.xlu0 %980
        %983 = vst.msk [vmem:[#allocation5 + $0x1] sm:$0x1] %vm829, %v981
        %984 = vst.msk [vmem:[#allocation3 + $0x2] sm:$0x1] %vm829, %v976
        %v985 = vld [vmem:[#allocation2 + $0x2] sm:$0x1]
        %v986 = vld [vmem:[%s4] sm:$0xff]
        %v987 = vld [vmem:[%s4 + $0x8] sm:$0xff]
        %v988 = vld [vmem:[%s4 + $0x10] sm:$0xff]
        %v989 = vld [vmem:[%s4 + $0x18] sm:$0xff]
        %v990 = vsel %vm836, %v976, 0
        %992 = vmatpush.msra.mxu0 0.0
        %993 = vmatpush.msra.mxu0 0.0
        %994 = vmatpush.msra.mxu0 0.0
        %995 = vmatpush.msra.mxu0 0.0
        %996 = vmatpush.msra.mxu0 0.0
        %997 = vmatpush.msra.mxu0 0.0
        %998 = vmatpush.msra.mxu0 0.0
        %999 = vmatpush.msra.mxu0 0.0
        %1000 = vmatpush.msra.mxu0 0.0
        %1001 = vmatpush.msra.mxu0 0.0
        %1002 = vmatpush.msra.mxu0 0.0
        %1003 = vmatpush.msra.mxu0 0.0
        %1004 = vmatpush.msra.mxu0 %v989
        %1005 = vmatpush.msra.mxu0 %v988
        %1006 = vmatpush.msra.mxu0 %v987
        %1007 = vmatpush.msra.mxu0 %v986
        %1008 = vmatmul.f32.gmra.mxu0 %v990
        %v1009 = vpop.f32.mrf.mxu0
        %v1010 = vadd.f32 0.0, %v1009
        %1011 = vdwg.mxu0
        %v1012 = vadd.f32 %v985, %v1010
        %v1013 = vxor.u32 %v1012, 2147483648
        %v1014 = vmul.f32 %v1013, 1.442695
        %v1015 = vpow.pop %v1014
        %v1016 = vadd.f32 %v1015, 1.0
        %v1017 = vrcp.pop %v1016
        %v1018 = vmul.f32 %v1016, %v1017
        %v1019 = vsub.f32 1.0, %v1018
        %v1020 = vmul.f32 %v1017, %v1019
        %v1021 = vadd.f32 %v1017, %v1020
        %vm1022 = vweird.f32 %v1016
        %vm1023 = vweird.f32 %v1017
        %vm1024 = vmor %vm1022, %vm1023
        %v1025 = vsel %vm1024, %v1017, %v1021
        %v1026 = vand.u32 2147483647, %v1016
        %vm1027 = vcmp.eq.f32.partialorder %v1026, 8.507059e+37
        %v1028 = vand.u32 %v1016, 2147483648
        %v1029 = vor.u32 1.1754944e-38, %v1028
        %v1030 = vsel %vm1027, %v1029, %v1025
        %v1031 = vmul.f32 1.0, %v1030
        %v1032 = vtanh.pop %v1012
        %v1033 = vmul.f32 %v1031, %v967
        %1035 = vrot.lane.b32.xlu0 %v1032, 64
        %v1036 = vpop.permute.xlu0 %1035
        %v1038 = vmul.f32 %v1031, %v1036
        %1040 = vrot.lane.b32.xlu0 %v1038, 32
        %v1041 = vpop.permute.xlu0 %1040
        %v1043 = vadd.f32 %v1033, %v1041
        %v1044 = vtanh.pop %v1043
        %1046 = vrot.lane.b32.xlu0 %v1044, 64
        %v1047 = vpop.permute.xlu0 %1046
        %v1049 = vmul.f32 %v1031, %v1047
        %1051 = vrot.lane.b32.xlu0 %v1049, 32
        %v1052 = vpop.permute.xlu0 %1051
        %1054 = vst.msk [vmem:[#allocation4 + $0x2] sm:$0x1] %vm829, %v1052
        %1056 = vrot.lane.b32.xlu0 %v1043, 96
        %v1057 = vpop.permute.xlu0 %1056
        %1059 = vst.msk [vmem:[#allocation5 + $0x2] sm:$0x1] %vm829, %v1057
        %1060 = vst.msk [vmem:[#allocation3 + $0x3] sm:$0x1] %vm829, %v1052
        %v1061 = vld [vmem:[#allocation2 + $0x3] sm:$0x1]
        %v1062 = vld [vmem:[%s4] sm:$0xff]
        %v1063 = vld [vmem:[%s4 + $0x8] sm:$0xff]
        %v1064 = vld [vmem:[%s4 + $0x10] sm:$0xff]
        %v1065 = vld [vmem:[%s4 + $0x18] sm:$0xff]
        %v1066 = vsel %vm836, %v1052, 0
        %1068 = vmatpush.msra.mxu0 0.0
        %1069 = vmatpush.msra.mxu0 0.0
        %1070 = vmatpush.msra.mxu0 0.0
        %1071 = vmatpush.msra.mxu0 0.0
        %1072 = vmatpush.msra.mxu0 0.0
        %1073 = vmatpush.msra.mxu0 0.0
        %1074 = vmatpush.msra.mxu0 0.0
        %1075 = vmatpush.msra.mxu0 0.0
        %1076 = vmatpush.msra.mxu0 0.0
        %1077 = vmatpush.msra.mxu0 0.0
        %1078 = vmatpush.msra.mxu0 0.0
        %1079 = vmatpush.msra.mxu0 0.0
        %1080 = vmatpush.msra.mxu0 %v1065
        %1081 = vmatpush.msra.mxu0 %v1064
        %1082 = vmatpush.msra.mxu0 %v1063
        %1083 = vmatpush.msra.mxu0 %v1062
        %1084 = vmatmul.f32.gmra.mxu0 %v1066
        %v1085 = vpop.f32.mrf.mxu0
        %v1086 = vadd.f32 0.0, %v1085
        %1087 = vdwg.mxu0
        %v1088 = vadd.f32 %v1061, %v1086
        %v1089 = vxor.u32 %v1088, 2147483648
        %v1090 = vmul.f32 %v1089, 1.442695
        %v1091 = vpow.pop %v1090
        %v1092 = vadd.f32 %v1091, 1.0
        %v1093 = vrcp.pop %v1092
        %v1094 = vmul.f32 %v1092, %v1093
        %v1095 = vsub.f32 1.0, %v1094
        %v1096 = vmul.f32 %v1093, %v1095
        %v1097 = vadd.f32 %v1093, %v1096
        %vm1098 = vweird.f32 %v1092
        %vm1099 = vweird.f32 %v1093
        %vm1100 = vmor %vm1098, %vm1099
        %v1101 = vsel %vm1100, %v1093, %v1097
        %v1102 = vand.u32 2147483647, %v1092
        %vm1103 = vcmp.eq.f32.partialorder %v1102, 8.507059e+37
        %v1104 = vand.u32 %v1092, 2147483648
        %v1105 = vor.u32 1.1754944e-38, %v1104
        %v1106 = vsel %vm1103, %v1105, %v1101
        %v1107 = vmul.f32 1.0, %v1106
        %v1108 = vtanh.pop %v1088
        %v1109 = vmul.f32 %v1107, %v1043
        %1111 = vrot.lane.b32.xlu0 %v1108, 64
        %v1112 = vpop.permute.xlu0 %1111
        %v1114 = vmul.f32 %v1107, %v1112
        %1116 = vrot.lane.b32.xlu0 %v1114, 32
        %v1117 = vpop.permute.xlu0 %1116
        %v1119 = vadd.f32 %v1109, %v1117
        %v1120 = vtanh.pop %v1119
        %1122 = vrot.lane.b32.xlu0 %v1120, 64
        %v1123 = vpop.permute.xlu0 %1122
        %v1125 = vmul.f32 %v1107, %v1123
        %1127 = vrot.lane.b32.xlu0 %v1125, 32
        %v1128 = vpop.permute.xlu0 %1127
        %1130 = vst.msk [vmem:[#allocation4 + $0x3] sm:$0x1] %vm829, %v1128
        %1132 = vrot.lane.b32.xlu0 %v1119, 96
        %v1133 = vpop.permute.xlu0 %1132
        %1135 = vst.msk [vmem:[#allocation5 + $0x3] sm:$0x1] %vm829, %v1133
        %1136 = vst.msk [vmem:[#allocation3 + $0x4] sm:$0x1] %vm829, %v1128
        %v1137 = vld [vmem:[#allocation2 + $0x4] sm:$0x1]
        %v1138 = vld [vmem:[%s4] sm:$0xff]
        %v1139 = vld [vmem:[%s4 + $0x8] sm:$0xff]
        %v1140 = vld [vmem:[%s4 + $0x10] sm:$0xff]
        %v1141 = vld [vmem:[%s4 + $0x18] sm:$0xff]
        %v1142 = vsel %vm836, %v1128, 0
        %1144 = vmatpush.msra.mxu0 0.0
        %1145 = vmatpush.msra.mxu0 0.0
        %1146 = vmatpush.msra.mxu0 0.0
        %1147 = vmatpush.msra.mxu0 0.0
        %1148 = vmatpush.msra.mxu0 0.0
        %1149 = vmatpush.msra.mxu0 0.0
        %1150 = vmatpush.msra.mxu0 0.0
        %1151 = vmatpush.msra.mxu0 0.0
        %1152 = vmatpush.msra.mxu0 0.0
        %1153 = vmatpush.msra.mxu0 0.0
        %1154 = vmatpush.msra.mxu0 0.0
        %1155 = vmatpush.msra.mxu0 0.0
        %1156 = vmatpush.msra.mxu0 %v1141
        %1157 = vmatpush.msra.mxu0 %v1140
        %1158 = vmatpush.msra.mxu0 %v1139
        %1159 = vmatpush.msra.mxu0 %v1138
        %1160 = vmatmul.f32.gmra.mxu0 %v1142
        %v1161 = vpop.f32.mrf.mxu0
        %v1162 = vadd.f32 0.0, %v1161
        %1163 = vdwg.mxu0
        %v1164 = vadd.f32 %v1137, %v1162
        %v1165 = vxor.u32 %v1164, 2147483648
        %v1166 = vmul.f32 %v1165, 1.442695
        %v1167 = vpow.pop %v1166
        %v1168 = vadd.f32 %v1167, 1.0
        %v1169 = vrcp.pop %v1168
        %v1170 = vmul.f32 %v1168, %v1169
        %v1171 = vsub.f32 1.0, %v1170
        %v1172 = vmul.f32 %v1169, %v1171
        %v1173 = vadd.f32 %v1169, %v1172
        %vm1174 = vweird.f32 %v1168
        %vm1175 = vweird.f32 %v1169
        %vm1176 = vmor %vm1174, %vm1175
        %v1177 = vsel %vm1176, %v1169, %v1173
        %v1178 = vand.u32 2147483647, %v1168
        %vm1179 = vcmp.eq.f32.partialorder %v1178, 8.507059e+37
        %v1180 = vand.u32 %v1168, 2147483648
        %v1181 = vor.u32 1.1754944e-38, %v1180
        %v1182 = vsel %vm1179, %v1181, %v1177
        %v1183 = vmul.f32 1.0, %v1182
        %v1184 = vtanh.pop %v1164
        %v1185 = vmul.f32 %v1183, %v1119
        %1187 = vrot.lane.b32.xlu0 %v1184, 64
        %v1188 = vpop.permute.xlu0 %1187
        %v1190 = vmul.f32 %v1183, %v1188
        %1192 = vrot.lane.b32.xlu0 %v1190, 32
        %v1193 = vpop.permute.xlu0 %1192
        %v1195 = vadd.f32 %v1185, %v1193
        %v1196 = vtanh.pop %v1195
        %1198 = vrot.lane.b32.xlu0 %v1196, 64
        %v1199 = vpop.permute.xlu0 %1198
        %v1201 = vmul.f32 %v1183, %v1199
        %1203 = vrot.lane.b32.xlu0 %v1201, 32
        %v1204 = vpop.permute.xlu0 %1203
        %1206 = vst.msk [vmem:[#allocation4 + $0x4] sm:$0x1] %vm829, %v1204
        %1208 = vrot.lane.b32.xlu0 %v1195, 96
        %v1209 = vpop.permute.xlu0 %1208
        %1211 = vst.msk [vmem:[#allocation5 + $0x4] sm:$0x1] %vm829, %v1209
        %1212 = vst.msk [vmem:[#allocation3 + $0x5] sm:$0x1] %vm829, %v1204
        %v1213 = vld [vmem:[#allocation2 + $0x5] sm:$0x1]
        %v1214 = vld [vmem:[%s4] sm:$0xff]
        %v1215 = vld [vmem:[%s4 + $0x8] sm:$0xff]
        %v1216 = vld [vmem:[%s4 + $0x10] sm:$0xff]
        %v1217 = vld [vmem:[%s4 + $0x18] sm:$0xff]
        %v1218 = vsel %vm836, %v1204, 0
        %1220 = vmatpush.msra.mxu0 0.0
        %1221 = vmatpush.msra.mxu0 0.0
        %1222 = vmatpush.msra.mxu0 0.0
        %1223 = vmatpush.msra.mxu0 0.0
        %1224 = vmatpush.msra.mxu0 0.0
        %1225 = vmatpush.msra.mxu0 0.0
        %1226 = vmatpush.msra.mxu0 0.0
        %1227 = vmatpush.msra.mxu0 0.0
        %1228 = vmatpush.msra.mxu0 0.0
        %1229 = vmatpush.msra.mxu0 0.0
        %1230 = vmatpush.msra.mxu0 0.0
        %1231 = vmatpush.msra.mxu0 0.0
        %1232 = vmatpush.msra.mxu0 %v1217
        %1233 = vmatpush.msra.mxu0 %v1216
        %1234 = vmatpush.msra.mxu0 %v1215
        %1235 = vmatpush.msra.mxu0 %v1214
        %1236 = vmatmul.f32.gmra.mxu0 %v1218
        %v1237 = vpop.f32.mrf.mxu0
        %v1238 = vadd.f32 0.0, %v1237
        %1239 = vdwg.mxu0
        %v1240 = vadd.f32 %v1213, %v1238
        %v1241 = vxor.u32 %v1240, 2147483648
        %v1242 = vmul.f32 %v1241, 1.442695
        %v1243 = vpow.pop %v1242
        %v1244 = vadd.f32 %v1243, 1.0
        %v1245 = vrcp.pop %v1244
        %v1246 = vmul.f32 %v1244, %v1245
        %v1247 = vsub.f32 1.0, %v1246
        %v1248 = vmul.f32 %v1245, %v1247
        %v1249 = vadd.f32 %v1245, %v1248
        %vm1250 = vweird.f32 %v1244
        %vm1251 = vweird.f32 %v1245
        %vm1252 = vmor %vm1250, %vm1251
        %v1253 = vsel %vm1252, %v1245, %v1249
        %v1254 = vand.u32 2147483647, %v1244
        %vm1255 = vcmp.eq.f32.partialorder %v1254, 8.507059e+37
        %v1256 = vand.u32 %v1244, 2147483648
        %v1257 = vor.u32 1.1754944e-38, %v1256
        %v1258 = vsel %vm1255, %v1257, %v1253
        %v1259 = vmul.f32 1.0, %v1258
        %v1260 = vtanh.pop %v1240
        %v1261 = vmul.f32 %v1259, %v1195
        %1263 = vrot.lane.b32.xlu0 %v1260, 64
        %v1264 = vpop.permute.xlu0 %1263
        %v1266 = vmul.f32 %v1259, %v1264
        %1268 = vrot.lane.b32.xlu0 %v1266, 32
        %v1269 = vpop.permute.xlu0 %1268
        %v1271 = vadd.f32 %v1261, %v1269
        %v1272 = vtanh.pop %v1271
        %1274 = vrot.lane.b32.xlu0 %v1272, 64
        %v1275 = vpop.permute.xlu0 %1274
        %v1277 = vmul.f32 %v1259, %v1275
        %1279 = vrot.lane.b32.xlu0 %v1277, 32
        %v1280 = vpop.permute.xlu0 %1279
        %1282 = vst.msk [vmem:[#allocation4 + $0x5] sm:$0x1] %vm829, %v1280
        %1284 = vrot.lane.b32.xlu0 %v1271, 96
        %v1285 = vpop.permute.xlu0 %1284
        %1287 = vst.msk [vmem:[#allocation5 + $0x5] sm:$0x1] %vm829, %v1285
        %1288 = vst.msk [vmem:[#allocation3 + $0x6] sm:$0x1] %vm829, %v1280
        %v1289 = vld [vmem:[#allocation2 + $0x6] sm:$0x1]
        %v1290 = vld [vmem:[%s4] sm:$0xff]
        %v1291 = vld [vmem:[%s4 + $0x8] sm:$0xff]
        %v1292 = vld [vmem:[%s4 + $0x10] sm:$0xff]
        %v1293 = vld [vmem:[%s4 + $0x18] sm:$0xff]
        %v1294 = vsel %vm836, %v1280, 0
        %1296 = vmatpush.msra.mxu0 0.0
        %1297 = vmatpush.msra.mxu0 0.0
        %1298 = vmatpush.msra.mxu0 0.0
        %1299 = vmatpush.msra.mxu0 0.0
        %1300 = vmatpush.msra.mxu0 0.0
        %1301 = vmatpush.msra.mxu0 0.0
        %1302 = vmatpush.msra.mxu0 0.0
        %1303 = vmatpush.msra.mxu0 0.0
        %1304 = vmatpush.msra.mxu0 0.0
        %1305 = vmatpush.msra.mxu0 0.0
        %1306 = vmatpush.msra.mxu0 0.0
        %1307 = vmatpush.msra.mxu0 0.0
        %1308 = vmatpush.msra.mxu0 %v1293
        %1309 = vmatpush.msra.mxu0 %v1292
        %1310 = vmatpush.msra.mxu0 %v1291
        %1311 = vmatpush.msra.mxu0 %v1290
        %1312 = vmatmul.f32.gmra.mxu0 %v1294
        %v1313 = vpop.f32.mrf.mxu0
        %v1314 = vadd.f32 0.0, %v1313
        %1315 = vdwg.mxu0
        %v1316 = vadd.f32 %v1289, %v1314
        %v1317 = vxor.u32 %v1316, 2147483648
        %v1318 = vmul.f32 %v1317, 1.442695
        %v1319 = vpow.pop %v1318
        %v1320 = vadd.f32 %v1319, 1.0
        %v1321 = vrcp.pop %v1320
        %v1322 = vmul.f32 %v1320, %v1321
        %v1323 = vsub.f32 1.0, %v1322
        %v1324 = vmul.f32 %v1321, %v1323
        %v1325 = vadd.f32 %v1321, %v1324
        %vm1326 = vweird.f32 %v1320
        %vm1327 = vweird.f32 %v1321
        %vm1328 = vmor %vm1326, %vm1327
        %v1329 = vsel %vm1328, %v1321, %v1325
        %v1330 = vand.u32 2147483647, %v1320
        %vm1331 = vcmp.eq.f32.partialorder %v1330, 8.507059e+37
        %v1332 = vand.u32 %v1320, 2147483648
        %v1333 = vor.u32 1.1754944e-38, %v1332
        %v1334 = vsel %vm1331, %v1333, %v1329
        %v1335 = vmul.f32 1.0, %v1334
        %v1336 = vtanh.pop %v1316
        %v1337 = vmul.f32 %v1335, %v1271
        %1339 = vrot.lane.b32.xlu0 %v1336, 64
        %v1340 = vpop.permute.xlu0 %1339
        %v1342 = vmul.f32 %v1335, %v1340
        %1344 = vrot.lane.b32.xlu0 %v1342, 32
        %v1345 = vpop.permute.xlu0 %1344
        %v1347 = vadd.f32 %v1337, %v1345
        %v1348 = vtanh.pop %v1347
        %1350 = vrot.lane.b32.xlu0 %v1348, 64
        %v1351 = vpop.permute.xlu0 %1350
        %v1353 = vmul.f32 %v1335, %v1351
        %1355 = vrot.lane.b32.xlu0 %v1353, 32
        %v1356 = vpop.permute.xlu0 %1355
        %1358 = vst.msk [vmem:[#allocation4 + $0x6] sm:$0x1] %vm829, %v1356
        %1360 = vrot.lane.b32.xlu0 %v1347, 96
        %v1361 = vpop.permute.xlu0 %1360
        %1363 = vst.msk [vmem:[#allocation5 + $0x6] sm:$0x1] %vm829, %v1361
        %1364 = vst.msk [vmem:[#allocation3 + $0x7] sm:$0x1] %vm829, %v1356
        %v1365 = vld [vmem:[#allocation2 + $0x7] sm:$0x1]
        %v1366 = vld [vmem:[%s4] sm:$0xff]
        %v1367 = vld [vmem:[%s4 + $0x8] sm:$0xff]
        %v1368 = vld [vmem:[%s4 + $0x10] sm:$0xff]
        %v1369 = vld [vmem:[%s4 + $0x18] sm:$0xff]
        %v1370 = vsel %vm836, %v1356, 0
        %1372 = vmatpush.msra.mxu0 0.0
        %1373 = vmatpush.msra.mxu0 0.0
        %1374 = vmatpush.msra.mxu0 0.0
        %1375 = vmatpush.msra.mxu0 0.0
        %1376 = vmatpush.msra.mxu0 0.0
        %1377 = vmatpush.msra.mxu0 0.0
        %1378 = vmatpush.msra.mxu0 0.0
        %1379 = vmatpush.msra.mxu0 0.0
        %1380 = vmatpush.msra.mxu0 0.0
        %1381 = vmatpush.msra.mxu0 0.0
        %1382 = vmatpush.msra.mxu0 0.0
        %1383 = vmatpush.msra.mxu0 0.0
        %1384 = vmatpush.msra.mxu0 %v1369
        %1385 = vmatpush.msra.mxu0 %v1368
        %1386 = vmatpush.msra.mxu0 %v1367
        %1387 = vmatpush.msra.mxu0 %v1366
        %1388 = vmatmul.f32.gmra.mxu0 %v1370
        %v1389 = vpop.f32.mrf.mxu0
        %v1390 = vadd.f32 0.0, %v1389
        %1391 = vdwg.mxu0
        %v1392 = vadd.f32 %v1365, %v1390
        %v1393 = vxor.u32 %v1392, 2147483648
        %v1394 = vmul.f32 %v1393, 1.442695
        %v1395 = vpow.pop %v1394
        %v1396 = vadd.f32 %v1395, 1.0
        %v1397 = vrcp.pop %v1396
        %v1398 = vmul.f32 %v1396, %v1397
        %v1399 = vsub.f32 1.0, %v1398
        %v1400 = vmul.f32 %v1397, %v1399
        %v1401 = vadd.f32 %v1397, %v1400
        %vm1402 = vweird.f32 %v1396
        %vm1403 = vweird.f32 %v1397
        %vm1404 = vmor %vm1402, %vm1403
        %v1405 = vsel %vm1404, %v1397, %v1401
        %v1406 = vand.u32 2147483647, %v1396
        %vm1407 = vcmp.eq.f32.partialorder %v1406, 8.507059e+37
        %v1408 = vand.u32 %v1396, 2147483648
        %v1409 = vor.u32 1.1754944e-38, %v1408
        %v1410 = vsel %vm1407, %v1409, %v1405
        %v1411 = vmul.f32 1.0, %v1410
        %v1412 = vtanh.pop %v1392
        %v1413 = vmul.f32 %v1411, %v1347
        %1415 = vrot.lane.b32.xlu0 %v1412, 64
        %v1416 = vpop.permute.xlu0 %1415
        %v1418 = vmul.f32 %v1411, %v1416
        %1420 = vrot.lane.b32.xlu0 %v1418, 32
        %v1421 = vpop.permute.xlu0 %1420
        %v1423 = vadd.f32 %v1413, %v1421
        %v1424 = vtanh.pop %v1423
        %1426 = vrot.lane.b32.xlu0 %v1424, 64
        %v1427 = vpop.permute.xlu0 %1426
        %v1429 = vmul.f32 %v1411, %v1427
        %1431 = vrot.lane.b32.xlu0 %v1429, 32
        %v1432 = vpop.permute.xlu0 %1431
        %1434 = vst.msk [vmem:[#allocation4 + $0x7] sm:$0x1] %vm829, %v1432
        %1436 = vrot.lane.b32.xlu0 %v1423, 96
        %v1437 = vpop.permute.xlu0 %1436
        %1439 = vst.msk [vmem:[#allocation5 + $0x7] sm:$0x1] %vm829, %v1437
        %v1440 = vld [vmem:[#allocation4] sm:$0xff]
        %v1441 = vld [vmem:[#allocation5] sm:$0xff]
        %v1442 = vld [vmem:[#allocation3] sm:$0xff]
        %v1443 = vld [vmem:[%s6] sm:$0xff]
        %v1444 = vld [vmem:[%s6 + $0x8] sm:$0xff]
        %v1445 = vld [vmem:[%s6 + $0x10] sm:$0xff]
        %v1446 = vld [vmem:[%s6 + $0x18] sm:$0xff]
        %1447 = vmatpush.msra.mxu0 0.0
        %1448 = vmatpush.msra.mxu0 0.0
        %1449 = vmatpush.msra.mxu0 0.0
        %1450 = vmatpush.msra.mxu0 0.0
        %1451 = vmatpush.msra.mxu0 0.0
        %1452 = vmatpush.msra.mxu0 0.0
        %1453 = vmatpush.msra.mxu0 0.0
        %1454 = vmatpush.msra.mxu0 0.0
        %1455 = vmatpush.msra.mxu0 0.0
        %1456 = vmatpush.msra.mxu0 0.0
        %1457 = vmatpush.msra.mxu0 0.0
        %1458 = vmatpush.msra.mxu0 0.0
        %1459 = vmatpush.msra.mxu0 0.0
        %1460 = vmatpush.msra.mxu0 0.0
        %1461 = vmatpush.msra.mxu0 %v1446
        %1462 = vmatpush.msra.mxu0 %v1445
        %1463 = vmatmul.f32.gmra.mxu0 %v777
        %v1464 = vpop.f32.mrf.mxu0
        %v1465 = vadd.f32 0.0, %v1464
        %1466 = vdwg.mxu0
        %v1467 = vperm.slane %v1465, 0
        %1468 = vmatpush.msra.mxu0 0.0
        %1469 = vmatpush.msra.mxu0 0.0
        %1470 = vmatpush.msra.mxu0 0.0
        %1471 = vmatpush.msra.mxu0 0.0
        %1472 = vmatpush.msra.mxu0 0.0
        %1473 = vmatpush.msra.mxu0 0.0
        %1474 = vmatpush.msra.mxu0 0.0
        %1475 = vmatpush.msra.mxu0 0.0
        %1476 = vmatpush.msra.mxu0 0.0
        %1477 = vmatpush.msra.mxu0 0.0
        %1478 = vmatpush.msra.mxu0 0.0
        %1479 = vmatpush.msra.mxu0 0.0
        %1480 = vmatpush.msra.mxu0 0.0
        %1481 = vmatpush.msra.mxu0 0.0
        %1482 = vmatpush.msra.mxu0 %v1444
        %1483 = vmatpush.msra.mxu0 %v1443
        %1484 = vmatmul.f32.gmra.mxu0 %v801
        %v1485 = vpop.f32.mrf.mxu0
        %v1486 = vadd.f32 %v1467, %v1485
        %1487 = vdwg.mxu0
        %v1488 = vld [vmem:[%s7] sm:$0xff]
        %v1489 = vld [vmem:[%s7 + $0x8] sm:$0xff]
        %v1490 = vld [vmem:[%s7 + $0x10] sm:$0xff]
        %v1491 = vld [vmem:[%s7 + $0x18] sm:$0xff]
        %v1493 = vsel %vm836, %v1442, 0
        %1495 = vmatpush.msra.mxu0 0.0
        %1496 = vmatpush.msra.mxu0 0.0
        %1497 = vmatpush.msra.mxu0 0.0
        %1498 = vmatpush.msra.mxu0 0.0
        %1499 = vmatpush.msra.mxu0 0.0
        %1500 = vmatpush.msra.mxu0 0.0
        %1501 = vmatpush.msra.mxu0 0.0
        %1502 = vmatpush.msra.mxu0 0.0
        %1503 = vmatpush.msra.mxu0 0.0
        %1504 = vmatpush.msra.mxu0 0.0
        %1505 = vmatpush.msra.mxu0 0.0
        %1506 = vmatpush.msra.mxu0 0.0
        %1507 = vmatpush.msra.mxu0 %v1491
        %1508 = vmatpush.msra.mxu0 %v1490
        %1509 = vmatpush.msra.mxu0 %v1489
        %1510 = vmatpush.msra.mxu0 %v1488
        %1511 = vmatmul.f32.gmra.mxu0 %v1493
        %v1512 = vpop.f32.mrf.mxu0
        %v1513 = vadd.f32 0.0, %v1512
        %1514 = vdwg.mxu0
        %v1515 = vadd.f32 %v1486, %v1513
        %v1516 = vxor.u32 %v1515, 2147483648
        %v1517 = vmul.f32 %v1516, 1.442695
        %v1518 = vpow.pop %v1517
        %v1519 = vadd.f32 %v1518, 1.0
        %v1520 = vrcp.pop %v1519
        %v1521 = vmul.f32 %v1519, %v1520
        %v1522 = vsub.f32 1.0, %v1521
        %v1523 = vmul.f32 %v1520, %v1522
        %v1524 = vadd.f32 %v1520, %v1523
        %vm1525 = vweird.f32 %v1519
        %vm1526 = vweird.f32 %v1520
        %vm1527 = vmor %vm1525, %vm1526
        %v1528 = vsel %vm1527, %v1520, %v1524
        %v1529 = vand.u32 2147483647, %v1519
        %vm1530 = vcmp.eq.f32.partialorder %v1529, 8.507059e+37
        %v1531 = vand.u32 %v1519, 2147483648
        %v1532 = vor.u32 1.1754944e-38, %v1531
        %v1533 = vsel %vm1530, %v1532, %v1528
        %v1534 = vmul.f32 1.0, %v1533
        %v1535 = vtanh.pop %v1441
        %v1536 = vmul.f32 %v1534, %v1535
        %v1537 = vld [vmem:[%s8] sm:$0xff]
        %v1538 = vld [vmem:[%s8 + $0x8] sm:$0xff]
        %v1539 = vld [vmem:[%s8 + $0x10] sm:$0xff]
        %v1540 = vld [vmem:[%s8 + $0x18] sm:$0xff]
        %v1542 = vsel %vm836, %v764, 0
        %v1545 = vsel %vm836, %v765, 0
        %v1548 = vsel %vm836, %v766, 0
        %v1551 = vsel %vm836, %v767, 0
        %v1554 = vsel %vm836, %v768, 0
        %v1557 = vsel %vm836, %v769, 0
        %v1560 = vsel %vm836, %v770, 0
        %1562 = vmatpush.msra.mxu0 0.0
        %1563 = vmatpush.msra.mxu0 0.0
        %1564 = vmatpush.msra.mxu0 0.0
        %1565 = vmatpush.msra.mxu0 0.0
        %1566 = vmatpush.msra.mxu0 0.0
        %1567 = vmatpush.msra.mxu0 0.0
        %1568 = vmatpush.msra.mxu0 0.0
        %1569 = vmatpush.msra.mxu0 0.0
        %1570 = vmatpush.msra.mxu0 0.0
        %1571 = vmatpush.msra.mxu0 0.0
        %1572 = vmatpush.msra.mxu0 0.0
        %1573 = vmatpush.msra.mxu0 0.0
        %1574 = vmatpush.msra.mxu0 %v1540
        %1575 = vmatpush.msra.mxu0 %v1539
        %1576 = vmatpush.msra.mxu0 %v1538
        %1577 = vmatpush.msra.mxu0 %v1537
        %1578 = vmatmul.f32.gmra.mxu0 %v1542
        %v1579 = vpop.f32.mrf.mxu0
        %v1580 = vadd.f32 0.0, %v1579
        %1581 = vmatmul.f32.gmra.mxu0 %v1545
        %v1582 = vpop.f32.mrf.mxu0
        %v1583 = vadd.f32 0.0, %v1582
        %1584 = vmatmul.f32.gmra.mxu0 %v1548
        %v1585 = vpop.f32.mrf.mxu0
        %v1586 = vadd.f32 0.0, %v1585
        %1587 = vmatmul.f32.gmra.mxu0 %v1551
        %v1588 = vpop.f32.mrf.mxu0
        %v1589 = vadd.f32 0.0, %v1588
        %1590 = vmatmul.f32.gmra.mxu0 %v1554
        %v1591 = vpop.f32.mrf.mxu0
        %v1592 = vadd.f32 0.0, %v1591
        %1593 = vmatmul.f32.gmra.mxu0 %v1557
        %v1594 = vpop.f32.mrf.mxu0
        %v1595 = vadd.f32 0.0, %v1594
        %1596 = vmatmul.f32.gmra.mxu0 %v1560
        %v1597 = vpop.f32.mrf.mxu0
        %v1598 = vadd.f32 0.0, %v1597
        %1599 = vdwg.mxu0
        %v1600 = vld [vmem:[#allocation9] sm:$0xff]
        %v1601 = vld [vmem:[#allocation9 + $0x8] sm:$0xff]
        %v1602 = vld [vmem:[#allocation9 + $0x10] sm:$0xff]
        %v1603 = vld [vmem:[#allocation9 + $0x18] sm:$0xff]
        %v1605 = vsel %vm836, %v1440, 0
        %1607 = vmatpush.msra.mxu0 0.0
        %1608 = vmatpush.msra.mxu0 0.0
        %1609 = vmatpush.msra.mxu0 0.0
        %1610 = vmatpush.msra.mxu0 0.0
        %1611 = vmatpush.msra.mxu0 0.0
        %1612 = vmatpush.msra.mxu0 0.0
        %1613 = vmatpush.msra.mxu0 0.0
        %1614 = vmatpush.msra.mxu0 0.0
        %1615 = vmatpush.msra.mxu0 0.0
        %1616 = vmatpush.msra.mxu0 0.0
        %1617 = vmatpush.msra.mxu0 0.0
        %1618 = vmatpush.msra.mxu0 0.0
        %1619 = vmatpush.msra.mxu0 %v1603
        %1620 = vmatpush.msra.mxu0 %v1602
        %1621 = vmatpush.msra.mxu0 %v1601
        %1622 = vmatpush.msra.mxu0 %v1600
        %1623 = vmatmul.f32.gmra.mxu0 %v1605
        %v1624 = vpop.f32.mrf.mxu0
        %v1625 = vadd.f32 0.0, %v1624
        %1626 = vdwg.mxu0
        %v1627 = vld [vmem:[%s12] sm:$0x1]
        %v1629 = vrot.slane %v1625, 1
        %v1630 = vrot.slane %v1625, 2
        %v1631 = vrot.slane %v1625, 3
        %v1632 = vrot.slane %v1625, 4
        %v1633 = vrot.slane %v1625, 5
        %v1634 = vrot.slane %v1625, 6
        %v1635 = vrot.slane %v1625, 7
        %v1636 = vperm.slane %v1625, 0
        %v1637 = vperm.slane %v1629, 0
        %v1638 = vperm.slane %v1630, 0
        %v1639 = vperm.slane %v1631, 0
        %v1640 = vperm.slane %v1632, 0
        %v1641 = vperm.slane %v1633, 0
        %v1642 = vperm.slane %v1634, 0
        %v1643 = vperm.slane %v1635, 0
        %v1652 = vadd.f32 %v1580, %v1636
        %v1653 = vadd.f32 %v1583, %v1636
        %v1654 = vadd.f32 %v1586, %v1636
        %v1655 = vadd.f32 %v1589, %v1636
        %v1656 = vadd.f32 %v1592, %v1636
        %v1657 = vadd.f32 %v1595, %v1636
        %v1658 = vadd.f32 %v1598, %v1636
        %v1659 = vadd.f32 %v1580, %v1637
        %v1660 = vadd.f32 %v1583, %v1637
        %v1661 = vadd.f32 %v1586, %v1637
        %v1662 = vadd.f32 %v1589, %v1637
        %v1663 = vadd.f32 %v1592, %v1637
        %v1664 = vadd.f32 %v1595, %v1637
        %v1665 = vadd.f32 %v1598, %v1637
        %v1666 = vadd.f32 %v1580, %v1638
        %v1667 = vadd.f32 %v1583, %v1638
        %v1668 = vadd.f32 %v1586, %v1638
        %v1669 = vadd.f32 %v1589, %v1638
        %v1670 = vadd.f32 %v1592, %v1638
        %v1671 = vadd.f32 %v1595, %v1638
        %v1672 = vadd.f32 %v1598, %v1638
        %v1673 = vadd.f32 %v1580, %v1639
        %v1674 = vadd.f32 %v1583, %v1639
        %v1675 = vadd.f32 %v1586, %v1639
        %v1676 = vadd.f32 %v1589, %v1639
        %v1677 = vadd.f32 %v1592, %v1639
        %v1678 = vadd.f32 %v1595, %v1639
        %v1679 = vadd.f32 %v1598, %v1639
        %v1680 = vadd.f32 %v1580, %v1640
        %v1681 = vadd.f32 %v1583, %v1640
        %v1682 = vadd.f32 %v1586, %v1640
        %v1683 = vadd.f32 %v1589, %v1640
        %v1684 = vadd.f32 %v1592, %v1640
        %v1685 = vadd.f32 %v1595, %v1640
        %v1686 = vadd.f32 %v1598, %v1640
        %v1687 = vadd.f32 %v1580, %v1641
        %v1688 = vadd.f32 %v1583, %v1641
        %v1689 = vadd.f32 %v1586, %v1641
        %v1690 = vadd.f32 %v1589, %v1641
        %v1691 = vadd.f32 %v1592, %v1641
        %v1692 = vadd.f32 %v1595, %v1641
        %v1693 = vadd.f32 %v1598, %v1641
        %v1694 = vadd.f32 %v1580, %v1642
        %v1695 = vadd.f32 %v1583, %v1642
        %v1696 = vadd.f32 %v1586, %v1642
        %v1697 = vadd.f32 %v1589, %v1642
        %v1698 = vadd.f32 %v1592, %v1642
        %v1699 = vadd.f32 %v1595, %v1642
        %v1700 = vadd.f32 %v1598, %v1642
        %v1701 = vadd.f32 %v1580, %v1643
        %v1702 = vadd.f32 %v1583, %v1643
        %v1703 = vadd.f32 %v1586, %v1643
        %v1704 = vadd.f32 %v1589, %v1643
        %v1705 = vadd.f32 %v1592, %v1643
        %v1706 = vadd.f32 %v1595, %v1643
        %v1707 = vadd.f32 %v1598, %v1643
        %v1708 = vtanh.pop %v1652
        %v1709 = vtanh.pop %v1653
        %v1710 = vtanh.pop %v1654
        %v1711 = vtanh.pop %v1655
        %v1712 = vtanh.pop %v1656
        %v1713 = vtanh.pop %v1657
        %v1714 = vtanh.pop %v1658
        %v1715 = vtanh.pop %v1659
        %v1716 = vtanh.pop %v1660
        %v1717 = vtanh.pop %v1661
        %v1718 = vtanh.pop %v1662
        %v1719 = vtanh.pop %v1663
        %v1720 = vtanh.pop %v1664
        %v1721 = vtanh.pop %v1665
        %v1722 = vtanh.pop %v1666
        %v1723 = vtanh.pop %v1667
        %v1724 = vtanh.pop %v1668
        %v1725 = vtanh.pop %v1669
        %v1726 = vtanh.pop %v1670
        %v1727 = vtanh.pop %v1671
        %v1728 = vtanh.pop %v1672
        %v1729 = vtanh.pop %v1673
        %v1730 = vtanh.pop %v1674
        %v1731 = vtanh.pop %v1675
        %v1732 = vtanh.pop %v1676
        %v1733 = vtanh.pop %v1677
        %v1734 = vtanh.pop %v1678
        %v1735 = vtanh.pop %v1679
        %v1736 = vtanh.pop %v1680
        %v1737 = vtanh.pop %v1681
        %v1738 = vtanh.pop %v1682
        %v1739 = vtanh.pop %v1683
        %v1740 = vtanh.pop %v1684
        %v1741 = vtanh.pop %v1685
        %v1742 = vtanh.pop %v1686
        %v1743 = vtanh.pop %v1687
        %v1744 = vtanh.pop %v1688
        %v1745 = vtanh.pop %v1689
        %v1746 = vtanh.pop %v1690
        %v1747 = vtanh.pop %v1691
        %v1748 = vtanh.pop %v1692
        %v1749 = vtanh.pop %v1693
        %v1750 = vtanh.pop %v1694
        %v1751 = vtanh.pop %v1695
        %v1752 = vtanh.pop %v1696
        %v1753 = vtanh.pop %v1697
        %v1754 = vtanh.pop %v1698
        %v1755 = vtanh.pop %v1699
        %v1756 = vtanh.pop %v1700
        %v1757 = vtanh.pop %v1701
        %v1758 = vtanh.pop %v1702
        %v1759 = vtanh.pop %v1703
        %v1760 = vtanh.pop %v1704
        %v1761 = vtanh.pop %v1705
        %v1762 = vtanh.pop %v1706
        %v1763 = vtanh.pop %v1707
        %v1765 = vperm.slane %v1627, 0
        %v1767 = vmul.f32 %v1708, %v1765
        %v1768 = vmul.f32 %v1709, %v1765
        %v1769 = vmul.f32 %v1710, %v1765
        %v1770 = vmul.f32 %v1711, %v1765
        %v1771 = vmul.f32 %v1712, %v1765
        %v1772 = vmul.f32 %v1713, %v1765
        %v1773 = vmul.f32 %v1714, %v1765
        %v1774 = vmul.f32 %v1715, %v1765
        %v1775 = vmul.f32 %v1716, %v1765
        %v1776 = vmul.f32 %v1717, %v1765
        %v1777 = vmul.f32 %v1718, %v1765
        %v1778 = vmul.f32 %v1719, %v1765
        %v1779 = vmul.f32 %v1720, %v1765
        %v1780 = vmul.f32 %v1721, %v1765
        %v1781 = vmul.f32 %v1722, %v1765
        %v1782 = vmul.f32 %v1723, %v1765
        %v1783 = vmul.f32 %v1724, %v1765
        %v1784 = vmul.f32 %v1725, %v1765
        %v1785 = vmul.f32 %v1726, %v1765
        %v1786 = vmul.f32 %v1727, %v1765
        %v1787 = vmul.f32 %v1728, %v1765
        %v1788 = vmul.f32 %v1729, %v1765
        %v1789 = vmul.f32 %v1730, %v1765
        %v1790 = vmul.f32 %v1731, %v1765
        %v1791 = vmul.f32 %v1732, %v1765
        %v1792 = vmul.f32 %v1733, %v1765
        %v1793 = vmul.f32 %v1734, %v1765
        %v1794 = vmul.f32 %v1735, %v1765
        %v1795 = vmul.f32 %v1736, %v1765
        %v1796 = vmul.f32 %v1737, %v1765
        %v1797 = vmul.f32 %v1738, %v1765
        %v1798 = vmul.f32 %v1739, %v1765
        %v1799 = vmul.f32 %v1740, %v1765
        %v1800 = vmul.f32 %v1741, %v1765
        %v1801 = vmul.f32 %v1742, %v1765
        %v1802 = vmul.f32 %v1743, %v1765
        %v1803 = vmul.f32 %v1744, %v1765
        %v1804 = vmul.f32 %v1745, %v1765
        %v1805 = vmul.f32 %v1746, %v1765
        %v1806 = vmul.f32 %v1747, %v1765
        %v1807 = vmul.f32 %v1748, %v1765
        %v1808 = vmul.f32 %v1749, %v1765
        %v1809 = vmul.f32 %v1750, %v1765
        %v1810 = vmul.f32 %v1751, %v1765
        %v1811 = vmul.f32 %v1752, %v1765
        %v1812 = vmul.f32 %v1753, %v1765
        %v1813 = vmul.f32 %v1754, %v1765
        %v1814 = vmul.f32 %v1755, %v1765
        %v1815 = vmul.f32 %v1756, %v1765
        %v1816 = vmul.f32 %v1757, %v1765
        %v1817 = vmul.f32 %v1758, %v1765
        %v1818 = vmul.f32 %v1759, %v1765
        %v1819 = vmul.f32 %v1760, %v1765
        %v1820 = vmul.f32 %v1761, %v1765
        %v1821 = vmul.f32 %v1762, %v1765
        %v1822 = vmul.f32 %v1763, %v1765
        %vm1823 = vcmask 400384
        %v1824 = vsel %vm1823, %v1767, 0.0
        %1825 = vadd.xlane.f32.xlu0 %v1824
        %v1826 = vpop.xlane.xlu0 %1825
        %v1827 = vsel %vm1823, %v1768, 0.0
        %1828 = vadd.xlane.f32.xlu0 %v1827
        %v1829 = vpop.xlane.xlu0 %1828
        %v1830 = vsel %vm1823, %v1769, 0.0
        %1831 = vadd.xlane.f32.xlu0 %v1830
        %v1832 = vpop.xlane.xlu0 %1831
        %v1833 = vsel %vm1823, %v1770, 0.0
        %1834 = vadd.xlane.f32.xlu0 %v1833
        %v1835 = vpop.xlane.xlu0 %1834
        %v1836 = vsel %vm1823, %v1771, 0.0
        %1837 = vadd.xlane.f32.xlu0 %v1836
        %v1838 = vpop.xlane.xlu0 %1837
        %v1839 = vsel %vm1823, %v1772, 0.0
        %1840 = vadd.xlane.f32.xlu0 %v1839
        %v1841 = vpop.xlane.xlu0 %1840
        %vm1842 = vcmask 393216
        %v1843 = vsel %vm1842, %v1773, 0.0
        %1844 = vadd.xlane.f32.xlu0 %v1843
        %v1845 = vpop.xlane.xlu0 %1844
        %v1846 = vsel %vm1823, %v1774, 0.0
        %1847 = vadd.xlane.f32.xlu0 %v1846
        %v1848 = vpop.xlane.xlu0 %1847
        %v1849 = vsel %vm1823, %v1775, 0.0
        %1850 = vadd.xlane.f32.xlu0 %v1849
        %v1851 = vpop.xlane.xlu0 %1850
        %v1852 = vsel %vm1823, %v1776, 0.0
        %1853 = vadd.xlane.f32.xlu0 %v1852
        %v1854 = vpop.xlane.xlu0 %1853
        %v1855 = vsel %vm1823, %v1777, 0.0
        %1856 = vadd.xlane.f32.xlu0 %v1855
        %v1857 = vpop.xlane.xlu0 %1856
        %v1858 = vsel %vm1823, %v1778, 0.0
        %1859 = vadd.xlane.f32.xlu0 %v1858
        %v1860 = vpop.xlane.xlu0 %1859
        %v1861 = vsel %vm1823, %v1779, 0.0
        %1862 = vadd.xlane.f32.xlu0 %v1861
        %v1863 = vpop.xlane.xlu0 %1862
        %v1864 = vsel %vm1842, %v1780, 0.0
        %1865 = vadd.xlane.f32.xlu0 %v1864
        %v1866 = vpop.xlane.xlu0 %1865
        %v1867 = vsel %vm1823, %v1781, 0.0
        %1868 = vadd.xlane.f32.xlu0 %v1867
        %v1869 = vpop.xlane.xlu0 %1868
        %v1870 = vsel %vm1823, %v1782, 0.0
        %1871 = vadd.xlane.f32.xlu0 %v1870
        %v1872 = vpop.xlane.xlu0 %1871
        %v1873 = vsel %vm1823, %v1783, 0.0
        %1874 = vadd.xlane.f32.xlu0 %v1873
        %v1875 = vpop.xlane.xlu0 %1874
        %v1876 = vsel %vm1823, %v1784, 0.0
        %1877 = vadd.xlane.f32.xlu0 %v1876
        %v1878 = vpop.xlane.xlu0 %1877
        %v1879 = vsel %vm1823, %v1785, 0.0
        %1880 = vadd.xlane.f32.xlu0 %v1879
        %v1881 = vpop.xlane.xlu0 %1880
        %v1882 = vsel %vm1823, %v1786, 0.0
        %1883 = vadd.xlane.f32.xlu0 %v1882
        %v1884 = vpop.xlane.xlu0 %1883
        %v1885 = vsel %vm1842, %v1787, 0.0
        %1886 = vadd.xlane.f32.xlu0 %v1885
        %v1887 = vpop.xlane.xlu0 %1886
        %v1888 = vsel %vm1823, %v1788, 0.0
        %1889 = vadd.xlane.f32.xlu0 %v1888
        %v1890 = vpop.xlane.xlu0 %1889
        %v1891 = vsel %vm1823, %v1789, 0.0
        %1892 = vadd.xlane.f32.xlu0 %v1891
        %v1893 = vpop.xlane.xlu0 %1892
        %v1894 = vsel %vm1823, %v1790, 0.0
        %1895 = vadd.xlane.f32.xlu0 %v1894
        %v1896 = vpop.xlane.xlu0 %1895
        %v1897 = vsel %vm1823, %v1791, 0.0
        %1898 = vadd.xlane.f32.xlu0 %v1897
        %v1899 = vpop.xlane.xlu0 %1898
        %v1900 = vsel %vm1823, %v1792, 0.0
        %1901 = vadd.xlane.f32.xlu0 %v1900
        %v1902 = vpop.xlane.xlu0 %1901
        %v1903 = vsel %vm1823, %v1793, 0.0
        %1904 = vadd.xlane.f32.xlu0 %v1903
        %v1905 = vpop.xlane.xlu0 %1904
        %v1906 = vsel %vm1842, %v1794, 0.0
        %1907 = vadd.xlane.f32.xlu0 %v1906
        %v1908 = vpop.xlane.xlu0 %1907
        %v1909 = vsel %vm1823, %v1795, 0.0
        %1910 = vadd.xlane.f32.xlu0 %v1909
        %v1911 = vpop.xlane.xlu0 %1910
        %v1912 = vsel %vm1823, %v1796, 0.0
        %1913 = vadd.xlane.f32.xlu0 %v1912
        %v1914 = vpop.xlane.xlu0 %1913
        %v1915 = vsel %vm1823, %v1797, 0.0
        %1916 = vadd.xlane.f32.xlu0 %v1915
        %v1917 = vpop.xlane.xlu0 %1916
        %v1918 = vsel %vm1823, %v1798, 0.0
        %1919 = vadd.xlane.f32.xlu0 %v1918
        %v1920 = vpop.xlane.xlu0 %1919
        %v1921 = vsel %vm1823, %v1799, 0.0
        %1922 = vadd.xlane.f32.xlu0 %v1921
        %v1923 = vpop.xlane.xlu0 %1922
        %v1924 = vsel %vm1823, %v1800, 0.0
        %1925 = vadd.xlane.f32.xlu0 %v1924
        %v1926 = vpop.xlane.xlu0 %1925
        %v1927 = vsel %vm1842, %v1801, 0.0
        %1928 = vadd.xlane.f32.xlu0 %v1927
        %v1929 = vpop.xlane.xlu0 %1928
        %v1930 = vsel %vm1823, %v1802, 0.0
        %1931 = vadd.xlane.f32.xlu0 %v1930
        %v1932 = vpop.xlane.xlu0 %1931
        %v1933 = vsel %vm1823, %v1803, 0.0
        %1934 = vadd.xlane.f32.xlu0 %v1933
        %v1935 = vpop.xlane.xlu0 %1934
        %v1936 = vsel %vm1823, %v1804, 0.0
        %1937 = vadd.xlane.f32.xlu0 %v1936
        %v1938 = vpop.xlane.xlu0 %1937
        %v1939 = vsel %vm1823, %v1805, 0.0
        %1940 = vadd.xlane.f32.xlu0 %v1939
        %v1941 = vpop.xlane.xlu0 %1940
        %v1942 = vsel %vm1823, %v1806, 0.0
        %1943 = vadd.xlane.f32.xlu0 %v1942
        %v1944 = vpop.xlane.xlu0 %1943
        %v1945 = vsel %vm1823, %v1807, 0.0
        %1946 = vadd.xlane.f32.xlu0 %v1945
        %v1947 = vpop.xlane.xlu0 %1946
        %v1948 = vsel %vm1842, %v1808, 0.0
        %1949 = vadd.xlane.f32.xlu0 %v1948
        %v1950 = vpop.xlane.xlu0 %1949
        %v1951 = vsel %vm1823, %v1809, 0.0
        %1952 = vadd.xlane.f32.xlu0 %v1951
        %v1953 = vpop.xlane.xlu0 %1952
        %v1954 = vsel %vm1823, %v1810, 0.0
        %1955 = vadd.xlane.f32.xlu0 %v1954
        %v1956 = vpop.xlane.xlu0 %1955
        %v1957 = vsel %vm1823, %v1811, 0.0
        %1958 = vadd.xlane.f32.xlu0 %v1957
        %v1959 = vpop.xlane.xlu0 %1958
        %v1960 = vsel %vm1823, %v1812, 0.0
        %1961 = vadd.xlane.f32.xlu0 %v1960
        %v1962 = vpop.xlane.xlu0 %1961
        %v1963 = vsel %vm1823, %v1813, 0.0
        %1964 = vadd.xlane.f32.xlu0 %v1963
        %v1965 = vpop.xlane.xlu0 %1964
        %v1966 = vsel %vm1823, %v1814, 0.0
        %1967 = vadd.xlane.f32.xlu0 %v1966
        %v1968 = vpop.xlane.xlu0 %1967
        %v1969 = vsel %vm1842, %v1815, 0.0
        %1970 = vadd.xlane.f32.xlu0 %v1969
        %v1971 = vpop.xlane.xlu0 %1970
        %v1972 = vsel %vm1823, %v1816, 0.0
        %1973 = vadd.xlane.f32.xlu0 %v1972
        %v1974 = vpop.xlane.xlu0 %1973
        %v1975 = vsel %vm1823, %v1817, 0.0
        %1976 = vadd.xlane.f32.xlu0 %v1975
        %v1977 = vpop.xlane.xlu0 %1976
        %v1978 = vsel %vm1823, %v1818, 0.0
        %1979 = vadd.xlane.f32.xlu0 %v1978
        %v1980 = vpop.xlane.xlu0 %1979
        %v1981 = vsel %vm1823, %v1819, 0.0
        %1982 = vadd.xlane.f32.xlu0 %v1981
        %v1983 = vpop.xlane.xlu0 %1982
        %v1984 = vsel %vm1823, %v1820, 0.0
        %1985 = vadd.xlane.f32.xlu0 %v1984
        %v1986 = vpop.xlane.xlu0 %1985
        %v1987 = vsel %vm1823, %v1821, 0.0
        %1988 = vadd.xlane.f32.xlu0 %v1987
        %v1989 = vpop.xlane.xlu0 %1988
        %v1990 = vsel %vm1842, %v1822, 0.0
        %1991 = vadd.xlane.f32.xlu0 %v1990
        %v1992 = vpop.xlane.xlu0 %1991
        %v1993 = vld [vmem:[#allocation12] sm:$0xff]
        %v1994 = vld [vmem:[#allocation12 + $0x8] sm:$0xff]
        %v1995 = vld [vmem:[#allocation12 + $0x10] sm:$0xff]
        %v1996 = vld [vmem:[#allocation12 + $0x18] sm:$0xff]
        %v1997 = vld [vmem:[#allocation11] sm:$0xff]
        %v1998 = vld [vmem:[#allocation11 + $0x8] sm:$0xff]
        %v1999 = vld [vmem:[#allocation11 + $0x10] sm:$0xff]
        %v2000 = vld [vmem:[#allocation11 + $0x18] sm:$0xff]
        %2001 = vmatpush.msra.mxu0 0.0
        %2002 = vmatpush.msra.mxu0 0.0
        %2003 = vmatpush.msra.mxu0 0.0
        %2004 = vmatpush.msra.mxu0 0.0
        %2005 = vmatpush.msra.mxu0 0.0
        %2006 = vmatpush.msra.mxu0 0.0
        %2007 = vmatpush.msra.mxu0 0.0
        %2008 = vmatpush.msra.mxu0 0.0
        %2009 = vmatpush.msra.mxu0 0.0
        %2010 = vmatpush.msra.mxu0 0.0
        %2011 = vmatpush.msra.mxu0 0.0
        %2012 = vmatpush.msra.mxu0 0.0
        %2013 = vmatpush.msra.mxu0 %v2000
        %2014 = vmatpush.msra.mxu0 %v1999
        %2015 = vmatpush.msra.mxu0 %v1998
        %2016 = vmatpush.msra.mxu0 %v1997
        %2017 = vmatmul.f32.gmra.mxu0 %v1605
        %v2018 = vpop.f32.mrf.mxu0
        %v2019 = vadd.f32 0.0, %v2018
        %2020 = vdwg.mxu0
        %v2022 = vsel %vm836, %v1536, 0
        %2024 = vmatpush.msra.mxu0 0.0
        %2025 = vmatpush.msra.mxu0 0.0
        %2026 = vmatpush.msra.mxu0 0.0
        %2027 = vmatpush.msra.mxu0 0.0
        %2028 = vmatpush.msra.mxu0 0.0
        %2029 = vmatpush.msra.mxu0 0.0
        %2030 = vmatpush.msra.mxu0 0.0
        %2031 = vmatpush.msra.mxu0 0.0
        %2032 = vmatpush.msra.mxu0 0.0
        %2033 = vmatpush.msra.mxu0 0.0
        %2034 = vmatpush.msra.mxu0 0.0
        %2035 = vmatpush.msra.mxu0 0.0
        %2036 = vmatpush.msra.mxu0 %v1996
        %2037 = vmatpush.msra.mxu0 %v1995
        %2038 = vmatpush.msra.mxu0 %v1994
        %2039 = vmatpush.msra.mxu0 %v1993
        %2040 = vmatmul.f32.gmra.mxu0 %v2022
        %v2041 = vpop.f32.mrf.mxu0
        %v2042 = vadd.f32 %v2019, %v2041
        %2043 = vdwg.mxu0
        %v2044 = vtanh.pop %v2042
        %v2045 = vmul.f32 %v2044, %v1765
        %v2046 = vsel %vm1823, %v2045, 0.0
        %2047 = vadd.xlane.f32.xlu0 %v2046
        %v2048 = vpop.xlane.xlu0 %2047
        %v2105 = vlaneseq
        %v2106 = vand.u32 %v2105, 127
        %v2107 = vperm.slane %v1826, %v2106
        %v2108 = vadd.s32 %v2106, 4294967288
        %v2109 = vperm.slane %v1829, %v2108
        %vm2110 = vcmask 130112
        %v2111 = vsel %vm2110, %v2109, %v2107
        %v2112 = vadd.s32 %v2106, 4294967280
        %v2113 = vperm.slane %v1832, %v2112
        %vm2114 = vcmask 195712
        %v2115 = vsel %vm2114, %v2113, %v2111
        %v2116 = vadd.s32 %v2106, 4294967272
        %v2117 = vperm.slane %v1835, %v2116
        %vm2118 = vcmask 261312
        %v2119 = vsel %vm2118, %v2117, %v2115
        %v2120 = vadd.s32 %v2106, 4294967264
        %v2121 = vperm.slane %v1838, %v2120
        %vm2122 = vcmask 326912
        %v2123 = vsel %vm2122, %v2121, %v2119
        %v2124 = vadd.s32 %v2106, 4294967256
        %v2125 = vperm.slane %v1841, %v2124
        %vm2126 = vcmask 392512
        %v2127 = vsel %vm2126, %v2125, %v2123
        %v2128 = vadd.s32 %v2106, 4294967248
        %v2129 = vperm.slane %v1845, %v2128
        %vm2130 = vcmask 458112
        %v2131 = vsel %vm2130, %v2129, %v2127
        %v2132 = vperm.slane %v1848, %v2106
        %v2133 = vperm.slane %v1851, %v2108
        %v2134 = vsel %vm2110, %v2133, %v2132
        %v2135 = vperm.slane %v1854, %v2112
        %v2136 = vsel %vm2114, %v2135, %v2134
        %v2137 = vperm.slane %v1857, %v2116
        %v2138 = vsel %vm2118, %v2137, %v2136
        %v2139 = vperm.slane %v1860, %v2120
        %v2140 = vsel %vm2122, %v2139, %v2138
        %v2141 = vperm.slane %v1863, %v2124
        %v2142 = vsel %vm2126, %v2141, %v2140
        %v2143 = vperm.slane %v1866, %v2128
        %v2144 = vsel %vm2130, %v2143, %v2142
        %v2145 = vperm.slane %v1869, %v2106
        %v2146 = vperm.slane %v1872, %v2108
        %v2147 = vsel %vm2110, %v2146, %v2145
        %v2148 = vperm.slane %v1875, %v2112
        %v2149 = vsel %vm2114, %v2148, %v2147
        %v2150 = vperm.slane %v1878, %v2116
        %v2151 = vsel %vm2118, %v2150, %v2149
        %v2152 = vperm.slane %v1881, %v2120
        %v2153 = vsel %vm2122, %v2152, %v2151
        %v2154 = vperm.slane %v1884, %v2124
        %v2155 = vsel %vm2126, %v2154, %v2153
        %v2156 = vperm.slane %v1887, %v2128
        %v2157 = vsel %vm2130, %v2156, %v2155
        %v2158 = vperm.slane %v1890, %v2106
        %v2159 = vperm.slane %v1893, %v2108
        %v2160 = vsel %vm2110, %v2159, %v2158
        %v2161 = vperm.slane %v1896, %v2112
        %v2162 = vsel %vm2114, %v2161, %v2160
        %v2163 = vperm.slane %v1899, %v2116
        %v2164 = vsel %vm2118, %v2163, %v2162
        %v2165 = vperm.slane %v1902, %v2120
        %v2166 = vsel %vm2122, %v2165, %v2164
        %v2167 = vperm.slane %v1905, %v2124
        %v2168 = vsel %vm2126, %v2167, %v2166
        %v2169 = vperm.slane %v1908, %v2128
        %v2170 = vsel %vm2130, %v2169, %v2168
        %v2171 = vperm.slane %v1911, %v2106
        %v2172 = vperm.slane %v1914, %v2108
        %v2173 = vsel %vm2110, %v2172, %v2171
        %v2174 = vperm.slane %v1917, %v2112
        %v2175 = vsel %vm2114, %v2174, %v2173
        %v2176 = vperm.slane %v1920, %v2116
        %v2177 = vsel %vm2118, %v2176, %v2175
        %v2178 = vperm.slane %v1923, %v2120
        %v2179 = vsel %vm2122, %v2178, %v2177
        %v2180 = vperm.slane %v1926, %v2124
        %v2181 = vsel %vm2126, %v2180, %v2179
        %v2182 = vperm.slane %v1929, %v2128
        %v2183 = vsel %vm2130, %v2182, %v2181
        %v2184 = vperm.slane %v1932, %v2106
        %v2185 = vperm.slane %v1935, %v2108
        %v2186 = vsel %vm2110, %v2185, %v2184
        %v2187 = vperm.slane %v1938, %v2112
        %v2188 = vsel %vm2114, %v2187, %v2186
        %v2189 = vperm.slane %v1941, %v2116
        %v2190 = vsel %vm2118, %v2189, %v2188
        %v2191 = vperm.slane %v1944, %v2120
        %v2192 = vsel %vm2122, %v2191, %v2190
        %v2193 = vperm.slane %v1947, %v2124
        %v2194 = vsel %vm2126, %v2193, %v2192
        %v2195 = vperm.slane %v1950, %v2128
        %v2196 = vsel %vm2130, %v2195, %v2194
        %v2197 = vperm.slane %v1953, %v2106
        %v2198 = vperm.slane %v1956, %v2108
        %v2199 = vsel %vm2110, %v2198, %v2197
        %v2200 = vperm.slane %v1959, %v2112
        %v2201 = vsel %vm2114, %v2200, %v2199
        %v2202 = vperm.slane %v1962, %v2116
        %v2203 = vsel %vm2118, %v2202, %v2201
        %v2204 = vperm.slane %v1965, %v2120
        %v2205 = vsel %vm2122, %v2204, %v2203
        %v2206 = vperm.slane %v1968, %v2124
        %v2207 = vsel %vm2126, %v2206, %v2205
        %v2208 = vperm.slane %v1971, %v2128
        %v2209 = vsel %vm2130, %v2208, %v2207
        %v2210 = vperm.slane %v1974, %v2106
        %v2211 = vperm.slane %v1977, %v2108
        %v2212 = vsel %vm2110, %v2211, %v2210
        %v2213 = vperm.slane %v1980, %v2112
        %v2214 = vsel %vm2114, %v2213, %v2212
        %v2215 = vperm.slane %v1983, %v2116
        %v2216 = vsel %vm2118, %v2215, %v2214
        %v2217 = vperm.slane %v1986, %v2120
        %v2218 = vsel %vm2122, %v2217, %v2216
        %v2219 = vperm.slane %v1989, %v2124
        %v2220 = vsel %vm2126, %v2219, %v2218
        %v2221 = vperm.slane %v1992, %v2128
        %v2222 = vsel %vm2130, %v2221, %v2220
        %vm2223 = vcmask 1041409
        %v2224 = vsel %vm2223, %v2144, %v2131
        %vm2225 = vcmask 1042434
        %v2226 = vsel %vm2225, %v2157, %v2224
        %vm2227 = vcmask 1043459
        %v2228 = vsel %vm2227, %v2170, %v2226
        %vm2229 = vcmask 1044484
        %v2230 = vsel %vm2229, %v2183, %v2228
        %vm2231 = vcmask 1045509
        %v2232 = vsel %vm2231, %v2196, %v2230
        %vm2233 = vcmask 1046534
        %v2234 = vsel %vm2233, %v2209, %v2232
        %vm2235 = vcmask 1047559
        %v2236 = vsel %vm2235, %v2222, %v2234
        %v2238 = vsel %vm1823, %v2236, -inf
        %2239 = vmax.xlane.f32.xlu0 %v2238
        %v2240 = vpop.xlane.xlu0 %2239
        %v2241 = vmax.f32 %v2240, %v2048
        %v2243 = vperm.slane %v2241, 0
        %v2244 = vperm.slane %v2241, 1
        %v2245 = vperm.slane %v2241, 2
        %v2246 = vperm.slane %v2241, 3
        %v2247 = vperm.slane %v2241, 4
        %v2248 = vperm.slane %v2241, 5
        %v2249 = vperm.slane %v2241, 6
        %v2250 = vperm.slane %v2241, 7
        %v2259 = vsub.f32 %v1826, %v2243
        %v2260 = vsub.f32 %v1829, %v2243
        %v2261 = vsub.f32 %v1832, %v2243
        %v2262 = vsub.f32 %v1835, %v2243
        %v2263 = vsub.f32 %v1838, %v2243
        %v2264 = vsub.f32 %v1841, %v2243
        %v2265 = vsub.f32 %v1845, %v2243
        %v2266 = vsub.f32 %v1848, %v2244
        %v2267 = vsub.f32 %v1851, %v2244
        %v2268 = vsub.f32 %v1854, %v2244
        %v2269 = vsub.f32 %v1857, %v2244
        %v2270 = vsub.f32 %v1860, %v2244
        %v2271 = vsub.f32 %v1863, %v2244
        %v2272 = vsub.f32 %v1866, %v2244
        %v2273 = vsub.f32 %v1869, %v2245
        %v2274 = vsub.f32 %v1872, %v2245
        %v2275 = vsub.f32 %v1875, %v2245
        %v2276 = vsub.f32 %v1878, %v2245
        %v2277 = vsub.f32 %v1881, %v2245
        %v2278 = vsub.f32 %v1884, %v2245
        %v2279 = vsub.f32 %v1887, %v2245
        %v2280 = vsub.f32 %v1890, %v2246
        %v2281 = vsub.f32 %v1893, %v2246
        %v2282 = vsub.f32 %v1896, %v2246
        %v2283 = vsub.f32 %v1899, %v2246
        %v2284 = vsub.f32 %v1902, %v2246
        %v2285 = vsub.f32 %v1905, %v2246
        %v2286 = vsub.f32 %v1908, %v2246
        %v2287 = vsub.f32 %v1911, %v2247
        %v2288 = vsub.f32 %v1914, %v2247
        %v2289 = vsub.f32 %v1917, %v2247
        %v2290 = vsub.f32 %v1920, %v2247
        %v2291 = vsub.f32 %v1923, %v2247
        %v2292 = vsub.f32 %v1926, %v2247
        %v2293 = vsub.f32 %v1929, %v2247
        %v2294 = vsub.f32 %v1932, %v2248
        %v2295 = vsub.f32 %v1935, %v2248
        %v2296 = vsub.f32 %v1938, %v2248
        %v2297 = vsub.f32 %v1941, %v2248
        %v2298 = vsub.f32 %v1944, %v2248
        %v2299 = vsub.f32 %v1947, %v2248
        %v2300 = vsub.f32 %v1950, %v2248
        %v2301 = vsub.f32 %v1953, %v2249
        %v2302 = vsub.f32 %v1956, %v2249
        %v2303 = vsub.f32 %v1959, %v2249
        %v2304 = vsub.f32 %v1962, %v2249
        %v2305 = vsub.f32 %v1965, %v2249
        %v2306 = vsub.f32 %v1968, %v2249
        %v2307 = vsub.f32 %v1971, %v2249
        %v2308 = vsub.f32 %v1974, %v2250
        %v2309 = vsub.f32 %v1977, %v2250
        %v2310 = vsub.f32 %v1980, %v2250
        %v2311 = vsub.f32 %v1983, %v2250
        %v2312 = vsub.f32 %v1986, %v2250
        %v2313 = vsub.f32 %v1989, %v2250
        %v2314 = vsub.f32 %v1992, %v2250
        %v2315 = vmul.f32 %v2259, 1.442695
        %v2316 = vpow.pop %v2315
        %v2317 = vmul.f32 %v2260, 1.442695
        %v2318 = vpow.pop %v2317
        %v2319 = vmul.f32 %v2261, 1.442695
        %v2320 = vpow.pop %v2319
        %v2321 = vmul.f32 %v2262, 1.442695
        %v2322 = vpow.pop %v2321
        %v2323 = vmul.f32 %v2263, 1.442695
        %v2324 = vpow.pop %v2323
        %v2325 = vmul.f32 %v2264, 1.442695
        %v2326 = vpow.pop %v2325
        %v2327 = vmul.f32 %v2265, 1.442695
        %v2328 = vpow.pop %v2327
        %v2329 = vmul.f32 %v2266, 1.442695
        %v2330 = vpow.pop %v2329
        %v2331 = vmul.f32 %v2267, 1.442695
        %v2332 = vpow.pop %v2331
        %v2333 = vmul.f32 %v2268, 1.442695
        %v2334 = vpow.pop %v2333
        %v2335 = vmul.f32 %v2269, 1.442695
        %v2336 = vpow.pop %v2335
        %v2337 = vmul.f32 %v2270, 1.442695
        %v2338 = vpow.pop %v2337
        %v2339 = vmul.f32 %v2271, 1.442695
        %v2340 = vpow.pop %v2339
        %v2341 = vmul.f32 %v2272, 1.442695
        %v2342 = vpow.pop %v2341
        %v2343 = vmul.f32 %v2273, 1.442695
        %v2344 = vpow.pop %v2343
        %v2345 = vmul.f32 %v2274, 1.442695
        %v2346 = vpow.pop %v2345
        %v2347 = vmul.f32 %v2275, 1.442695
        %v2348 = vpow.pop %v2347
        %v2349 = vmul.f32 %v2276, 1.442695
        %v2350 = vpow.pop %v2349
        %v2351 = vmul.f32 %v2277, 1.442695
        %v2352 = vpow.pop %v2351
        %v2353 = vmul.f32 %v2278, 1.442695
        %v2354 = vpow.pop %v2353
        %v2355 = vmul.f32 %v2279, 1.442695
        %v2356 = vpow.pop %v2355
        %v2357 = vmul.f32 %v2280, 1.442695
        %v2358 = vpow.pop %v2357
        %v2359 = vmul.f32 %v2281, 1.442695
        %v2360 = vpow.pop %v2359
        %v2361 = vmul.f32 %v2282, 1.442695
        %v2362 = vpow.pop %v2361
        %v2363 = vmul.f32 %v2283, 1.442695
        %v2364 = vpow.pop %v2363
        %v2365 = vmul.f32 %v2284, 1.442695
        %v2366 = vpow.pop %v2365
        %v2367 = vmul.f32 %v2285, 1.442695
        %v2368 = vpow.pop %v2367
        %v2369 = vmul.f32 %v2286, 1.442695
        %v2370 = vpow.pop %v2369
        %v2371 = vmul.f32 %v2287, 1.442695
        %v2372 = vpow.pop %v2371
        %v2373 = vmul.f32 %v2288, 1.442695
        %v2374 = vpow.pop %v2373
        %v2375 = vmul.f32 %v2289, 1.442695
        %v2376 = vpow.pop %v2375
        %v2377 = vmul.f32 %v2290, 1.442695
        %v2378 = vpow.pop %v2377
        %v2379 = vmul.f32 %v2291, 1.442695
        %v2380 = vpow.pop %v2379
        %v2381 = vmul.f32 %v2292, 1.442695
        %v2382 = vpow.pop %v2381
        %v2383 = vmul.f32 %v2293, 1.442695
        %v2384 = vpow.pop %v2383
        %v2385 = vmul.f32 %v2294, 1.442695
        %v2386 = vpow.pop %v2385
        %v2387 = vmul.f32 %v2295, 1.442695
        %v2388 = vpow.pop %v2387
        %v2389 = vmul.f32 %v2296, 1.442695
        %v2390 = vpow.pop %v2389
        %v2391 = vmul.f32 %v2297, 1.442695
        %v2392 = vpow.pop %v2391
        %v2393 = vmul.f32 %v2298, 1.442695
        %v2394 = vpow.pop %v2393
        %v2395 = vmul.f32 %v2299, 1.442695
        %v2396 = vpow.pop %v2395
        %v2397 = vmul.f32 %v2300, 1.442695
        %v2398 = vpow.pop %v2397
        %v2399 = vmul.f32 %v2301, 1.442695
        %v2400 = vpow.pop %v2399
        %v2401 = vmul.f32 %v2302, 1.442695
        %v2402 = vpow.pop %v2401
        %v2403 = vmul.f32 %v2303, 1.442695
        %v2404 = vpow.pop %v2403
        %v2405 = vmul.f32 %v2304, 1.442695
        %v2406 = vpow.pop %v2405
        %v2407 = vmul.f32 %v2305, 1.442695
        %v2408 = vpow.pop %v2407
        %v2409 = vmul.f32 %v2306, 1.442695
        %v2410 = vpow.pop %v2409
        %v2411 = vmul.f32 %v2307, 1.442695
        %v2412 = vpow.pop %v2411
        %v2413 = vmul.f32 %v2308, 1.442695
        %v2414 = vpow.pop %v2413
        %v2415 = vmul.f32 %v2309, 1.442695
        %v2416 = vpow.pop %v2415
        %v2417 = vmul.f32 %v2310, 1.442695
        %v2418 = vpow.pop %v2417
        %v2419 = vmul.f32 %v2311, 1.442695
        %v2420 = vpow.pop %v2419
        %v2421 = vmul.f32 %v2312, 1.442695
        %v2422 = vpow.pop %v2421
        %v2423 = vmul.f32 %v2313, 1.442695
        %v2424 = vpow.pop %v2423
        %v2425 = vmul.f32 %v2314, 1.442695
        %v2426 = vpow.pop %v2425
        %v2427 = vsub.f32 %v2048, %v2241
        %v2428 = vmul.f32 %v2427, 1.442695
        %v2429 = vpow.pop %v2428
        %2486 = vset.pattern.permute.xlu0 0
        %2487 = vperm.xlu0 %2486, %v2316
        %v2488 = vpop.permute.xlu0 %2487
        %2489 = vset.pattern.permute.xlu0 0
        %2490 = vperm.xlu0 %2489, %v2318
        %v2491 = vpop.permute.xlu0 %2490
        %2492 = vset.pattern.permute.xlu0 0
        %2493 = vperm.xlu0 %2492, %v2320
        %v2494 = vpop.permute.xlu0 %2493
        %2495 = vset.pattern.permute.xlu0 0
        %2496 = vperm.xlu0 %2495, %v2322
        %v2497 = vpop.permute.xlu0 %2496
        %2498 = vset.pattern.permute.xlu0 0
        %2499 = vperm.xlu0 %2498, %v2324
        %v2500 = vpop.permute.xlu0 %2499
        %2501 = vset.pattern.permute.xlu0 0
        %2502 = vperm.xlu0 %2501, %v2326
        %v2503 = vpop.permute.xlu0 %2502
        %2504 = vset.pattern.permute.xlu0 0
        %2505 = vperm.xlu0 %2504, %v2328
        %v2506 = vpop.permute.xlu0 %2505
        %2507 = vset.pattern.permute.xlu0 0
        %2508 = vperm.xlu0 %2507, %v2330
        %v2509 = vpop.permute.xlu0 %2508
        %2510 = vset.pattern.permute.xlu0 0
        %2511 = vperm.xlu0 %2510, %v2332
        %v2512 = vpop.permute.xlu0 %2511
        %2513 = vset.pattern.permute.xlu0 0
        %2514 = vperm.xlu0 %2513, %v2334
        %v2515 = vpop.permute.xlu0 %2514
        %2516 = vset.pattern.permute.xlu0 0
        %2517 = vperm.xlu0 %2516, %v2336
        %v2518 = vpop.permute.xlu0 %2517
        %2519 = vset.pattern.permute.xlu0 0
        %2520 = vperm.xlu0 %2519, %v2338
        %v2521 = vpop.permute.xlu0 %2520
        %2522 = vset.pattern.permute.xlu0 0
        %2523 = vperm.xlu0 %2522, %v2340
        %v2524 = vpop.permute.xlu0 %2523
        %2525 = vset.pattern.permute.xlu0 0
        %2526 = vperm.xlu0 %2525, %v2342
        %v2527 = vpop.permute.xlu0 %2526
        %2528 = vset.pattern.permute.xlu0 0
        %2529 = vperm.xlu0 %2528, %v2344
        %v2530 = vpop.permute.xlu0 %2529
        %2531 = vset.pattern.permute.xlu0 0
        %2532 = vperm.xlu0 %2531, %v2346
        %v2533 = vpop.permute.xlu0 %2532
        %2534 = vset.pattern.permute.xlu0 0
        %2535 = vperm.xlu0 %2534, %v2348
        %v2536 = vpop.permute.xlu0 %2535
        %2537 = vset.pattern.permute.xlu0 0
        %2538 = vperm.xlu0 %2537, %v2350
        %v2539 = vpop.permute.xlu0 %2538
        %2540 = vset.pattern.permute.xlu0 0
        %2541 = vperm.xlu0 %2540, %v2352
        %v2542 = vpop.permute.xlu0 %2541
        %2543 = vset.pattern.permute.xlu0 0
        %2544 = vperm.xlu0 %2543, %v2354
        %v2545 = vpop.permute.xlu0 %2544
        %2546 = vset.pattern.permute.xlu0 0
        %2547 = vperm.xlu0 %2546, %v2356
        %v2548 = vpop.permute.xlu0 %2547
        %2549 = vset.pattern.permute.xlu0 0
        %2550 = vperm.xlu0 %2549, %v2358
        %v2551 = vpop.permute.xlu0 %2550
        %2552 = vset.pattern.permute.xlu0 0
        %2553 = vperm.xlu0 %2552, %v2360
        %v2554 = vpop.permute.xlu0 %2553
        %2555 = vset.pattern.permute.xlu0 0
        %2556 = vperm.xlu0 %2555, %v2362
        %v2557 = vpop.permute.xlu0 %2556
        %2558 = vset.pattern.permute.xlu0 0
        %2559 = vperm.xlu0 %2558, %v2364
        %v2560 = vpop.permute.xlu0 %2559
        %2561 = vset.pattern.permute.xlu0 0
        %2562 = vperm.xlu0 %2561, %v2366
        %v2563 = vpop.permute.xlu0 %2562
        %2564 = vset.pattern.permute.xlu0 0
        %2565 = vperm.xlu0 %2564, %v2368
        %v2566 = vpop.permute.xlu0 %2565
        %2567 = vset.pattern.permute.xlu0 0
        %2568 = vperm.xlu0 %2567, %v2370
        %v2569 = vpop.permute.xlu0 %2568
        %2570 = vset.pattern.permute.xlu0 0
        %2571 = vperm.xlu0 %2570, %v2372
        %v2572 = vpop.permute.xlu0 %2571
        %2573 = vset.pattern.permute.xlu0 0
        %2574 = vperm.xlu0 %2573, %v2374
        %v2575 = vpop.permute.xlu0 %2574
        %2576 = vset.pattern.permute.xlu0 0
        %2577 = vperm.xlu0 %2576, %v2376
        %v2578 = vpop.permute.xlu0 %2577
        %2579 = vset.pattern.permute.xlu0 0
        %2580 = vperm.xlu0 %2579, %v2378
        %v2581 = vpop.permute.xlu0 %2580
        %2582 = vset.pattern.permute.xlu0 0
        %2583 = vperm.xlu0 %2582, %v2380
        %v2584 = vpop.permute.xlu0 %2583
        %2585 = vset.pattern.permute.xlu0 0
        %2586 = vperm.xlu0 %2585, %v2382
        %v2587 = vpop.permute.xlu0 %2586
        %2588 = vset.pattern.permute.xlu0 0
        %2589 = vperm.xlu0 %2588, %v2384
        %v2590 = vpop.permute.xlu0 %2589
        %2591 = vset.pattern.permute.xlu0 0
        %2592 = vperm.xlu0 %2591, %v2386
        %v2593 = vpop.permute.xlu0 %2592
        %2594 = vset.pattern.permute.xlu0 0
        %2595 = vperm.xlu0 %2594, %v2388
        %v2596 = vpop.permute.xlu0 %2595
        %2597 = vset.pattern.permute.xlu0 0
        %2598 = vperm.xlu0 %2597, %v2390
        %v2599 = vpop.permute.xlu0 %2598
        %2600 = vset.pattern.permute.xlu0 0
        %2601 = vperm.xlu0 %2600, %v2392
        %v2602 = vpop.permute.xlu0 %2601
        %2603 = vset.pattern.permute.xlu0 0
        %2604 = vperm.xlu0 %2603, %v2394
        %v2605 = vpop.permute.xlu0 %2604
        %2606 = vset.pattern.permute.xlu0 0
        %2607 = vperm.xlu0 %2606, %v2396
        %v2608 = vpop.permute.xlu0 %2607
        %2609 = vset.pattern.permute.xlu0 0
        %2610 = vperm.xlu0 %2609, %v2398
        %v2611 = vpop.permute.xlu0 %2610
        %2612 = vset.pattern.permute.xlu0 0
        %2613 = vperm.xlu0 %2612, %v2400
        %v2614 = vpop.permute.xlu0 %2613
        %2615 = vset.pattern.permute.xlu0 0
        %2616 = vperm.xlu0 %2615, %v2402
        %v2617 = vpop.permute.xlu0 %2616
        %2618 = vset.pattern.permute.xlu0 0
        %2619 = vperm.xlu0 %2618, %v2404
        %v2620 = vpop.permute.xlu0 %2619
        %2621 = vset.pattern.permute.xlu0 0
        %2622 = vperm.xlu0 %2621, %v2406
        %v2623 = vpop.permute.xlu0 %2622
        %2624 = vset.pattern.permute.xlu0 0
        %2625 = vperm.xlu0 %2624, %v2408
        %v2626 = vpop.permute.xlu0 %2625
        %2627 = vset.pattern.permute.xlu0 0
        %2628 = vperm.xlu0 %2627, %v2410
        %v2629 = vpop.permute.xlu0 %2628
        %2630 = vset.pattern.permute.xlu0 0
        %2631 = vperm.xlu0 %2630, %v2412
        %v2632 = vpop.permute.xlu0 %2631
        %2633 = vset.pattern.permute.xlu0 0
        %2634 = vperm.xlu0 %2633, %v2414
        %v2635 = vpop.permute.xlu0 %2634
        %2636 = vset.pattern.permute.xlu0 0
        %2637 = vperm.xlu0 %2636, %v2416
        %v2638 = vpop.permute.xlu0 %2637
        %2639 = vset.pattern.permute.xlu0 0
        %2640 = vperm.xlu0 %2639, %v2418
        %v2641 = vpop.permute.xlu0 %2640
        %2642 = vset.pattern.permute.xlu0 0
        %2643 = vperm.xlu0 %2642, %v2420
        %v2644 = vpop.permute.xlu0 %2643
        %2645 = vset.pattern.permute.xlu0 0
        %2646 = vperm.xlu0 %2645, %v2422
        %v2647 = vpop.permute.xlu0 %2646
        %2648 = vset.pattern.permute.xlu0 0
        %2649 = vperm.xlu0 %2648, %v2424
        %v2650 = vpop.permute.xlu0 %2649
        %2651 = vset.pattern.permute.xlu0 0
        %2652 = vperm.xlu0 %2651, %v2426
        %v2653 = vpop.permute.xlu0 %2652
        %v2654 = vperm.slane %v2488, %v2106
        %v2655 = vperm.slane %v2491, %v2108
        %v2656 = vsel %vm2110, %v2655, %v2654
        %v2657 = vperm.slane %v2494, %v2112
        %v2658 = vsel %vm2114, %v2657, %v2656
        %v2659 = vperm.slane %v2497, %v2116
        %v2660 = vsel %vm2118, %v2659, %v2658
        %v2661 = vperm.slane %v2500, %v2120
        %v2662 = vsel %vm2122, %v2661, %v2660
        %v2663 = vperm.slane %v2503, %v2124
        %v2664 = vsel %vm2126, %v2663, %v2662
        %v2665 = vperm.slane %v2506, %v2128
        %v2666 = vsel %vm2130, %v2665, %v2664
        %v2667 = vperm.slane %v2509, %v2106
        %v2668 = vperm.slane %v2512, %v2108
        %v2669 = vsel %vm2110, %v2668, %v2667
        %v2670 = vperm.slane %v2515, %v2112
        %v2671 = vsel %vm2114, %v2670, %v2669
        %v2672 = vperm.slane %v2518, %v2116
        %v2673 = vsel %vm2118, %v2672, %v2671
        %v2674 = vperm.slane %v2521, %v2120
        %v2675 = vsel %vm2122, %v2674, %v2673
        %v2676 = vperm.slane %v2524, %v2124
        %v2677 = vsel %vm2126, %v2676, %v2675
        %v2678 = vperm.slane %v2527, %v2128
        %v2679 = vsel %vm2130, %v2678, %v2677
        %v2680 = vperm.slane %v2530, %v2106
        %v2681 = vperm.slane %v2533, %v2108
        %v2682 = vsel %vm2110, %v2681, %v2680
        %v2683 = vperm.slane %v2536, %v2112
        %v2684 = vsel %vm2114, %v2683, %v2682
        %v2685 = vperm.slane %v2539, %v2116
        %v2686 = vsel %vm2118, %v2685, %v2684
        %v2687 = vperm.slane %v2542, %v2120
        %v2688 = vsel %vm2122, %v2687, %v2686
        %v2689 = vperm.slane %v2545, %v2124
        %v2690 = vsel %vm2126, %v2689, %v2688
        %v2691 = vperm.slane %v2548, %v2128
        %v2692 = vsel %vm2130, %v2691, %v2690
        %v2693 = vperm.slane %v2551, %v2106
        %v2694 = vperm.slane %v2554, %v2108
        %v2695 = vsel %vm2110, %v2694, %v2693
        %v2696 = vperm.slane %v2557, %v2112
        %v2697 = vsel %vm2114, %v2696, %v2695
        %v2698 = vperm.slane %v2560, %v2116
        %v2699 = vsel %vm2118, %v2698, %v2697
        %v2700 = vperm.slane %v2563, %v2120
        %v2701 = vsel %vm2122, %v2700, %v2699
        %v2702 = vperm.slane %v2566, %v2124
        %v2703 = vsel %vm2126, %v2702, %v2701
        %v2704 = vperm.slane %v2569, %v2128
        %v2705 = vsel %vm2130, %v2704, %v2703
        %v2706 = vperm.slane %v2572, %v2106
        %v2707 = vperm.slane %v2575, %v2108
        %v2708 = vsel %vm2110, %v2707, %v2706
        %v2709 = vperm.slane %v2578, %v2112
        %v2710 = vsel %vm2114, %v2709, %v2708
        %v2711 = vperm.slane %v2581, %v2116
        %v2712 = vsel %vm2118, %v2711, %v2710
        %v2713 = vperm.slane %v2584, %v2120
        %v2714 = vsel %vm2122, %v2713, %v2712
        %v2715 = vperm.slane %v2587, %v2124
        %v2716 = vsel %vm2126, %v2715, %v2714
        %v2717 = vperm.slane %v2590, %v2128
        %v2718 = vsel %vm2130, %v2717, %v2716
        %v2719 = vperm.slane %v2593, %v2106
        %v2720 = vperm.slane %v2596, %v2108
        %v2721 = vsel %vm2110, %v2720, %v2719
        %v2722 = vperm.slane %v2599, %v2112
        %v2723 = vsel %vm2114, %v2722, %v2721
        %v2724 = vperm.slane %v2602, %v2116
        %v2725 = vsel %vm2118, %v2724, %v2723
        %v2726 = vperm.slane %v2605, %v2120
        %v2727 = vsel %vm2122, %v2726, %v2725
        %v2728 = vperm.slane %v2608, %v2124
        %v2729 = vsel %vm2126, %v2728, %v2727
        %v2730 = vperm.slane %v2611, %v2128
        %v2731 = vsel %vm2130, %v2730, %v2729
        %v2732 = vperm.slane %v2614, %v2106
        %v2733 = vperm.slane %v2617, %v2108
        %v2734 = vsel %vm2110, %v2733, %v2732
        %v2735 = vperm.slane %v2620, %v2112
        %v2736 = vsel %vm2114, %v2735, %v2734
        %v2737 = vperm.slane %v2623, %v2116
        %v2738 = vsel %vm2118, %v2737, %v2736
        %v2739 = vperm.slane %v2626, %v2120
        %v2740 = vsel %vm2122, %v2739, %v2738
        %v2741 = vperm.slane %v2629, %v2124
        %v2742 = vsel %vm2126, %v2741, %v2740
        %v2743 = vperm.slane %v2632, %v2128
        %v2744 = vsel %vm2130, %v2743, %v2742
        %v2745 = vperm.slane %v2635, %v2106
        %v2746 = vperm.slane %v2638, %v2108
        %v2747 = vsel %vm2110, %v2746, %v2745
        %v2748 = vperm.slane %v2641, %v2112
        %v2749 = vsel %vm2114, %v2748, %v2747
        %v2750 = vperm.slane %v2644, %v2116
        %v2751 = vsel %vm2118, %v2750, %v2749
        %v2752 = vperm.slane %v2647, %v2120
        %v2753 = vsel %vm2122, %v2752, %v2751
        %v2754 = vperm.slane %v2650, %v2124
        %v2755 = vsel %vm2126, %v2754, %v2753
        %v2756 = vperm.slane %v2653, %v2128
        %v2757 = vsel %vm2130, %v2756, %v2755
        %v2758 = vsel %vm2223, %v2679, %v2666
        %v2759 = vsel %vm2225, %v2692, %v2758
        %v2760 = vsel %vm2227, %v2705, %v2759
        %v2761 = vsel %vm2229, %v2718, %v2760
        %v2762 = vsel %vm2231, %v2731, %v2761
        %v2763 = vsel %vm2233, %v2744, %v2762
        %v2764 = vsel %vm2235, %v2757, %v2763
        %v2766 = vsel %vm1823, %v2764, 0.0
        %2767 = vadd.xlane.f32.xlu0 %v2766
        %v2768 = vpop.xlane.xlu0 %2767
        %v2769 = vadd.f32 %v2768, %v2429
        %v2770 = vrcp.pop %v2769
        %v2771 = vmul.f32 %v2769, %v2770
        %v2772 = vsub.f32 1.0, %v2771
        %v2773 = vmul.f32 %v2770, %v2772
        %v2774 = vadd.f32 %v2770, %v2773
        %vm2775 = vweird.f32 %v2769
        %vm2776 = vweird.f32 %v2770
        %vm2777 = vmor %vm2775, %vm2776
        %v2778 = vsel %vm2777, %v2770, %v2774
        %v2779 = vand.u32 2147483647, %v2769
        %vm2780 = vcmp.eq.f32.partialorder %v2779, 8.507059e+37
        %v2781 = vand.u32 %v2769, 2147483648
        %v2782 = vor.u32 1.1754944e-38, %v2781
        %v2783 = vsel %vm2780, %v2782, %v2778
        %v2784 = vmul.f32 1.0, %v2783
        %v2786 = vperm.slane %v2784, 0
        %v2787 = vperm.slane %v2784, 1
        %v2788 = vperm.slane %v2784, 2
        %v2789 = vperm.slane %v2784, 3
        %v2790 = vperm.slane %v2784, 4
        %v2791 = vperm.slane %v2784, 5
        %v2792 = vperm.slane %v2784, 6
        %v2793 = vperm.slane %v2784, 7
        %v2802 = vmul.f32 %v2316, %v2786
        %v2803 = vmul.f32 %v2318, %v2786
        %v2804 = vmul.f32 %v2320, %v2786
        %v2805 = vmul.f32 %v2322, %v2786
        %v2806 = vmul.f32 %v2324, %v2786
        %v2807 = vmul.f32 %v2326, %v2786
        %v2808 = vmul.f32 %v2328, %v2786
        %v2809 = vmul.f32 %v2330, %v2787
        %v2810 = vmul.f32 %v2332, %v2787
        %v2811 = vmul.f32 %v2334, %v2787
        %v2812 = vmul.f32 %v2336, %v2787
        %v2813 = vmul.f32 %v2338, %v2787
        %v2814 = vmul.f32 %v2340, %v2787
        %v2815 = vmul.f32 %v2342, %v2787
        %v2816 = vmul.f32 %v2344, %v2788
        %v2817 = vmul.f32 %v2346, %v2788
        %v2818 = vmul.f32 %v2348, %v2788
        %v2819 = vmul.f32 %v2350, %v2788
        %v2820 = vmul.f32 %v2352, %v2788
        %v2821 = vmul.f32 %v2354, %v2788
        %v2822 = vmul.f32 %v2356, %v2788
        %v2823 = vmul.f32 %v2358, %v2789
        %v2824 = vmul.f32 %v2360, %v2789
        %v2825 = vmul.f32 %v2362, %v2789
        %v2826 = vmul.f32 %v2364, %v2789
        %v2827 = vmul.f32 %v2366, %v2789
        %v2828 = vmul.f32 %v2368, %v2789
        %v2829 = vmul.f32 %v2370, %v2789
        %v2830 = vmul.f32 %v2372, %v2790
        %v2831 = vmul.f32 %v2374, %v2790
        %v2832 = vmul.f32 %v2376, %v2790
        %v2833 = vmul.f32 %v2378, %v2790
        %v2834 = vmul.f32 %v2380, %v2790
        %v2835 = vmul.f32 %v2382, %v2790
        %v2836 = vmul.f32 %v2384, %v2790
        %v2837 = vmul.f32 %v2386, %v2791
        %v2838 = vmul.f32 %v2388, %v2791
        %v2839 = vmul.f32 %v2390, %v2791
        %v2840 = vmul.f32 %v2392, %v2791
        %v2841 = vmul.f32 %v2394, %v2791
        %v2842 = vmul.f32 %v2396, %v2791
        %v2843 = vmul.f32 %v2398, %v2791
        %v2844 = vmul.f32 %v2400, %v2792
        %v2845 = vmul.f32 %v2402, %v2792
        %v2846 = vmul.f32 %v2404, %v2792
        %v2847 = vmul.f32 %v2406, %v2792
        %v2848 = vmul.f32 %v2408, %v2792
        %v2849 = vmul.f32 %v2410, %v2792
        %v2850 = vmul.f32 %v2412, %v2792
        %v2851 = vmul.f32 %v2414, %v2793
        %v2852 = vmul.f32 %v2416, %v2793
        %v2853 = vmul.f32 %v2418, %v2793
        %v2854 = vmul.f32 %v2420, %v2793
        %v2855 = vmul.f32 %v2422, %v2793
        %v2856 = vmul.f32 %v2424, %v2793
        %v2857 = vmul.f32 %v2426, %v2793
        %v2858 = vmul.f32 %v2429, %v2784
        %v2859 = vmul.f32 %v2858, %v1536
        %2916 = vset.pattern.permute.xlu0 0
        %2917 = vperm.xlu0 %2916, %v2802
        %v2918 = vpop.permute.xlu0 %2917
        %2919 = vset.pattern.permute.xlu0 0
        %2920 = vperm.xlu0 %2919, %v2803
        %v2921 = vpop.permute.xlu0 %2920
        %2922 = vset.pattern.permute.xlu0 0
        %2923 = vperm.xlu0 %2922, %v2804
        %v2924 = vpop.permute.xlu0 %2923
        %2925 = vset.pattern.permute.xlu0 0
        %2926 = vperm.xlu0 %2925, %v2805
        %v2927 = vpop.permute.xlu0 %2926
        %2928 = vset.pattern.permute.xlu0 0
        %2929 = vperm.xlu0 %2928, %v2806
        %v2930 = vpop.permute.xlu0 %2929
        %2931 = vset.pattern.permute.xlu0 0
        %2932 = vperm.xlu0 %2931, %v2807
        %v2933 = vpop.permute.xlu0 %2932
        %2934 = vset.pattern.permute.xlu0 0
        %2935 = vperm.xlu0 %2934, %v2808
        %v2936 = vpop.permute.xlu0 %2935
        %2937 = vset.pattern.permute.xlu0 0
        %2938 = vperm.xlu0 %2937, %v2809
        %v2939 = vpop.permute.xlu0 %2938
        %2940 = vset.pattern.permute.xlu0 0
        %2941 = vperm.xlu0 %2940, %v2810
        %v2942 = vpop.permute.xlu0 %2941
        %2943 = vset.pattern.permute.xlu0 0
        %2944 = vperm.xlu0 %2943, %v2811
        %v2945 = vpop.permute.xlu0 %2944
        %2946 = vset.pattern.permute.xlu0 0
        %2947 = vperm.xlu0 %2946, %v2812
        %v2948 = vpop.permute.xlu0 %2947
        %2949 = vset.pattern.permute.xlu0 0
        %2950 = vperm.xlu0 %2949, %v2813
        %v2951 = vpop.permute.xlu0 %2950
        %2952 = vset.pattern.permute.xlu0 0
        %2953 = vperm.xlu0 %2952, %v2814
        %v2954 = vpop.permute.xlu0 %2953
        %2955 = vset.pattern.permute.xlu0 0
        %2956 = vperm.xlu0 %2955, %v2815
        %v2957 = vpop.permute.xlu0 %2956
        %2958 = vset.pattern.permute.xlu0 0
        %2959 = vperm.xlu0 %2958, %v2816
        %v2960 = vpop.permute.xlu0 %2959
        %2961 = vset.pattern.permute.xlu0 0
        %2962 = vperm.xlu0 %2961, %v2817
        %v2963 = vpop.permute.xlu0 %2962
        %2964 = vset.pattern.permute.xlu0 0
        %2965 = vperm.xlu0 %2964, %v2818
        %v2966 = vpop.permute.xlu0 %2965
        %2967 = vset.pattern.permute.xlu0 0
        %2968 = vperm.xlu0 %2967, %v2819
        %v2969 = vpop.permute.xlu0 %2968
        %2970 = vset.pattern.permute.xlu0 0
        %2971 = vperm.xlu0 %2970, %v2820
        %v2972 = vpop.permute.xlu0 %2971
        %2973 = vset.pattern.permute.xlu0 0
        %2974 = vperm.xlu0 %2973, %v2821
        %v2975 = vpop.permute.xlu0 %2974
        %2976 = vset.pattern.permute.xlu0 0
        %2977 = vperm.xlu0 %2976, %v2822
        %v2978 = vpop.permute.xlu0 %2977
        %2979 = vset.pattern.permute.xlu0 0
        %2980 = vperm.xlu0 %2979, %v2823
        %v2981 = vpop.permute.xlu0 %2980
        %2982 = vset.pattern.permute.xlu0 0
        %2983 = vperm.xlu0 %2982, %v2824
        %v2984 = vpop.permute.xlu0 %2983
        %2985 = vset.pattern.permute.xlu0 0
        %2986 = vperm.xlu0 %2985, %v2825
        %v2987 = vpop.permute.xlu0 %2986
        %2988 = vset.pattern.permute.xlu0 0
        %2989 = vperm.xlu0 %2988, %v2826
        %v2990 = vpop.permute.xlu0 %2989
        %2991 = vset.pattern.permute.xlu0 0
        %2992 = vperm.xlu0 %2991, %v2827
        %v2993 = vpop.permute.xlu0 %2992
        %2994 = vset.pattern.permute.xlu0 0
        %2995 = vperm.xlu0 %2994, %v2828
        %v2996 = vpop.permute.xlu0 %2995
        %2997 = vset.pattern.permute.xlu0 0
        %2998 = vperm.xlu0 %2997, %v2829
        %v2999 = vpop.permute.xlu0 %2998
        %3000 = vset.pattern.permute.xlu0 0
        %3001 = vperm.xlu0 %3000, %v2830
        %v3002 = vpop.permute.xlu0 %3001
        %3003 = vset.pattern.permute.xlu0 0
        %3004 = vperm.xlu0 %3003, %v2831
        %v3005 = vpop.permute.xlu0 %3004
        %3006 = vset.pattern.permute.xlu0 0
        %3007 = vperm.xlu0 %3006, %v2832
        %v3008 = vpop.permute.xlu0 %3007
        %3009 = vset.pattern.permute.xlu0 0
        %3010 = vperm.xlu0 %3009, %v2833
        %v3011 = vpop.permute.xlu0 %3010
        %3012 = vset.pattern.permute.xlu0 0
        %3013 = vperm.xlu0 %3012, %v2834
        %v3014 = vpop.permute.xlu0 %3013
        %3015 = vset.pattern.permute.xlu0 0
        %3016 = vperm.xlu0 %3015, %v2835
        %v3017 = vpop.permute.xlu0 %3016
        %3018 = vset.pattern.permute.xlu0 0
        %3019 = vperm.xlu0 %3018, %v2836
        %v3020 = vpop.permute.xlu0 %3019
        %3021 = vset.pattern.permute.xlu0 0
        %3022 = vperm.xlu0 %3021, %v2837
        %v3023 = vpop.permute.xlu0 %3022
        %3024 = vset.pattern.permute.xlu0 0
        %3025 = vperm.xlu0 %3024, %v2838
        %v3026 = vpop.permute.xlu0 %3025
        %3027 = vset.pattern.permute.xlu0 0
        %3028 = vperm.xlu0 %3027, %v2839
        %v3029 = vpop.permute.xlu0 %3028
        %3030 = vset.pattern.permute.xlu0 0
        %3031 = vperm.xlu0 %3030, %v2840
        %v3032 = vpop.permute.xlu0 %3031
        %3033 = vset.pattern.permute.xlu0 0
        %3034 = vperm.xlu0 %3033, %v2841
        %v3035 = vpop.permute.xlu0 %3034
        %3036 = vset.pattern.permute.xlu0 0
        %3037 = vperm.xlu0 %3036, %v2842
        %v3038 = vpop.permute.xlu0 %3037
        %3039 = vset.pattern.permute.xlu0 0
        %3040 = vperm.xlu0 %3039, %v2843
        %v3041 = vpop.permute.xlu0 %3040
        %3042 = vset.pattern.permute.xlu0 0
        %3043 = vperm.xlu0 %3042, %v2844
        %v3044 = vpop.permute.xlu0 %3043
        %3045 = vset.pattern.permute.xlu0 0
        %3046 = vperm.xlu0 %3045, %v2845
        %v3047 = vpop.permute.xlu0 %3046
        %3048 = vset.pattern.permute.xlu0 0
        %3049 = vperm.xlu0 %3048, %v2846
        %v3050 = vpop.permute.xlu0 %3049
        %3051 = vset.pattern.permute.xlu0 0
        %3052 = vperm.xlu0 %3051, %v2847
        %v3053 = vpop.permute.xlu0 %3052
        %3054 = vset.pattern.permute.xlu0 0
        %3055 = vperm.xlu0 %3054, %v2848
        %v3056 = vpop.permute.xlu0 %3055
        %3057 = vset.pattern.permute.xlu0 0
        %3058 = vperm.xlu0 %3057, %v2849
        %v3059 = vpop.permute.xlu0 %3058
        %3060 = vset.pattern.permute.xlu0 0
        %3061 = vperm.xlu0 %3060, %v2850
        %v3062 = vpop.permute.xlu0 %3061
        %3063 = vset.pattern.permute.xlu0 0
        %3064 = vperm.xlu0 %3063, %v2851
        %v3065 = vpop.permute.xlu0 %3064
        %3066 = vset.pattern.permute.xlu0 0
        %3067 = vperm.xlu0 %3066, %v2852
        %v3068 = vpop.permute.xlu0 %3067
        %3069 = vset.pattern.permute.xlu0 0
        %3070 = vperm.xlu0 %3069, %v2853
        %v3071 = vpop.permute.xlu0 %3070
        %3072 = vset.pattern.permute.xlu0 0
        %3073 = vperm.xlu0 %3072, %v2854
        %v3074 = vpop.permute.xlu0 %3073
        %3075 = vset.pattern.permute.xlu0 0
        %3076 = vperm.xlu0 %3075, %v2855
        %v3077 = vpop.permute.xlu0 %3076
        %3078 = vset.pattern.permute.xlu0 0
        %3079 = vperm.xlu0 %3078, %v2856
        %v3080 = vpop.permute.xlu0 %3079
        %3081 = vset.pattern.permute.xlu0 0
        %3082 = vperm.xlu0 %3081, %v2857
        %v3083 = vpop.permute.xlu0 %3082
        %v3084 = vperm.slane %v2918, %v2106
        %v3085 = vperm.slane %v2921, %v2108
        %v3086 = vsel %vm2110, %v3085, %v3084
        %v3087 = vperm.slane %v2924, %v2112
        %v3088 = vsel %vm2114, %v3087, %v3086
        %v3089 = vperm.slane %v2927, %v2116
        %v3090 = vsel %vm2118, %v3089, %v3088
        %v3091 = vperm.slane %v2930, %v2120
        %v3092 = vsel %vm2122, %v3091, %v3090
        %v3093 = vperm.slane %v2933, %v2124
        %v3094 = vsel %vm2126, %v3093, %v3092
        %v3095 = vperm.slane %v2936, %v2128
        %v3096 = vsel %vm2130, %v3095, %v3094
        %v3097 = vperm.slane %v2939, %v2106
        %v3098 = vperm.slane %v2942, %v2108
        %v3099 = vsel %vm2110, %v3098, %v3097
        %v3100 = vperm.slane %v2945, %v2112
        %v3101 = vsel %vm2114, %v3100, %v3099
        %v3102 = vperm.slane %v2948, %v2116
        %v3103 = vsel %vm2118, %v3102, %v3101
        %v3104 = vperm.slane %v2951, %v2120
        %v3105 = vsel %vm2122, %v3104, %v3103
        %v3106 = vperm.slane %v2954, %v2124
        %v3107 = vsel %vm2126, %v3106, %v3105
        %v3108 = vperm.slane %v2957, %v2128
        %v3109 = vsel %vm2130, %v3108, %v3107
        %v3110 = vperm.slane %v2960, %v2106
        %v3111 = vperm.slane %v2963, %v2108
        %v3112 = vsel %vm2110, %v3111, %v3110
        %v3113 = vperm.slane %v2966, %v2112
        %v3114 = vsel %vm2114, %v3113, %v3112
        %v3115 = vperm.slane %v2969, %v2116
        %v3116 = vsel %vm2118, %v3115, %v3114
        %v3117 = vperm.slane %v2972, %v2120
        %v3118 = vsel %vm2122, %v3117, %v3116
        %v3119 = vperm.slane %v2975, %v2124
        %v3120 = vsel %vm2126, %v3119, %v3118
        %v3121 = vperm.slane %v2978, %v2128
        %v3122 = vsel %vm2130, %v3121, %v3120
        %v3123 = vperm.slane %v2981, %v2106
        %v3124 = vperm.slane %v2984, %v2108
        %v3125 = vsel %vm2110, %v3124, %v3123
        %v3126 = vperm.slane %v2987, %v2112
        %v3127 = vsel %vm2114, %v3126, %v3125
        %v3128 = vperm.slane %v2990, %v2116
        %v3129 = vsel %vm2118, %v3128, %v3127
        %v3130 = vperm.slane %v2993, %v2120
        %v3131 = vsel %vm2122, %v3130, %v3129
        %v3132 = vperm.slane %v2996, %v2124
        %v3133 = vsel %vm2126, %v3132, %v3131
        %v3134 = vperm.slane %v2999, %v2128
        %v3135 = vsel %vm2130, %v3134, %v3133
        %v3136 = vperm.slane %v3002, %v2106
        %v3137 = vperm.slane %v3005, %v2108
        %v3138 = vsel %vm2110, %v3137, %v3136
        %v3139 = vperm.slane %v3008, %v2112
        %v3140 = vsel %vm2114, %v3139, %v3138
        %v3141 = vperm.slane %v3011, %v2116
        %v3142 = vsel %vm2118, %v3141, %v3140
        %v3143 = vperm.slane %v3014, %v2120
        %v3144 = vsel %vm2122, %v3143, %v3142
        %v3145 = vperm.slane %v3017, %v2124
        %v3146 = vsel %vm2126, %v3145, %v3144
        %v3147 = vperm.slane %v3020, %v2128
        %v3148 = vsel %vm2130, %v3147, %v3146
        %v3149 = vperm.slane %v3023, %v2106
        %v3150 = vperm.slane %v3026, %v2108
        %v3151 = vsel %vm2110, %v3150, %v3149
        %v3152 = vperm.slane %v3029, %v2112
        %v3153 = vsel %vm2114, %v3152, %v3151
        %v3154 = vperm.slane %v3032, %v2116
        %v3155 = vsel %vm2118, %v3154, %v3153
        %v3156 = vperm.slane %v3035, %v2120
        %v3157 = vsel %vm2122, %v3156, %v3155
        %v3158 = vperm.slane %v3038, %v2124
        %v3159 = vsel %vm2126, %v3158, %v3157
        %v3160 = vperm.slane %v3041, %v2128
        %v3161 = vsel %vm2130, %v3160, %v3159
        %v3162 = vperm.slane %v3044, %v2106
        %v3163 = vperm.slane %v3047, %v2108
        %v3164 = vsel %vm2110, %v3163, %v3162
        %v3165 = vperm.slane %v3050, %v2112
        %v3166 = vsel %vm2114, %v3165, %v3164
        %v3167 = vperm.slane %v3053, %v2116
        %v3168 = vsel %vm2118, %v3167, %v3166
        %v3169 = vperm.slane %v3056, %v2120
        %v3170 = vsel %vm2122, %v3169, %v3168
        %v3171 = vperm.slane %v3059, %v2124
        %v3172 = vsel %vm2126, %v3171, %v3170
        %v3173 = vperm.slane %v3062, %v2128
        %v3174 = vsel %vm2130, %v3173, %v3172
        %v3175 = vperm.slane %v3065, %v2106
        %v3176 = vperm.slane %v3068, %v2108
        %v3177 = vsel %vm2110, %v3176, %v3175
        %v3178 = vperm.slane %v3071, %v2112
        %v3179 = vsel %vm2114, %v3178, %v3177
        %v3180 = vperm.slane %v3074, %v2116
        %v3181 = vsel %vm2118, %v3180, %v3179
        %v3182 = vperm.slane %v3077, %v2120
        %v3183 = vsel %vm2122, %v3182, %v3181
        %v3184 = vperm.slane %v3080, %v2124
        %v3185 = vsel %vm2126, %v3184, %v3183
        %v3186 = vperm.slane %v3083, %v2128
        %v3187 = vsel %vm2130, %v3186, %v3185
        %v3188 = vsel %vm2223, %v3109, %v3096
        %v3189 = vsel %vm2225, %v3122, %v3188
        %v3190 = vsel %vm2227, %v3135, %v3189
        %v3191 = vsel %vm2229, %v3148, %v3190
        %v3192 = vsel %vm2231, %v3161, %v3191
        %v3193 = vsel %vm2233, %v3174, %v3192
        %v3194 = vsel %vm2235, %v3187, %v3193
        %v3195 = vsel %vm1823, %v3194, 0
        %vm3197 = vcmask 1040384
        %v3198 = vsel %vm3197, %v770, 0
        %3200 = vmatpush.msra.mxu0 0.0
        %3201 = vmatpush.msra.mxu0 0.0
        %3202 = vmatpush.msra.mxu0 0.0
        %3203 = vmatpush.msra.mxu0 0.0
        %3204 = vmatpush.msra.mxu0 0.0
        %3205 = vmatpush.msra.mxu0 0.0
        %3206 = vmatpush.msra.mxu0 0.0
        %3207 = vmatpush.msra.mxu0 0.0
        %3208 = vmatpush.msra.mxu0 0.0
        %3209 = vmatpush.msra.mxu0 %v3198
        %3210 = vmatpush.msra.mxu0 %v769
        %3211 = vmatpush.msra.mxu0 %v768
        %3212 = vmatpush.msra.mxu0 %v767
        %3213 = vmatpush.msra.mxu0 %v766
        %3214 = vmatpush.msra.mxu0 %v765
        %3215 = vmatpush.msra.mxu0 %v764
        %3216 = vmatmul.f32.gmra.mxu0 %v3195
        %v3217 = vpop.f32.mrf.mxu0
        %v3218 = vadd.f32 0.0, %v3217
        %3219 = vdwg.mxu0
        %v3220 = vadd.f32 %v2859, %v3218
        %v3221 = vld [vmem:[#allocation14] sm:$0xff]
        %v3222 = vld [vmem:[#allocation14 + $0x8] sm:$0xff]
        %v3223 = vld [vmem:[#allocation14 + $0x10] sm:$0xff]
        %v3224 = vld [vmem:[#allocation14 + $0x18] sm:$0xff]
        %v3225 = vld [vmem:[#allocation15] sm:$0xff]
        %v3226 = vld [vmem:[#allocation15 + $0x8] sm:$0xff]
        %v3227 = vld [vmem:[#allocation15 + $0x10] sm:$0xff]
        %v3228 = vld [vmem:[#allocation15 + $0x18] sm:$0xff]
        %3229 = vmatpush.msra.mxu0 0.0
        %3230 = vmatpush.msra.mxu0 0.0
        %3231 = vmatpush.msra.mxu0 0.0
        %3232 = vmatpush.msra.mxu0 0.0
        %3233 = vmatpush.msra.mxu0 0.0
        %3234 = vmatpush.msra.mxu0 0.0
        %3235 = vmatpush.msra.mxu0 0.0
        %3236 = vmatpush.msra.mxu0 0.0
        %3237 = vmatpush.msra.mxu0 0.0
        %3238 = vmatpush.msra.mxu0 0.0
        %3239 = vmatpush.msra.mxu0 0.0
        %3240 = vmatpush.msra.mxu0 0.0
        %3241 = vmatpush.msra.mxu0 %v3228
        %3242 = vmatpush.msra.mxu0 %v3227
        %3243 = vmatpush.msra.mxu0 %v3226
        %3244 = vmatpush.msra.mxu0 %v3225
        %3245 = vmatmul.f32.gmra.mxu0 %v1605
        %v3246 = vpop.f32.mrf.mxu0
        %v3247 = vadd.f32 0.0, %v3246
        %3248 = vdwg.mxu0
        %v3250 = vsel %vm836, %v3220, 0
        %3252 = vmatpush.msra.mxu0 0.0
        %3253 = vmatpush.msra.mxu0 0.0
        %3254 = vmatpush.msra.mxu0 0.0
        %3255 = vmatpush.msra.mxu0 0.0
        %3256 = vmatpush.msra.mxu0 0.0
        %3257 = vmatpush.msra.mxu0 0.0
        %3258 = vmatpush.msra.mxu0 0.0
        %3259 = vmatpush.msra.mxu0 0.0
        %3260 = vmatpush.msra.mxu0 0.0
        %3261 = vmatpush.msra.mxu0 0.0
        %3262 = vmatpush.msra.mxu0 0.0
        %3263 = vmatpush.msra.mxu0 0.0
        %3264 = vmatpush.msra.mxu0 %v3224
        %3265 = vmatpush.msra.mxu0 %v3223
        %3266 = vmatpush.msra.mxu0 %v3222
        %3267 = vmatpush.msra.mxu0 %v3221
        %3268 = vmatmul.f32.gmra.mxu0 %v3250
        %v3269 = vpop.f32.mrf.mxu0
        %v3270 = vadd.f32 %v3247, %v3269
        %3271 = vdwg.mxu0
        %v3272 = vld [vmem:[%s15] sm:$0x1]
        %v3274 = vperm.slane %v3272, 0
        %v3276 = vadd.f32 %v3270, %v3274
        %3277 = vst [vmem:[%s733] sm:$0xff] %v3276
        %3278 = vst [vmem:[%s740] sm:$0xff] 0.0
        %v3279 = vsub.f32 1.0, %v2858
        %v3281 = vperm.slane %v3279, 0
        %v3282 = vperm.slane %v3279, 1
        %v3283 = vperm.slane %v3279, 2
        %v3284 = vperm.slane %v3279, 3
        %v3285 = vperm.slane %v3279, 4
        %v3286 = vperm.slane %v3279, 5
        %v3287 = vperm.slane %v3279, 6
        %v3288 = vperm.slane %v3279, 7
        %v3297 = vmul.f32 %v2802, %v3281
        %v3298 = vmul.f32 %v2803, %v3281
        %v3299 = vmul.f32 %v2804, %v3281
        %v3300 = vmul.f32 %v2805, %v3281
        %v3301 = vmul.f32 %v2806, %v3281
        %v3302 = vmul.f32 %v2807, %v3281
        %v3303 = vmul.f32 %v2808, %v3281
        %v3304 = vmul.f32 %v2809, %v3282
        %v3305 = vmul.f32 %v2810, %v3282
        %v3306 = vmul.f32 %v2811, %v3282
        %v3307 = vmul.f32 %v2812, %v3282
        %v3308 = vmul.f32 %v2813, %v3282
        %v3309 = vmul.f32 %v2814, %v3282
        %v3310 = vmul.f32 %v2815, %v3282
        %v3311 = vmul.f32 %v2816, %v3283
        %v3312 = vmul.f32 %v2817, %v3283
        %v3313 = vmul.f32 %v2818, %v3283
        %v3314 = vmul.f32 %v2819, %v3283
        %v3315 = vmul.f32 %v2820, %v3283
        %v3316 = vmul.f32 %v2821, %v3283
        %v3317 = vmul.f32 %v2822, %v3283
        %v3318 = vmul.f32 %v2823, %v3284
        %v3319 = vmul.f32 %v2824, %v3284
        %v3320 = vmul.f32 %v2825, %v3284
        %v3321 = vmul.f32 %v2826, %v3284
        %v3322 = vmul.f32 %v2827, %v3284
        %v3323 = vmul.f32 %v2828, %v3284
        %v3324 = vmul.f32 %v2829, %v3284
        %v3325 = vmul.f32 %v2830, %v3285
        %v3326 = vmul.f32 %v2831, %v3285
        %v3327 = vmul.f32 %v2832, %v3285
        %v3328 = vmul.f32 %v2833, %v3285
        %v3329 = vmul.f32 %v2834, %v3285
        %v3330 = vmul.f32 %v2835, %v3285
        %v3331 = vmul.f32 %v2836, %v3285
        %v3332 = vmul.f32 %v2837, %v3286
        %v3333 = vmul.f32 %v2838, %v3286
        %v3334 = vmul.f32 %v2839, %v3286
        %v3335 = vmul.f32 %v2840, %v3286
        %v3336 = vmul.f32 %v2841, %v3286
        %v3337 = vmul.f32 %v2842, %v3286
        %v3338 = vmul.f32 %v2843, %v3286
        %v3339 = vmul.f32 %v2844, %v3287
        %v3340 = vmul.f32 %v2845, %v3287
        %v3341 = vmul.f32 %v2846, %v3287
        %v3342 = vmul.f32 %v2847, %v3287
        %v3343 = vmul.f32 %v2848, %v3287
        %v3344 = vmul.f32 %v2849, %v3287
        %v3345 = vmul.f32 %v2850, %v3287
        %v3346 = vmul.f32 %v2851, %v3288
        %v3347 = vmul.f32 %v2852, %v3288
        %v3348 = vmul.f32 %v2853, %v3288
        %v3349 = vmul.f32 %v2854, %v3288
        %v3350 = vmul.f32 %v2855, %v3288
        %v3351 = vmul.f32 %v2856, %v3288
        %v3352 = vmul.f32 %v2857, %v3288
        %3409 = vset.pattern.permute.xlu0 0
        %3410 = vperm.xlu0 %3409, %v3297
        %v3411 = vpop.permute.xlu0 %3410
        %3412 = vset.pattern.permute.xlu0 0
        %3413 = vperm.xlu0 %3412, %v3298
        %v3414 = vpop.permute.xlu0 %3413
        %3415 = vset.pattern.permute.xlu0 0
        %3416 = vperm.xlu0 %3415, %v3299
        %v3417 = vpop.permute.xlu0 %3416
        %3418 = vset.pattern.permute.xlu0 0
        %3419 = vperm.xlu0 %3418, %v3300
        %v3420 = vpop.permute.xlu0 %3419
        %3421 = vset.pattern.permute.xlu0 0
        %3422 = vperm.xlu0 %3421, %v3301
        %v3423 = vpop.permute.xlu0 %3422
        %3424 = vset.pattern.permute.xlu0 0
        %3425 = vperm.xlu0 %3424, %v3302
        %v3426 = vpop.permute.xlu0 %3425
        %3427 = vset.pattern.permute.xlu0 0
        %3428 = vperm.xlu0 %3427, %v3303
        %v3429 = vpop.permute.xlu0 %3428
        %3430 = vset.pattern.permute.xlu0 0
        %3431 = vperm.xlu0 %3430, %v3304
        %v3432 = vpop.permute.xlu0 %3431
        %3433 = vset.pattern.permute.xlu0 0
        %3434 = vperm.xlu0 %3433, %v3305
        %v3435 = vpop.permute.xlu0 %3434
        %3436 = vset.pattern.permute.xlu0 0
        %3437 = vperm.xlu0 %3436, %v3306
        %v3438 = vpop.permute.xlu0 %3437
        %3439 = vset.pattern.permute.xlu0 0
        %3440 = vperm.xlu0 %3439, %v3307
        %v3441 = vpop.permute.xlu0 %3440
        %3442 = vset.pattern.permute.xlu0 0
        %3443 = vperm.xlu0 %3442, %v3308
        %v3444 = vpop.permute.xlu0 %3443
        %3445 = vset.pattern.permute.xlu0 0
        %3446 = vperm.xlu0 %3445, %v3309
        %v3447 = vpop.permute.xlu0 %3446
        %3448 = vset.pattern.permute.xlu0 0
        %3449 = vperm.xlu0 %3448, %v3310
        %v3450 = vpop.permute.xlu0 %3449
        %3451 = vset.pattern.permute.xlu0 0
        %3452 = vperm.xlu0 %3451, %v3311
        %v3453 = vpop.permute.xlu0 %3452
        %3454 = vset.pattern.permute.xlu0 0
        %3455 = vperm.xlu0 %3454, %v3312
        %v3456 = vpop.permute.xlu0 %3455
        %3457 = vset.pattern.permute.xlu0 0
        %3458 = vperm.xlu0 %3457, %v3313
        %v3459 = vpop.permute.xlu0 %3458
        %3460 = vset.pattern.permute.xlu0 0
        %3461 = vperm.xlu0 %3460, %v3314
        %v3462 = vpop.permute.xlu0 %3461
        %3463 = vset.pattern.permute.xlu0 0
        %3464 = vperm.xlu0 %3463, %v3315
        %v3465 = vpop.permute.xlu0 %3464
        %3466 = vset.pattern.permute.xlu0 0
        %3467 = vperm.xlu0 %3466, %v3316
        %v3468 = vpop.permute.xlu0 %3467
        %3469 = vset.pattern.permute.xlu0 0
        %3470 = vperm.xlu0 %3469, %v3317
        %v3471 = vpop.permute.xlu0 %3470
        %3472 = vset.pattern.permute.xlu0 0
        %3473 = vperm.xlu0 %3472, %v3318
        %v3474 = vpop.permute.xlu0 %3473
        %3475 = vset.pattern.permute.xlu0 0
        %3476 = vperm.xlu0 %3475, %v3319
        %v3477 = vpop.permute.xlu0 %3476
        %3478 = vset.pattern.permute.xlu0 0
        %3479 = vperm.xlu0 %3478, %v3320
        %v3480 = vpop.permute.xlu0 %3479
        %3481 = vset.pattern.permute.xlu0 0
        %3482 = vperm.xlu0 %3481, %v3321
        %v3483 = vpop.permute.xlu0 %3482
        %3484 = vset.pattern.permute.xlu0 0
        %3485 = vperm.xlu0 %3484, %v3322
        %v3486 = vpop.permute.xlu0 %3485
        %3487 = vset.pattern.permute.xlu0 0
        %3488 = vperm.xlu0 %3487, %v3323
        %v3489 = vpop.permute.xlu0 %3488
        %3490 = vset.pattern.permute.xlu0 0
        %3491 = vperm.xlu0 %3490, %v3324
        %v3492 = vpop.permute.xlu0 %3491
        %3493 = vset.pattern.permute.xlu0 0
        %3494 = vperm.xlu0 %3493, %v3325
        %v3495 = vpop.permute.xlu0 %3494
        %3496 = vset.pattern.permute.xlu0 0
        %3497 = vperm.xlu0 %3496, %v3326
        %v3498 = vpop.permute.xlu0 %3497
        %3499 = vset.pattern.permute.xlu0 0
        %3500 = vperm.xlu0 %3499, %v3327
        %v3501 = vpop.permute.xlu0 %3500
        %3502 = vset.pattern.permute.xlu0 0
        %3503 = vperm.xlu0 %3502, %v3328
        %v3504 = vpop.permute.xlu0 %3503
        %3505 = vset.pattern.permute.xlu0 0
        %3506 = vperm.xlu0 %3505, %v3329
        %v3507 = vpop.permute.xlu0 %3506
        %3508 = vset.pattern.permute.xlu0 0
        %3509 = vperm.xlu0 %3508, %v3330
        %v3510 = vpop.permute.xlu0 %3509
        %3511 = vset.pattern.permute.xlu0 0
        %3512 = vperm.xlu0 %3511, %v3331
        %v3513 = vpop.permute.xlu0 %3512
        %3514 = vset.pattern.permute.xlu0 0
        %3515 = vperm.xlu0 %3514, %v3332
        %v3516 = vpop.permute.xlu0 %3515
        %3517 = vset.pattern.permute.xlu0 0
        %3518 = vperm.xlu0 %3517, %v3333
        %v3519 = vpop.permute.xlu0 %3518
        %3520 = vset.pattern.permute.xlu0 0
        %3521 = vperm.xlu0 %3520, %v3334
        %v3522 = vpop.permute.xlu0 %3521
        %3523 = vset.pattern.permute.xlu0 0
        %3524 = vperm.xlu0 %3523, %v3335
        %v3525 = vpop.permute.xlu0 %3524
        %3526 = vset.pattern.permute.xlu0 0
        %3527 = vperm.xlu0 %3526, %v3336
        %v3528 = vpop.permute.xlu0 %3527
        %3529 = vset.pattern.permute.xlu0 0
        %3530 = vperm.xlu0 %3529, %v3337
        %v3531 = vpop.permute.xlu0 %3530
        %3532 = vset.pattern.permute.xlu0 0
        %3533 = vperm.xlu0 %3532, %v3338
        %v3534 = vpop.permute.xlu0 %3533
        %3535 = vset.pattern.permute.xlu0 0
        %3536 = vperm.xlu0 %3535, %v3339
        %v3537 = vpop.permute.xlu0 %3536
        %3538 = vset.pattern.permute.xlu0 0
        %3539 = vperm.xlu0 %3538, %v3340
        %v3540 = vpop.permute.xlu0 %3539
        %3541 = vset.pattern.permute.xlu0 0
        %3542 = vperm.xlu0 %3541, %v3341
        %v3543 = vpop.permute.xlu0 %3542
        %3544 = vset.pattern.permute.xlu0 0
        %3545 = vperm.xlu0 %3544, %v3342
        %v3546 = vpop.permute.xlu0 %3545
        %3547 = vset.pattern.permute.xlu0 0
        %3548 = vperm.xlu0 %3547, %v3343
        %v3549 = vpop.permute.xlu0 %3548
        %3550 = vset.pattern.permute.xlu0 0
        %3551 = vperm.xlu0 %3550, %v3344
        %v3552 = vpop.permute.xlu0 %3551
        %3553 = vset.pattern.permute.xlu0 0
        %3554 = vperm.xlu0 %3553, %v3345
        %v3555 = vpop.permute.xlu0 %3554
        %3556 = vset.pattern.permute.xlu0 0
        %3557 = vperm.xlu0 %3556, %v3346
        %v3558 = vpop.permute.xlu0 %3557
        %3559 = vset.pattern.permute.xlu0 0
        %3560 = vperm.xlu0 %3559, %v3347
        %v3561 = vpop.permute.xlu0 %3560
        %3562 = vset.pattern.permute.xlu0 0
        %3563 = vperm.xlu0 %3562, %v3348
        %v3564 = vpop.permute.xlu0 %3563
        %3565 = vset.pattern.permute.xlu0 0
        %3566 = vperm.xlu0 %3565, %v3349
        %v3567 = vpop.permute.xlu0 %3566
        %3568 = vset.pattern.permute.xlu0 0
        %3569 = vperm.xlu0 %3568, %v3350
        %v3570 = vpop.permute.xlu0 %3569
        %3571 = vset.pattern.permute.xlu0 0
        %3572 = vperm.xlu0 %3571, %v3351
        %v3573 = vpop.permute.xlu0 %3572
        %3574 = vset.pattern.permute.xlu0 0
        %3575 = vperm.xlu0 %3574, %v3352
        %v3576 = vpop.permute.xlu0 %3575
        %v3577 = vperm.slane %v3411, %v2106
        %v3578 = vperm.slane %v3414, %v2108
        %v3579 = vsel %vm2110, %v3578, %v3577
        %v3580 = vperm.slane %v3417, %v2112
        %v3581 = vsel %vm2114, %v3580, %v3579
        %v3582 = vperm.slane %v3420, %v2116
        %v3583 = vsel %vm2118, %v3582, %v3581
        %v3584 = vperm.slane %v3423, %v2120
        %v3585 = vsel %vm2122, %v3584, %v3583
        %v3586 = vperm.slane %v3426, %v2124
        %v3587 = vsel %vm2126, %v3586, %v3585
        %v3588 = vperm.slane %v3429, %v2128
        %v3589 = vsel %vm2130, %v3588, %v3587
        %v3590 = vperm.slane %v3432, %v2106
        %v3591 = vperm.slane %v3435, %v2108
        %v3592 = vsel %vm2110, %v3591, %v3590
        %v3593 = vperm.slane %v3438, %v2112
        %v3594 = vsel %vm2114, %v3593, %v3592
        %v3595 = vperm.slane %v3441, %v2116
        %v3596 = vsel %vm2118, %v3595, %v3594
        %v3597 = vperm.slane %v3444, %v2120
        %v3598 = vsel %vm2122, %v3597, %v3596
        %v3599 = vperm.slane %v3447, %v2124
        %v3600 = vsel %vm2126, %v3599, %v3598
        %v3601 = vperm.slane %v3450, %v2128
        %v3602 = vsel %vm2130, %v3601, %v3600
        %v3603 = vperm.slane %v3453, %v2106
        %v3604 = vperm.slane %v3456, %v2108
        %v3605 = vsel %vm2110, %v3604, %v3603
        %v3606 = vperm.slane %v3459, %v2112
        %v3607 = vsel %vm2114, %v3606, %v3605
        %v3608 = vperm.slane %v3462, %v2116
        %v3609 = vsel %vm2118, %v3608, %v3607
        %v3610 = vperm.slane %v3465, %v2120
        %v3611 = vsel %vm2122, %v3610, %v3609
        %v3612 = vperm.slane %v3468, %v2124
        %v3613 = vsel %vm2126, %v3612, %v3611
        %v3614 = vperm.slane %v3471, %v2128
        %v3615 = vsel %vm2130, %v3614, %v3613
        %v3616 = vperm.slane %v3474, %v2106
        %v3617 = vperm.slane %v3477, %v2108
        %v3618 = vsel %vm2110, %v3617, %v3616
        %v3619 = vperm.slane %v3480, %v2112
        %v3620 = vsel %vm2114, %v3619, %v3618
        %v3621 = vperm.slane %v3483, %v2116
        %v3622 = vsel %vm2118, %v3621, %v3620
        %v3623 = vperm.slane %v3486, %v2120
        %v3624 = vsel %vm2122, %v3623, %v3622
        %v3625 = vperm.slane %v3489, %v2124
        %v3626 = vsel %vm2126, %v3625, %v3624
        %v3627 = vperm.slane %v3492, %v2128
        %v3628 = vsel %vm2130, %v3627, %v3626
        %v3629 = vperm.slane %v3495, %v2106
        %v3630 = vperm.slane %v3498, %v2108
        %v3631 = vsel %vm2110, %v3630, %v3629
        %v3632 = vperm.slane %v3501, %v2112
        %v3633 = vsel %vm2114, %v3632, %v3631
        %v3634 = vperm.slane %v3504, %v2116
        %v3635 = vsel %vm2118, %v3634, %v3633
        %v3636 = vperm.slane %v3507, %v2120
        %v3637 = vsel %vm2122, %v3636, %v3635
        %v3638 = vperm.slane %v3510, %v2124
        %v3639 = vsel %vm2126, %v3638, %v3637
        %v3640 = vperm.slane %v3513, %v2128
        %v3641 = vsel %vm2130, %v3640, %v3639
        %v3642 = vperm.slane %v3516, %v2106
        %v3643 = vperm.slane %v3519, %v2108
        %v3644 = vsel %vm2110, %v3643, %v3642
        %v3645 = vperm.slane %v3522, %v2112
        %v3646 = vsel %vm2114, %v3645, %v3644
        %v3647 = vperm.slane %v3525, %v2116
        %v3648 = vsel %vm2118, %v3647, %v3646
        %v3649 = vperm.slane %v3528, %v2120
        %v3650 = vsel %vm2122, %v3649, %v3648
        %v3651 = vperm.slane %v3531, %v2124
        %v3652 = vsel %vm2126, %v3651, %v3650
        %v3653 = vperm.slane %v3534, %v2128
        %v3654 = vsel %vm2130, %v3653, %v3652
        %v3655 = vperm.slane %v3537, %v2106
        %v3656 = vperm.slane %v3540, %v2108
        %v3657 = vsel %vm2110, %v3656, %v3655
        %v3658 = vperm.slane %v3543, %v2112
        %v3659 = vsel %vm2114, %v3658, %v3657
        %v3660 = vperm.slane %v3546, %v2116
        %v3661 = vsel %vm2118, %v3660, %v3659
        %v3662 = vperm.slane %v3549, %v2120
        %v3663 = vsel %vm2122, %v3662, %v3661
        %v3664 = vperm.slane %v3552, %v2124
        %v3665 = vsel %vm2126, %v3664, %v3663
        %v3666 = vperm.slane %v3555, %v2128
        %v3667 = vsel %vm2130, %v3666, %v3665
        %v3668 = vperm.slane %v3558, %v2106
        %v3669 = vperm.slane %v3561, %v2108
        %v3670 = vsel %vm2110, %v3669, %v3668
        %v3671 = vperm.slane %v3564, %v2112
        %v3672 = vsel %vm2114, %v3671, %v3670
        %v3673 = vperm.slane %v3567, %v2116
        %v3674 = vsel %vm2118, %v3673, %v3672
        %v3675 = vperm.slane %v3570, %v2120
        %v3676 = vsel %vm2122, %v3675, %v3674
        %v3677 = vperm.slane %v3573, %v2124
        %v3678 = vsel %vm2126, %v3677, %v3676
        %v3679 = vperm.slane %v3576, %v2128
        %v3680 = vsel %vm2130, %v3679, %v3678
        %v3681 = vsel %vm2223, %v3602, %v3589
        %v3682 = vsel %vm2225, %v3615, %v3681
        %v3683 = vsel %vm2227, %v3628, %v3682
        %v3684 = vsel %vm2229, %v3641, %v3683
        %v3685 = vsel %vm2231, %v3654, %v3684
        %v3686 = vsel %vm2233, %v3667, %v3685
        %v3687 = vsel %vm2235, %v3680, %v3686
        %3689 = vst.msk [vmem:[%s740] sm:$0xff] %vm1823, %v3687
        %vm3690 = vcmask 408968
        %3691 = vst.msk [vmem:[%s740] sm:$0xff] %vm3690, %v2858
        %3692 = vst.msk [vmem:[%s746] sm:$0x1] %vm829, %v1432
        %3693 = vst.msk [vmem:[%s752] sm:$0x1] %vm829, %v1437
        %s3694 = sand.u32 %s405, 1
        %s3695 = scalar_lea.sflag [#allocation8], %s3694
        %s3696 = sand.u32 %s405, 1
        %s3697 = smul.addr %s3696, 8
        %s3698 = scalar_lea.vmem [#allocation17], %s3697
        %s3699 = sand.u32 %s46, 1
        %s3700 = scalar_lea.sflag [#allocation19], %s3699
        %s3701 = sand.u32 %s431, 1
        %s3702 = smul.addr %s3701, 8
        %s3703 = scalar_lea.vmem [#allocation18], %s3702
        %s3704 = sand.u32 %s46, 1
        %s3705 = scalar_lea.sflag [#allocation19], %s3704
        %s3706 = sand.u32 %s457, 1
        %s3707 = scalar_lea.vmem [#allocation20], %s3706
        %s3708 = sand.u32 %s483, 1
        %s3709 = scalar_lea.sflag [#allocation22], %s3708
        %s3710 = sand.u32 %s483, 1
        %s3711 = scalar_lea.vmem [#allocation21], %s3710
        // Predicated region
        $region109: #{tpu_custom_call.1} parent=83 // pred_check
          %p3712 = pneg %p415
        $region110: #{tpu_custom_call.1} parent=83 // pred_check_branch
          %3714 = sbr.rel (%p3712) target = $region112
        $region111: #{tpu_custom_call.1} parent=83 // pred_region
          %3716 = vsyncadd %s3695, 0
          %s3717 = smul.addr %s46, 8
          %s3718 = scalar_lea.hbm %s16, %s3717
          %s3720 = sshll.u32 %s3698, 4
          %s3721 = int_to_ptr.vmem [resolvable:$true] %s3720
          %s3722 = sshll.u32 %s3718, 4
          %s3723 = int_to_ptr.hbm [resolvable:$true] %s3722
          %3725 = dma.vmem_to_hbm [thread:$0]  %s3721, 128, %s3723, %s3695
        $region112: #{tpu_custom_call.1} parent=83 // pred_fallthru
          _
        // Predicated region
        $region113: #{tpu_custom_call.1} parent=83 // pred_check
          %p3726 = pneg %p441
        $region114: #{tpu_custom_call.1} parent=83 // pred_check_branch
          %3728 = sbr.rel (%p3726) target = $region116
        $region115: #{tpu_custom_call.1} parent=83 // pred_region
          %3730 = vsyncadd %s3700, 0
          %s3731 = smul.addr %s46, 8
          %s3732 = scalar_lea.hbm %s17, %s3731
          %s3734 = sshll.u32 %s3703, 4
          %s3735 = int_to_ptr.vmem [resolvable:$true] %s3734
          %s3736 = sshll.u32 %s3732, 4
          %s3737 = int_to_ptr.hbm [resolvable:$true] %s3736
          %3739 = dma.vmem_to_hbm [thread:$0]  %s3735, 128, %s3737, %s3700
        $region116: #{tpu_custom_call.1} parent=83 // pred_fallthru
          _
        // Predicated region
        $region117: #{tpu_custom_call.1} parent=83 // pred_check
          %p3740 = pneg %p467
        $region118: #{tpu_custom_call.1} parent=83 // pred_check_branch
          %3742 = sbr.rel (%p3740) target = $region120
        $region119: #{tpu_custom_call.1} parent=83 // pred_region
          %3744 = vsyncadd %s3705, 0
          %s3745 = scalar_lea.hbm %s18, %s46
          %s3747 = sshll.u32 %s3707, 4
          %s3748 = int_to_ptr.vmem [resolvable:$true] %s3747
          %s3749 = sshll.u32 %s3745, 4
          %s3750 = int_to_ptr.hbm [resolvable:$true] %s3749
          %3752 = dma.vmem_to_hbm [thread:$0]  %s3748, 16, %s3750, %s3705
        $region120: #{tpu_custom_call.1} parent=83 // pred_fallthru
          _
        // Predicated region
        $region121: #{tpu_custom_call.1} parent=83 // pred_check
          %p3753 = pneg %p493
        $region122: #{tpu_custom_call.1} parent=83 // pred_check_branch
          %3755 = sbr.rel (%p3753) target = $region124
        $region123: #{tpu_custom_call.1} parent=83 // pred_region
          %3757 = vsyncadd %s3709, 0
          %s3758 = scalar_lea.hbm %s19, %s46
          %s3760 = sshll.u32 %s3711, 4
          %s3761 = int_to_ptr.vmem [resolvable:$true] %s3760
          %s3762 = sshll.u32 %s3758, 4
          %s3763 = int_to_ptr.hbm [resolvable:$true] %s3762
          %3765 = dma.vmem_to_hbm [thread:$0]  %s3761, 16, %s3763, %s3709
        $region124: #{tpu_custom_call.1} parent=83 // pred_fallthru
          _
      $region84: #{tpu_custom_call.1} parent=5 // pred_fallthru
        _
      %p3766 = scmp.le.s32.totalorder 2, %s41
      // Predicated region
      $region125: #{tpu_custom_call.1} parent=5 // pred_check
        %p3767 = pneg %p3766
      $region126: #{tpu_custom_call.1} parent=5 // pred_check_branch
        %3769 = sbr.rel (%p3767) target = $region128
      $region127: #{tpu_custom_call.1} parent=5 // pred_region
        %s3770 = ssub.s32 %s41, 2
        // Predicated region
        $region129: #{tpu_custom_call.1} parent=127 // pred_check
          %p3771 = pneg %p421
        $region130: #{tpu_custom_call.1} parent=127 // pred_check_branch
          %3773 = sbr.rel (%p3771) target = $region132
        $region131: #{tpu_custom_call.1} parent=127 // pred_region
          %s3774 = sand.u32 %s406, 1
          %s3775 = scalar_lea.sflag [#allocation8], %s3774
          %s3776 = sand.u32 %s406, 1
          %s3777 = smul.addr %s3776, 8
          %s3778 = scalar_lea.vmem [#allocation17], %s3777
          %3780 = dma.done %s3775, 128
        $region132: #{tpu_custom_call.1} parent=127 // pred_fallthru
          _
        // Predicated region
        $region133: #{tpu_custom_call.1} parent=127 // pred_check
          %p3781 = pneg %p447
        $region134: #{tpu_custom_call.1} parent=127 // pred_check_branch
          %3783 = sbr.rel (%p3781) target = $region136
        $region135: #{tpu_custom_call.1} parent=127 // pred_region
          %s3784 = sand.u32 %s47, 1
          %s3785 = scalar_lea.sflag [#allocation19], %s3784
          %s3786 = sand.u32 %s432, 1
          %s3787 = smul.addr %s3786, 8
          %s3788 = scalar_lea.vmem [#allocation18], %s3787
          %3790 = dma.done %s3785, 128
        $region136: #{tpu_custom_call.1} parent=127 // pred_fallthru
          _
        // Predicated region
        $region137: #{tpu_custom_call.1} parent=127 // pred_check
          %p3791 = pneg %p473
        $region138: #{tpu_custom_call.1} parent=127 // pred_check_branch
          %3793 = sbr.rel (%p3791) target = $region140
        $region139: #{tpu_custom_call.1} parent=127 // pred_region
          %s3794 = sand.u32 %s47, 1
          %s3795 = scalar_lea.sflag [#allocation19], %s3794
          %s3796 = sand.u32 %s458, 1
          %s3797 = scalar_lea.vmem [#allocation20], %s3796
          %3799 = dma.done %s3795, 16
        $region140: #{tpu_custom_call.1} parent=127 // pred_fallthru
          _
        // Predicated region
        $region141: #{tpu_custom_call.1} parent=127 // pred_check
          %p3800 = pneg %p499
        $region142: #{tpu_custom_call.1} parent=127 // pred_check_branch
          %3802 = sbr.rel (%p3800) target = $region144
        $region143: #{tpu_custom_call.1} parent=127 // pred_region
          %s3803 = sand.u32 %s484, 1
          %s3804 = scalar_lea.sflag [#allocation22], %s3803
          %s3805 = sand.u32 %s484, 1
          %s3806 = scalar_lea.vmem [#allocation21], %s3805
          %3808 = dma.done %s3804, 16
        $region144: #{tpu_custom_call.1} parent=127 // pred_fallthru
          _
      $region128: #{tpu_custom_call.1} parent=5 // pred_fallthru
        _
    $region6: #{tpu_custom_call.1} parent=1 // loop_footer
      %s45 = sadd.s32 1, %s41
    $region7: #{tpu_custom_call.1} parent=1 // loop_footer_branch
      %40 = sbr.rel target = $region3
    $region8: #{tpu_custom_call.1} parent=1 // loop_exit
      _
    %3809 = vsyncpa [#allocation7], 1
    %s3810 = scalar_lea.sflag [#allocation7], 1
    %3811 = vsyncpa %s3810, 1
    %3812 = vsyncpa [#allocation10], 1
    %3813 = vsyncpa [#allocation13], 1
    %3814 = vsyncpa [#allocation16], 1
    %3815 = vsyncpa [#allocation8], 1
    %s3816 = scalar_lea.sflag [#allocation8], 1
    %3817 = vsyncpa %s3816, 1
    %3818 = vsyncpa [#allocation19], 1
    %s3819 = scalar_lea.sflag [#allocation19], 1
    %3820 = vsyncpa %s3819, 1
    %3821 = vsyncpa [#allocation22], 1
    %s3822 = scalar_lea.sflag [#allocation22], 1
    %3823 = vsyncpa %s3822, 1

</llo_original>
